<compile_context>
chip_gen: v5e
topology: v5e:2x2
jax: 0.10.0
libtpu: 0.0.40
codegen_flags: <defaults>
</compile_context>

<pallas_src>
import jax
import jax.numpy as jnp
from jax import lax
from jax.experimental import pallas as pl
from jax.experimental.pallas import tpu as pltpu

EPS = 1e-5
LANE = 128
ACC_BYTES = 32 * 4096          # strip f32 accumulator budget (~32 vregs)
EPI_TILE_TARGET = 2048         # target rows per elementwise epilogue grid step


# ---------------------------------------------------------------------------
# Small utilities
# ---------------------------------------------------------------------------
def _round_up(x, m):
    return ((x + m - 1) // m) * m


def _vmem_limit_bytes():
    # Generation-aware budget: ~96 MiB on 128-MiB parts (v5e/v6e), ~44 MiB on v7x (64 MiB).
    try:
        cap = int(getattr(pltpu.get_tpu_info(), "vmem_capacity_bytes", 0))
    except Exception:
        cap = 0
    if cap <= 0:
        return 48 * 1024 * 1024
    return max(32 * 1024 * 1024, min(cap * 3 // 4, cap - 20 * 1024 * 1024))


_VMEM_LIMIT = None


def _compiler_params(n_axes=1):
    global _VMEM_LIMIT
    if _VMEM_LIMIT is None:
        _VMEM_LIMIT = _vmem_limit_bytes()
    return pltpu.CompilerParams(dimension_semantics=("parallel",) * n_axes,
                                vmem_limit_bytes=_VMEM_LIMIT)


def _strip_plan(m1, cout_p):
    """Rows per strip so the f32 strip accumulator fits in ~32 vregs; minimal padding."""
    cap = max(8, min(256, (ACC_BYTES // (4 * cout_p)) // 8 * 8))
    n = -(-m1 // cap)                       # number of strips
    strip = _round_up(-(-m1 // n), 8)       # balanced strip size, multiple of 8
    return strip, n, strip * n              # (strip, n_strips, m_pad)


def _epi_tile(n_blocks, strip, target=EPI_TILE_TARGET):
    """Largest multiple of `strip` that divides n_blocks*strip rows and is <= target."""
    best = 1
    for k in range(1, n_blocks + 1):
        if n_blocks % k == 0 and strip * k <= target:
            best = k
    return strip * best


# ---------------------------------------------------------------------------
# Conv kernels (strip-accumulated, two-pass BN statistics)
# ---------------------------------------------------------------------------
def _make_conv1_kernel(s, w_row, strip, n_strips, cin_p, cout_p):
    """3x3 conv (stride s via phase decomposition) + per-image masked BN partial stats."""
    taps = [(di, dj) for di in range(3) for dj in range(3)]

    def kernel(xph_ref, w_ref, mask_ref, y_ref, st_ref):
        def run_strip(i, st):
            r0 = i * strip
            if not isinstance(i, int):
                r0 = pl.multiple_of(r0, 8)
            acc = jnp.zeros((strip, cout_p), jnp.float32)
            for t, (di, dj) in enumerate(taps):
                ph = (di % s) * s + (dj % s)
                off = (di // s) * w_row + (dj // s)
                tap = xph_ref[0, ph, pl.ds(off + r0, strip), :]
                acc = acc + jnp.dot(tap, w_ref[t * cin_p:(t + 1) * cin_p, :],
                                    preferred_element_type=jnp.float32)
            mk = mask_ref[pl.ds(r0, strip), :]
            am = acc * mk                                   # mask junk cols / pad rows
            y_ref[0, pl.ds(r0, strip), :] = am.astype(y_ref.dtype)
            return st + jnp.concatenate(
                [jnp.sum(am, axis=0, keepdims=True),
                 jnp.sum(am * am, axis=0, keepdims=True)], axis=0)

        z = jnp.zeros((2, cout_p), jnp.float32)
        if n_strips <= 8:                                   # static offsets, unrolled
            st = z
            for i in range(n_strips):
                st = run_strip(i, st)
        else:
            st = lax.fori_loop(0, n_strips, run_strip, z)
        st_ref[0] = st

    return kernel


def _make_conv2_kernel(w_row, strip, n_strips, m_pad, base, l_act, pp, has_proj):
    """conv2 (3x3 stride 1) with fused BN1+ReLU prologue; optional fused 1x1 projection."""
    taps = [(di, dj) for di in range(3) for dj in range(3)]
    tail = l_act - base - m_pad

    def compute(y1_ref, ss1_ref, w2_ref, mask_ref, xs_ref, wsc_ref,
                y2_ref, st2_ref, ysc_ref, stsc_ref, act_ref):
        # --- fused BN1 + ReLU prologue into a zero-halo'd VMEM scratch (no HBM trip) ---
        act = jnp.maximum(y1_ref[0].astype(jnp.float32) * ss1_ref[0:1, :]
                          + ss1_ref[1:2, :], 0.0) * mask_ref[...]
        act_ref[pl.ds(0, base), :] = jnp.zeros((base, pp), act_ref.dtype)
        act_ref[pl.ds(base, m_pad), :] = act.astype(act_ref.dtype)
        act_ref[pl.ds(base + m_pad, tail), :] = jnp.zeros((tail, pp), act_ref.dtype)

        def run_strip(i, st2, stsc):
            r0 = i * strip
            if not isinstance(i, int):
                r0 = pl.multiple_of(r0, 8)
            acc = jnp.zeros((strip, pp), jnp.float32)
            for t, (di, dj) in enumerate(taps):
                off = base + (di - 1) * w_row + (dj - 1)
                tap = act_ref[pl.ds(off + r0, strip), :]
                acc = acc + jnp.dot(tap, w2_ref[t * pp:(t + 1) * pp, :],
                                    preferred_element_type=jnp.float32)
            mk = mask_ref[pl.ds(r0, strip), :]
            am = acc * mk
            y2_ref[0, pl.ds(r0, strip), :] = am.astype(y2_ref.dtype)
            st2 = st2 + jnp.concatenate(
                [jnp.sum(am, axis=0, keepdims=True),
                 jnp.sum(am * am, axis=0, keepdims=True)], axis=0)
            if has_proj:
                accs = jnp.dot(xs_ref[0, pl.ds(r0, strip), :], wsc_ref[...],
                               preferred_element_type=jnp.float32)
                ams = accs * mk
                ysc_ref[0, pl.ds(r0, strip), :] = ams.astype(ysc_ref.dtype)
                stsc = stsc + jnp.concatenate(
                    [jnp.sum(ams, axis=0, keepdims=True),
                     jnp.sum(ams * ams, axis=0, keepdims=True)], axis=0)
            return st2, stsc

        z = jnp.zeros((2, pp), jnp.float32)
        if n_strips <= 8:
            st2, stsc = z, z
            for i in range(n_strips):
                st2, stsc = run_strip(i, st2, stsc)
        else:
            st2, stsc = lax.fori_loop(0, n_strips,
                                      lambda i, c: run_strip(i, *c), (z, z))
        st2_ref[0] = st2
        if has_proj:
            stsc_ref[0] = stsc

    if has_proj:
        def kernel(y1_ref, ss1_ref, w2_ref, mask_ref, xs_ref, wsc_ref,
                   y2_ref, st2_ref, ysc_ref, stsc_ref, act_ref):
            compute(y1_ref, ss1_ref, w2_ref, mask_ref, xs_ref, wsc_ref,
                    y2_ref, st2_ref, ysc_ref, stsc_ref, act_ref)
    else:
        def kernel(y1_ref, ss1_ref, w2_ref, mask_ref, y2_ref, st2_ref, act_ref):
            compute(y1_ref, ss1_ref, w2_ref, mask_ref, None, None,
                    y2_ref, st2_ref, None, None, act_ref)
    return kernel


# ---------------------------------------------------------------------------
# Elementwise epilogue kernels (bf16 output)
# ---------------------------------------------------------------------------
def _bn_add_relu_proj_kernel(y2_ref, ysc_ref, ss2_ref, sssc_ref, o_ref):
    a = y2_ref[...].astype(jnp.float32) * ss2_ref[0:1, :] + ss2_ref[1:2, :]
    b = ysc_ref[...].astype(jnp.float32) * sssc_ref[0:1, :] + sssc_ref[1:2, :]
    o_ref[...] = jnp.maximum(a + b, 0.0).astype(o_ref.dtype)


def _bn_add_relu_id_kernel(y2_ref, xid_ref, ss2_ref, o_ref):
    a = y2_ref[...].astype(jnp.float32) * ss2_ref[0:1, :] + ss2_ref[1:2, :]
    o_ref[...] = jnp.maximum(a + xid_ref[...].astype(jnp.float32), 0.0).astype(o_ref.dtype)


# ---------------------------------------------------------------------------
# pallas_call wrappers
# ---------------------------------------------------------------------------
def _conv1_call(xph, wflat, mask, *, s, w_row, strip, n_strips, m_pad, cin_p, cout_p):
    n, nph, l, _ = xph.shape
    kernel = _make_conv1_kernel(s, w_row, strip, n_strips, cin_p, cout_p)
    return pl.pallas_call(
        kernel,
        out_shape=(jax.ShapeDtypeStruct((n, m_pad, cout_p), jnp.bfloat16),
                   jax.ShapeDtypeStruct((n, 2, cout_p), jnp.float32)),
        grid_spec=pltpu.PrefetchScalarGridSpec(
            num_scalar_prefetch=0,
            grid=(n,),
            in_specs=[
                pl.BlockSpec((1, nph, l, cin_p), lambda i: (i, 0, 0, 0)),
                # constant block index -> weights / mask stay resident (no per-step DMA)
                pl.BlockSpec((9 * cin_p, cout_p), lambda i: (0, 0)),
                pl.BlockSpec((m_pad, 1), lambda i: (0, 0)),
            ],
            out_specs=[
                pl.BlockSpec((1, m_pad, cout_p), lambda i: (i, 0, 0)),
                pl.BlockSpec((1, 2, cout_p), lambda i: (i, 0, 0)),
            ],
        ),
        compiler_params=_compiler_params(),
    )(xph, wflat, mask)


def _stage2_call(y1, ss1, w2f, mask, xs, wscf, *, w_row, strip, n_strips, m_pad,
                 base, l_act, cp, pp, has_proj):
    n = y1.shape[0]
    kernel = _make_conv2_kernel(w_row, strip, n_strips, m_pad, base, l_act, pp, has_proj)

    in_specs = [
        pl.BlockSpec((1, m_pad, pp), lambda i: (i, 0, 0)),      # y1 (pre-BN, bf16)
        pl.BlockSpec((2, pp), lambda i: (0, 0)),                # BN1 scale/shift, resident
        pl.BlockSpec((9 * pp, pp), lambda i: (0, 0)),           # conv2 weights, resident
        pl.BlockSpec((m_pad, 1), lambda i: (0, 0)),             # validity mask, resident
    ]
    inputs = [y1, ss1, w2f, mask]
    out_shape = [jax.ShapeDtypeStruct((n, m_pad, pp), jnp.bfloat16),
                 jax.ShapeDtypeStruct((n, 2, pp), jnp.float32)]
    out_specs = [pl.BlockSpec((1, m_pad, pp), lambda i: (i, 0, 0)),
                 pl.BlockSpec((1, 2, pp), lambda i: (i, 0, 0))]
    if has_proj:
        in_specs += [pl.BlockSpec((1, m_pad, cp), lambda i: (i, 0, 0)),   # shortcut input
                     pl.BlockSpec((cp, pp), lambda i: (0, 0))]            # 1x1 weights
        inputs += [xs, wscf]
        out_shape += [jax.ShapeDtypeStruct((n, m_pad, pp), jnp.bfloat16),
                      jax.ShapeDtypeStruct((n, 2, pp), jnp.float32)]
        out_specs += [pl.BlockSpec((1, m_pad, pp), lambda i: (i, 0, 0)),
                      pl.BlockSpec((1, 2, pp), lambda i: (i, 0, 0))]

    return pl.pallas_call(
        kernel,
        out_shape=tuple(out_shape),
        grid_spec=pltpu.PrefetchScalarGridSpec(
            num_scalar_prefetch=0,
            grid=(n,),
            in_specs=in_specs,
            out_specs=out_specs,
            scratch_shapes=[pltpu.VMEM((l_act, pp), jnp.bfloat16)],
        ),
        compiler_params=_compiler_params(),
    )(*inputs)


def _epilogue_call(kernel, tiled_inputs, const_inputs, rows, pp, tile):
    in_specs = ([pl.BlockSpec((tile, a.shape[1]), lambda i: (i, 0)) for a in tiled_inputs]
                + [pl.BlockSpec(c.shape, lambda i, nd=c.ndim: (0,) * nd)
                   for c in const_inputs])
    return pl.pallas_call(
        kernel,
        out_shape=jax.ShapeDtypeStruct((rows, pp), jnp.bfloat16),
        grid_spec=pltpu.PrefetchScalarGridSpec(
            num_scalar_prefetch=0,
            grid=(rows // tile,),
            in_specs=in_specs,
            out_specs=pl.BlockSpec((tile, pp), lambda i: (i, 0)),
        ),
        compiler_params=_compiler_params(),
    )(*tiled_inputs, *const_inputs)


# ---------------------------------------------------------------------------
# Host-side glue (layout only: padding / phase decomposition / reshapes)
# ---------------------------------------------------------------------------
def _pad_conv3x3_weight(w_hwio, cin_p, cout_p):
    kh, kw, ci, co = w_hwio.shape
    wp = jnp.zeros((kh, kw, cin_p, cout_p), jnp.float32).at[:, :, :ci, :co].set(w_hwio)
    return wp.reshape(kh * kw * cin_p, cout_p).astype(jnp.bfloat16)


def _pad_vec(v, width):
    v = v.reshape(-1).astype(jnp.float32)
    return jnp.zeros((width,), jnp.float32).at[:v.shape[0]].set(v)


def _bn_scale_shift(stats, gamma_p, beta_p, count):
    # stats: (N, 2, C) per-image masked partials.  Biased variance, f32 throughout.
    ssum = jnp.sum(stats[:, 0, :], axis=0)
    ssq = jnp.sum(stats[:, 1, :], axis=0)
    mean = ssum / count
    var = jnp.maximum(ssq / count - mean * mean, 0.0)
    scale = gamma_p * lax.rsqrt(var + EPS)
    shift = beta_p - mean * scale
    return jnp.stack([scale, shift], axis=0)          # (2, C) f32


# ---------------------------------------------------------------------------
# BasicBlock forward
# ---------------------------------------------------------------------------
def basic_block_forward(x_nchw, params, stride):
    s = int(stride)
    N, Cin, H, W = x_nchw.shape
    planes = params["w1"].shape[-1]
    Cp = _round_up(Cin, LANE)
    Pp = _round_up(planes, LANE)
    Ho = (H - 1) // s + 1
    Wo = (W - 1) // s + 1

    x = jnp.transpose(x_nchw, (0, 2, 3, 1)).astype(jnp.float32)          # NHWC
    x_cp = jnp.pad(x, ((0, 0), (0, 0), (0, 0), (0, Cp - Cin)))           # lane pad

    # Shared flattened layout for both conv stages: rows = (Ho, Wq), junk cols masked.
    Hp, Wp = H + 2, W + 2
    Hq, Wq = -(-Hp // s), -(-Wp // s)
    M1 = Ho * Wq
    strip, n_strips, M_pad = _strip_plan(M1, Pp)

    ridx = jnp.arange(M_pad)
    mask = (((ridx % Wq) < Wo) & (ridx < M1)).astype(jnp.float32).reshape(M_pad, 1)

    # ---- stage 1: conv1 (stride s) --------------------------------------------------
    off1_max = (2 // s) * Wq + (2 // s)
    L1 = _round_up(max(M_pad + off1_max, Hq * Wq), 8)
    xp = jnp.pad(x_cp, ((0, 0), (1, 1), (1, 1), (0, 0)))                 # halo pad
    if s == 1:
        xflat = xp.reshape(N, 1, Hp * Wp, Cp)                            # no phase split
    else:
        xp = jnp.pad(xp, ((0, 0), (0, Hq * s - Hp), (0, Wq * s - Wp), (0, 0)))
        xflat = xp.reshape(N, Hq, s, Wq, s, Cp).transpose(0, 2, 4, 1, 3, 5)
        xflat = xflat.reshape(N, s * s, Hq * Wq, Cp)
    xph = jnp.pad(xflat, ((0, 0), (0, 0), (0, L1 - xflat.shape[2]), (0, 0)))
    xph = xph.astype(jnp.bfloat16)

    w1f = _pad_conv3x3_weight(params["w1"], Cp, Pp)
    y1, st1 = _conv1_call(xph, w1f, mask, s=s, w_row=Wq, strip=strip,
                          n_strips=n_strips, m_pad=M_pad, cin_p=Cp, cout_p=Pp)

    count = float(N * Ho * Wo)
    ss1 = _bn_scale_shift(st1, _pad_vec(params["g1"], Pp), _pad_vec(params["b1"], Pp),
                          count)

    # ---- stage 2: conv2 (+ fused BN1/ReLU prologue) and shortcut ---------------------
    base = _round_up(Wq + 1, 8)
    L_act = _round_up(base + M_pad + Wq + 1, 8)
    w2f = _pad_conv3x3_weight(params["w2"], Pp, Pp)
    g2, b2 = _pad_vec(params["g2"], Pp), _pad_vec(params["b2"], Pp)
    rows = N * M_pad
    tile = _epi_tile(N * n_strips, strip)

    has_proj = (s != 1) or (Cin != planes)
    if has_proj:
        xs = x_cp[:, ::s, ::s, :][:, :Ho, :Wo, :]                        # 1x1-conv input
        xs = jnp.pad(xs, ((0, 0), (0, 0), (0, Wq - Wo), (0, 0)))
        xs = xs.reshape(N, M1, Cp)
        xs = jnp.pad(xs, ((0, 0), (0, M_pad - M1), (0, 0))).astype(jnp.bfloat16)
        wscf = jnp.zeros((Cp, Pp), jnp.float32).at[:Cin, :planes].set(
            params["wsc"]).astype(jnp.bfloat16)

        y2, st2, ysc, stsc = _stage2_call(
            y1, ss1, w2f, mask, xs, wscf, w_row=Wq, strip=strip, n_strips=n_strips,
            m_pad=M_pad, base=base, l_act=L_act, cp=Cp, pp=Pp, has_proj=True)
        ss2 = _bn_scale_shift(st2, g2, b2, count)
        sssc = _bn_scale_shift(stsc, _pad_vec(params["gsc"], Pp),
                               _pad_vec(params["bsc"], Pp), count)
        out_flat = _epilogue_call(
            _bn_add_relu_proj_kernel,
            [y2.reshape(rows, Pp), ysc.reshape(rows, Pp)],
            [ss2, sssc], rows, Pp, tile)
    else:
        y2, st2 = _stage2_call(
            y1, ss1, w2f, mask, None, None, w_row=Wq, strip=strip, n_strips=n_strips,
            m_pad=M_pad, base=base, l_act=L_act, cp=Cp, pp=Pp, has_proj=False)
        ss2 = _bn_scale_shift(st2, g2, b2, count)
        xid = jnp.pad(x_cp, ((0, 0), (0, 0), (0, Wq - W), (0, 0))).reshape(N, M1, Cp)
        xid = jnp.pad(xid, ((0, 0), (0, M_pad - M1), (0, 0)))
        out_flat = _epilogue_call(
            _bn_add_relu_id_kernel,
            [y2.reshape(rows, Pp), xid.reshape(rows, Cp)],
            [ss2], rows, Pp, tile)

    out = out_flat.reshape(N, M_pad, Pp)[:, :M1]
    out = out.reshape(N, Ho, Wq, Pp)[:, :, :Wo, :planes]
    return jnp.transpose(out, (0, 3, 1, 2)).astype(jnp.float32)          # NCHW, f32


# ---------------------------------------------------------------------------
# Deterministic parameter init (shapes from BasicBlock.__init__)
# ---------------------------------------------------------------------------
def init_params(key, in_planes, planes):
    ks = jax.random.split(key, 9)

    def conv_init(k, shape, fan_in):
        return jax.random.normal(k, shape, jnp.float32) * (1.0 / jnp.sqrt(fan_in))

    return {
        "w1": conv_init(ks[0], (3, 3, in_planes, planes), 9 * in_planes),   # HWIO
        "g1": 1.0 + 0.1 * jax.random.normal(ks[1], (1, planes), jnp.float32),
        "b1": 0.1 * jax.random.normal(ks[2], (1, planes), jnp.float32),
        "w2": conv_init(ks[3], (3, 3, planes, planes), 9 * planes),
        "g2": 1.0 + 0.1 * jax.random.normal(ks[4], (1, planes), jnp.float32),
        "b2": 0.1 * jax.random.normal(ks[5], (1, planes), jnp.float32),
        "wsc": conv_init(ks[6], (in_planes, planes), in_planes),            # 1x1 conv
        "gsc": 1.0 + 0.1 * jax.random.normal(ks[7], (1, planes), jnp.float32),
        "bsc": 0.1 * jax.random.normal(ks[8], (1, planes), jnp.float32),
    }


# ---------------------------------------------------------------------------
# Pure-JAX (f32) reference for the sanity check
# ---------------------------------------------------------------------------
def _reference(x_nchw, params, stride):
    def bn(y, g, b):
        mean = jnp.mean(y, axis=(0, 2, 3), keepdims=True)
        var = jnp.mean((y - mean) ** 2, axis=(0, 2, 3), keepdims=True)
        return (y - mean) / jnp.sqrt(var + EPS) * g.reshape(1, -1, 1, 1) + b.reshape(1, -1, 1, 1)

    def conv(x, w_hwio, s, pad):
        w_oihw = jnp.transpose(w_hwio, (3, 2, 0, 1))
        return lax.conv_general_dilated(
            x, w_oihw, (s, s), ((pad, pad), (pad, pad)),
            dimension_numbers=("NCHW", "OIHW", "NCHW"))

    planes = params["w1"].shape[-1]
    out = jax.nn.relu(bn(conv(x_nchw, params["w1"], stride, 1), params["g1"], params["b1"]))
    out = bn(conv(out, params["w2"], 1, 1), params["g2"], params["b2"])
    if stride != 1 or x_nchw.shape[1] != planes:
        wsc = jnp.transpose(params["wsc"]).reshape(planes, x_nchw.shape[1], 1, 1)
        sc = lax.conv_general_dilated(
            x_nchw, wsc, (stride, stride), ((0, 0), (0, 0)),
            dimension_numbers=("NCHW", "OIHW", "NCHW"))
        sc = bn(sc, params["gsc"], params["bsc"])
    else:
        sc = x_nchw
    return jax.nn.relu(out + sc)


if __name__ == "__main__":
    key = jax.random.PRNGKey(0)
    k1, k2, k3, k4 = jax.random.split(key, 4)

    fwd = jax.jit(basic_block_forward, static_argnums=(2,))

    # Test 1: projection-shortcut path (stride 2, channel change)
    N, Cin, H, W, planes, stride = 2, 4, 16, 16, 8, 2
    x = jax.random.normal(k1, (N, Cin, H, W), jnp.float32)
    params = init_params(k2, Cin, planes)
    out = jax.block_until_ready(fwd(x, params, stride))
    assert out.shape == (N, planes, H // stride, W // stride)
    ref = _reference(x, params, stride)
    if not jnp.allclose(out, ref, atol=7e-2, rtol=7e-2):
        raise AssertionError("projection path mismatch (max abs err %.4f)"
                             % float(jnp.max(jnp.abs(out - ref))))

    # Test 2: identity-shortcut path (stride 1, same channel count)
    N2, C2, H2, W2 = 2, 8, 16, 16
    x2 = jax.random.normal(k3, (N2, C2, H2, W2), jnp.float32)
    params2 = init_params(k4, C2, C2)
    out2 = jax.block_until_ready(fwd(x2, params2, 1))
    assert out2.shape == (N2, C2, H2, W2)
    ref2 = _reference(x2, params2, 1)
    if not jnp.allclose(out2, ref2, atol=7e-2, rtol=7e-2):
        raise AssertionError("identity path mismatch (max abs err %.4f)"
                             % float(jnp.max(jnp.abs(out2 - ref2))))

    print("KERNEL_OK")
</pallas_src>

<mosaic_0001>
module attributes {stable_mosaic.version = 11 : i64} {
  func.func @kernel(%arg0: i32, %arg1: memref<1x4x88x128xbf16, #tpu.memory_space<vmem>>, %arg2: memref<1152x128xbf16, #tpu.memory_space<vmem>>, %arg3: memref<72x1xf32, #tpu.memory_space<vmem>>, %arg4: memref<1x72x128xbf16, #tpu.memory_space<vmem>>, %arg5: memref<1x2x128xf32, #tpu.memory_space<vmem>>) attributes {dimension_semantics = [#tpu.dimension_semantics<parallel>], iteration_bounds = array<i64: 2>, scalar_prefetch = 0 : i64, scratch_operands = 0 : i64, tpu.core_type = #tpu.core_type<tc>, window_params = [{transform_indices = @transform_0, window_bounds = array<i64: 1, 4, 88, 128>}, {pipeline_mode = #tpu.pipeline_mode<synchronous>, transform_indices = @transform_1, window_bounds = array<i64: 1152, 128>}, {pipeline_mode = #tpu.pipeline_mode<synchronous>, transform_indices = @transform_2, window_bounds = array<i64: 72, 1>}, {transform_indices = @transform_3, window_bounds = array<i64: 1, 72, 128>}, {transform_indices = @transform_4, window_bounds = array<i64: 1, 2, 128>}]} {
    %cst = arith.constant 0.000000e+00 : f32
    %0 = vector.broadcast %cst : f32 to vector<2x128xf32>
    %cst_0 = arith.constant 0.000000e+00 : f32
    %1 = vector.broadcast %cst_0 : f32 to vector<72x128xf32>
    %c0 = arith.constant 0 : index
    %c0_1 = arith.constant 0 : index
    %c0_2 = arith.constant 0 : index
    %c0_3 = arith.constant 0 : index
    %2 = vector.load %arg1[%c0, %c0_1, %c0_2, %c0_3] : memref<1x4x88x128xbf16, #tpu.memory_space<vmem>>, vector<1x1x72x128xbf16>
    %3 = vector.shape_cast %2 : vector<1x1x72x128xbf16> to vector<72x128xbf16>
    %c0_4 = arith.constant 0 : index
    %c0_5 = arith.constant 0 : index
    %4 = vector.load %arg2[%c0_4, %c0_5] : memref<1152x128xbf16, #tpu.memory_space<vmem>>, vector<128x128xbf16>
    %cst_6 = arith.constant dense<0.000000e+00> : vector<72x128xf32>
    %5 = tpu.matmul %3, %4, %cst_6 {dimension_numbers = #tpu.dot_dimension_numbers<[1], [0], [0], [1], [0, 0, 1, 1], [], []>} : vector<72x128xbf16>, vector<128x128xbf16>, vector<72x128xf32> -> vector<72x128xf32>
    %6 = arith.addf %1, %5 : vector<72x128xf32>
    %c0_7 = arith.constant 0 : index
    %c1 = arith.constant 1 : index
    %c0_8 = arith.constant 0 : index
    %c0_9 = arith.constant 0 : index
    %7 = vector.load %arg1[%c0_7, %c1, %c0_8, %c0_9] : memref<1x4x88x128xbf16, #tpu.memory_space<vmem>>, vector<1x1x72x128xbf16>
    %8 = vector.shape_cast %7 : vector<1x1x72x128xbf16> to vector<72x128xbf16>
    %c128 = arith.constant 128 : index
    %c0_10 = arith.constant 0 : index
    %9 = vector.load %arg2[%c128, %c0_10] : memref<1152x128xbf16, #tpu.memory_space<vmem>>, vector<128x128xbf16>
    %cst_11 = arith.constant dense<0.000000e+00> : vector<72x128xf32>
    %10 = tpu.matmul %8, %9, %cst_11 {dimension_numbers = #tpu.dot_dimension_numbers<[1], [0], [0], [1], [0, 0, 1, 1], [], []>} : vector<72x128xbf16>, vector<128x128xbf16>, vector<72x128xf32> -> vector<72x128xf32>
    %11 = arith.addf %6, %10 : vector<72x128xf32>
    %c0_12 = arith.constant 0 : index
    %c0_13 = arith.constant 0 : index
    %c1_14 = arith.constant 1 : index
    %c0_15 = arith.constant 0 : index
    %12 = vector.load %arg1[%c0_12, %c0_13, %c1_14, %c0_15] : memref<1x4x88x128xbf16, #tpu.memory_space<vmem>>, vector<1x1x72x128xbf16>
    %13 = vector.shape_cast %12 : vector<1x1x72x128xbf16> to vector<72x128xbf16>
    %c256 = arith.constant 256 : index
    %c0_16 = arith.constant 0 : index
    %14 = vector.load %arg2[%c256, %c0_16] : memref<1152x128xbf16, #tpu.memory_space<vmem>>, vector<128x128xbf16>
    %cst_17 = arith.constant dense<0.000000e+00> : vector<72x128xf32>
    %15 = tpu.matmul %13, %14, %cst_17 {dimension_numbers = #tpu.dot_dimension_numbers<[1], [0], [0], [1], [0, 0, 1, 1], [], []>} : vector<72x128xbf16>, vector<128x128xbf16>, vector<72x128xf32> -> vector<72x128xf32>
    %16 = arith.addf %11, %15 : vector<72x128xf32>
    %c0_18 = arith.constant 0 : index
    %c2 = arith.constant 2 : index
    %c0_19 = arith.constant 0 : index
    %c0_20 = arith.constant 0 : index
    %17 = vector.load %arg1[%c0_18, %c2, %c0_19, %c0_20] : memref<1x4x88x128xbf16, #tpu.memory_space<vmem>>, vector<1x1x72x128xbf16>
    %18 = vector.shape_cast %17 : vector<1x1x72x128xbf16> to vector<72x128xbf16>
    %c384 = arith.constant 384 : index
    %c0_21 = arith.constant 0 : index
    %19 = vector.load %arg2[%c384, %c0_21] : memref<1152x128xbf16, #tpu.memory_space<vmem>>, vector<128x128xbf16>
    %cst_22 = arith.constant dense<0.000000e+00> : vector<72x128xf32>
    %20 = tpu.matmul %18, %19, %cst_22 {dimension_numbers = #tpu.dot_dimension_numbers<[1], [0], [0], [1], [0, 0, 1, 1], [], []>} : vector<72x128xbf16>, vector<128x128xbf16>, vector<72x128xf32> -> vector<72x128xf32>
    %21 = arith.addf %16, %20 : vector<72x128xf32>
    %c0_23 = arith.constant 0 : index
    %c3 = arith.constant 3 : index
    %c0_24 = arith.constant 0 : index
    %c0_25 = arith.constant 0 : index
    %22 = vector.load %arg1[%c0_23, %c3, %c0_24, %c0_25] : memref<1x4x88x128xbf16, #tpu.memory_space<vmem>>, vector<1x1x72x128xbf16>
    %23 = vector.shape_cast %22 : vector<1x1x72x128xbf16> to vector<72x128xbf16>
    %c512 = arith.constant 512 : index
    %c0_26 = arith.constant 0 : index
    %24 = vector.load %arg2[%c512, %c0_26] : memref<1152x128xbf16, #tpu.memory_space<vmem>>, vector<128x128xbf16>
    %cst_27 = arith.constant dense<0.000000e+00> : vector<72x128xf32>
    %25 = tpu.matmul %23, %24, %cst_27 {dimension_numbers = #tpu.dot_dimension_numbers<[1], [0], [0], [1], [0, 0, 1, 1], [], []>} : vector<72x128xbf16>, vector<128x128xbf16>, vector<72x128xf32> -> vector<72x128xf32>
    %26 = arith.addf %21, %25 : vector<72x128xf32>
    %c0_28 = arith.constant 0 : index
    %c2_29 = arith.constant 2 : index
    %c1_30 = arith.constant 1 : index
    %c0_31 = arith.constant 0 : index
    %27 = vector.load %arg1[%c0_28, %c2_29, %c1_30, %c0_31] : memref<1x4x88x128xbf16, #tpu.memory_space<vmem>>, vector<1x1x72x128xbf16>
    %28 = vector.shape_cast %27 : vector<1x1x72x128xbf16> to vector<72x128xbf16>
    %c640 = arith.constant 640 : index
    %c0_32 = arith.constant 0 : index
    %29 = vector.load %arg2[%c640, %c0_32] : memref<1152x128xbf16, #tpu.memory_space<vmem>>, vector<128x128xbf16>
    %cst_33 = arith.constant dense<0.000000e+00> : vector<72x128xf32>
    %30 = tpu.matmul %28, %29, %cst_33 {dimension_numbers = #tpu.dot_dimension_numbers<[1], [0], [0], [1], [0, 0, 1, 1], [], []>} : vector<72x128xbf16>, vector<128x128xbf16>, vector<72x128xf32> -> vector<72x128xf32>
    %31 = arith.addf %26, %30 : vector<72x128xf32>
    %c0_34 = arith.constant 0 : index
    %c0_35 = arith.constant 0 : index
    %c9 = arith.constant 9 : index
    %c0_36 = arith.constant 0 : index
    %32 = vector.load %arg1[%c0_34, %c0_35, %c9, %c0_36] : memref<1x4x88x128xbf16, #tpu.memory_space<vmem>>, vector<1x1x72x128xbf16>
    %33 = vector.shape_cast %32 : vector<1x1x72x128xbf16> to vector<72x128xbf16>
    %c768 = arith.constant 768 : index
    %c0_37 = arith.constant 0 : index
    %34 = vector.load %arg2[%c768, %c0_37] : memref<1152x128xbf16, #tpu.memory_space<vmem>>, vector<128x128xbf16>
    %cst_38 = arith.constant dense<0.000000e+00> : vector<72x128xf32>
    %35 = tpu.matmul %33, %34, %cst_38 {dimension_numbers = #tpu.dot_dimension_numbers<[1], [0], [0], [1], [0, 0, 1, 1], [], []>} : vector<72x128xbf16>, vector<128x128xbf16>, vector<72x128xf32> -> vector<72x128xf32>
    %36 = arith.addf %31, %35 : vector<72x128xf32>
    %c0_39 = arith.constant 0 : index
    %c1_40 = arith.constant 1 : index
    %c9_41 = arith.constant 9 : index
    %c0_42 = arith.constant 0 : index
    %37 = vector.load %arg1[%c0_39, %c1_40, %c9_41, %c0_42] : memref<1x4x88x128xbf16, #tpu.memory_space<vmem>>, vector<1x1x72x128xbf16>
    %38 = vector.shape_cast %37 : vector<1x1x72x128xbf16> to vector<72x128xbf16>
    %c896 = arith.constant 896 : index
    %c0_43 = arith.constant 0 : index
    %39 = vector.load %arg2[%c896, %c0_43] : memref<1152x128xbf16, #tpu.memory_space<vmem>>, vector<128x128xbf16>
    %cst_44 = arith.constant dense<0.000000e+00> : vector<72x128xf32>
    %40 = tpu.matmul %38, %39, %cst_44 {dimension_numbers = #tpu.dot_dimension_numbers<[1], [0], [0], [1], [0, 0, 1, 1], [], []>} : vector<72x128xbf16>, vector<128x128xbf16>, vector<72x128xf32> -> vector<72x128xf32>
    %41 = arith.addf %36, %40 : vector<72x128xf32>
    %c0_45 = arith.constant 0 : index
    %c0_46 = arith.constant 0 : index
    %c10 = arith.constant 10 : index
    %c0_47 = arith.constant 0 : index
    %42 = vector.load %arg1[%c0_45, %c0_46, %c10, %c0_47] : memref<1x4x88x128xbf16, #tpu.memory_space<vmem>>, vector<1x1x72x128xbf16>
    %43 = vector.shape_cast %42 : vector<1x1x72x128xbf16> to vector<72x128xbf16>
    %c1024 = arith.constant 1024 : index
    %c0_48 = arith.constant 0 : index
    %44 = vector.load %arg2[%c1024, %c0_48] : memref<1152x128xbf16, #tpu.memory_space<vmem>>, vector<128x128xbf16>
    %cst_49 = arith.constant dense<0.000000e+00> : vector<72x128xf32>
    %45 = tpu.matmul %43, %44, %cst_49 {dimension_numbers = #tpu.dot_dimension_numbers<[1], [0], [0], [1], [0, 0, 1, 1], [], []>} : vector<72x128xbf16>, vector<128x128xbf16>, vector<72x128xf32> -> vector<72x128xf32>
    %46 = arith.addf %41, %45 : vector<72x128xf32>
    %c0_50 = arith.constant 0 : index
    %c0_51 = arith.constant 0 : index
    %47 = vector.load %arg3[%c0_50, %c0_51] : memref<72x1xf32, #tpu.memory_space<vmem>>, vector<72x1xf32>
    %48 = vector.broadcast %47 : vector<72x1xf32> to vector<72x128xf32>
    %49 = arith.mulf %46, %48 : vector<72x128xf32>
    %50 = arith.truncf %49 : vector<72x128xf32> to vector<72x128xbf16>
    %c0_52 = arith.constant 0 : index
    %c0_53 = arith.constant 0 : index
    %c0_54 = arith.constant 0 : index
    %51 = vector.load %arg4[%c0_52, %c0_53, %c0_54] : memref<1x72x128xbf16, #tpu.memory_space<vmem>>, vector<1x72x128xbf16>
    %52 = vector.shape_cast %51 : vector<1x72x128xbf16> to vector<72x128xbf16>
    %53 = vector.shape_cast %50 : vector<72x128xbf16> to vector<1x72x128xbf16>
    tpu.vector_store %arg4[%c0_52, %c0_53, %c0_54], %53 {strides = array<i32>} : memref<1x72x128xbf16, #tpu.memory_space<vmem>>, vector<1x72x128xbf16>,
    %cst_55 = arith.constant dense<0.000000e+00> : vector<128xf32>
    %54 = vector.multi_reduction <add>, %49, %cst_55 [0] : vector<72x128xf32> to vector<128xf32>
    %55 = vector.shape_cast %54 : vector<128xf32> to vector<1x128xf32>
    %56 = arith.mulf %49, %49 : vector<72x128xf32>
    %cst_56 = arith.constant dense<0.000000e+00> : vector<128xf32>
    %57 = vector.multi_reduction <add>, %56, %cst_56 [0] : vector<72x128xf32> to vector<128xf32>
    %58 = vector.shape_cast %57 : vector<128xf32> to vector<1x128xf32>
    %59 = tpu.concatenate %55, %58 in 0 : vector<1x128xf32>, vector<1x128xf32> -> vector<2x128xf32>
    %60 = arith.addf %0, %59 : vector<2x128xf32>
    %c0_57 = arith.constant 0 : index
    %c0_58 = arith.constant 0 : index
    %c0_59 = arith.constant 0 : index
    %61 = vector.load %arg5[%c0_57, %c0_58, %c0_59] : memref<1x2x128xf32, #tpu.memory_space<vmem>>, vector<1x2x128xf32>
    %62 = vector.shape_cast %61 : vector<1x2x128xf32> to vector<2x128xf32>
    %63 = vector.shape_cast %60 : vector<2x128xf32> to vector<1x2x128xf32>
    tpu.vector_store %arg5[%c0_57, %c0_58, %c0_59], %63 {strides = array<i32>} : memref<1x2x128xf32, #tpu.memory_space<vmem>>, vector<1x2x128xf32>,
    return
  }
  func.func @transform_0(%arg0: i32) -> (i32, i32, i32, i32) {
    %c0_i32 = arith.constant 0 : i32
    %c0_i32_0 = arith.constant 0 : i32
    %c0_i32_1 = arith.constant 0 : i32
    %c0_i32_2 = arith.constant 0 : i32
    return %arg0, %c0_i32, %c0_i32_0, %c0_i32_1 : i32, i32, i32, i32
  }
  func.func @transform_1(%arg0: i32) -> (i32, i32) {
    %c0_i32 = arith.constant 0 : i32
    %c0_i32_0 = arith.constant 0 : i32
    %c0_i32_1 = arith.constant 0 : i32
    return %c0_i32, %c0_i32_0 : i32, i32
  }
  func.func @transform_2(%arg0: i32) -> (i32, i32) {
    %c0_i32 = arith.constant 0 : i32
    %c0_i32_0 = arith.constant 0 : i32
    %c0_i32_1 = arith.constant 0 : i32
    return %c0_i32, %c0_i32_0 : i32, i32
  }
  func.func @transform_3(%arg0: i32) -> (i32, i32, i32) {
    %c0_i32 = arith.constant 0 : i32
    %c0_i32_0 = arith.constant 0 : i32
    %c0_i32_1 = arith.constant 0 : i32
    return %arg0, %c0_i32, %c0_i32_0 : i32, i32, i32
  }
  func.func @transform_4(%arg0: i32) -> (i32, i32, i32) {
    %c0_i32 = arith.constant 0 : i32
    %c0_i32_0 = arith.constant 0 : i32
    %c0_i32_1 = arith.constant 0 : i32
    return %arg0, %c0_i32, %c0_i32_0 : i32, i32, i32
  }
}

module attributes {stable_mosaic.version = 11 : i64} {
  func.func @_bn_add_relu_proj_kernel(%arg0: i32, %arg1: memref<144x128xbf16, #tpu.memory_space<vmem>>, %arg2: memref<144x128xbf16, #tpu.memory_space<vmem>>, %arg3: memref<2x128xf32, #tpu.memory_space<vmem>>, %arg4: memref<2x128xf32, #tpu.memory_space<vmem>>, %arg5: memref<144x128xbf16, #tpu.memory_space<vmem>>) attributes {dimension_semantics = [#tpu.dimension_semantics<parallel>], iteration_bounds = array<i64: 1>, scalar_prefetch = 0 : i64, scratch_operands = 0 : i64, tpu.core_type = #tpu.core_type<tc>, window_params = [{transform_indices = @transform_0, window_bounds = array<i64: 144, 128>}, {transform_indices = @transform_1, window_bounds = array<i64: 144, 128>}, {pipeline_mode = #tpu.pipeline_mode<synchronous>, transform_indices = @transform_2, window_bounds = array<i64: 2, 128>}, {pipeline_mode = #tpu.pipeline_mode<synchronous>, transform_indices = @transform_3, window_bounds = array<i64: 2, 128>}, {transform_indices = @transform_4, window_bounds = array<i64: 144, 128>}]} {
    %c0 = arith.constant 0 : index
    %c0_0 = arith.constant 0 : index
    %0 = vector.load %arg1[%c0, %c0_0] : memref<144x128xbf16, #tpu.memory_space<vmem>>, vector<144x128xbf16>
    %1 = arith.extf %0 : vector<144x128xbf16> to vector<144x128xf32>
    %c0_1 = arith.constant 0 : index
    %c0_2 = arith.constant 0 : index
    %2 = vector.load %arg3[%c0_1, %c0_2] : memref<2x128xf32, #tpu.memory_space<vmem>>, vector<1x128xf32>
    %3 = vector.broadcast %2 : vector<1x128xf32> to vector<144x128xf32>
    %4 = arith.mulf %1, %3 : vector<144x128xf32>
    %c1 = arith.constant 1 : index
    %c0_3 = arith.constant 0 : index
    %5 = vector.load %arg3[%c1, %c0_3] : memref<2x128xf32, #tpu.memory_space<vmem>>, vector<1x128xf32>
    %6 = vector.broadcast %5 : vector<1x128xf32> to vector<144x128xf32>
    %7 = arith.addf %4, %6 : vector<144x128xf32>
    %c0_4 = arith.constant 0 : index
    %c0_5 = arith.constant 0 : index
    %8 = vector.load %arg2[%c0_4, %c0_5] : memref<144x128xbf16, #tpu.memory_space<vmem>>, vector<144x128xbf16>
    %9 = arith.extf %8 : vector<144x128xbf16> to vector<144x128xf32>
    %c0_6 = arith.constant 0 : index
    %c0_7 = arith.constant 0 : index
    %10 = vector.load %arg4[%c0_6, %c0_7] : memref<2x128xf32, #tpu.memory_space<vmem>>, vector<1x128xf32>
    %11 = vector.broadcast %10 : vector<1x128xf32> to vector<144x128xf32>
    %12 = arith.mulf %9, %11 : vector<144x128xf32>
    %c1_8 = arith.constant 1 : index
    %c0_9 = arith.constant 0 : index
    %13 = vector.load %arg4[%c1_8, %c0_9] : memref<2x128xf32, #tpu.memory_space<vmem>>, vector<1x128xf32>
    %14 = vector.broadcast %13 : vector<1x128xf32> to vector<144x128xf32>
    %15 = arith.addf %12, %14 : vector<144x128xf32>
    %16 = arith.addf %7, %15 : vector<144x128xf32>
    %cst = arith.constant 0.000000e+00 : f32
    %17 = vector.broadcast %cst : f32 to vector<144x128xf32>
    %18 = arith.maximumf %16, %17 : vector<144x128xf32>
    %19 = arith.truncf %18 : vector<144x128xf32> to vector<144x128xbf16>
    %c0_10 = arith.constant 0 : index
    %c0_11 = arith.constant 0 : index
    %20 = vector.load %arg5[%c0_10, %c0_11] : memref<144x128xbf16, #tpu.memory_space<vmem>>, vector<144x128xbf16>
    tpu.vector_store %arg5[%c0_10, %c0_11], %19 {strides = array<i32>} : memref<144x128xbf16, #tpu.memory_space<vmem>>, vector<144x128xbf16>,
    return
  }
  func.func @transform_0(%arg0: i32) -> (i32, i32) {
    %c0_i32 = arith.constant 0 : i32
    %c0_i32_0 = arith.constant 0 : i32
    return %arg0, %c0_i32 : i32, i32
  }
  func.func @transform_1(%arg0: i32) -> (i32, i32) {
    %c0_i32 = arith.constant 0 : i32
    %c0_i32_0 = arith.constant 0 : i32
    return %arg0, %c0_i32 : i32, i32
  }
  func.func @transform_2(%arg0: i32) -> (i32, i32) {
    %c0_i32 = arith.constant 0 : i32
    %c0_i32_0 = arith.constant 0 : i32
    %c0_i32_1 = arith.constant 0 : i32
    return %c0_i32, %c0_i32_0 : i32, i32
  }
  func.func @transform_3(%arg0: i32) -> (i32, i32) {
    %c0_i32 = arith.constant 0 : i32
    %c0_i32_0 = arith.constant 0 : i32
    %c0_i32_1 = arith.constant 0 : i32
    return %c0_i32, %c0_i32_0 : i32, i32
  }
  func.func @transform_4(%arg0: i32) -> (i32, i32) {
    %c0_i32 = arith.constant 0 : i32
    %c0_i32_0 = arith.constant 0 : i32
    return %arg0, %c0_i32 : i32, i32
  }
}

module attributes {stable_mosaic.version = 11 : i64} {
  func.func @kernel(%arg0: i32, %arg1: memref<1x72x128xbf16, #tpu.memory_space<vmem>>, %arg2: memref<2x128xf32, #tpu.memory_space<vmem>>, %arg3: memref<1152x128xbf16, #tpu.memory_space<vmem>>, %arg4: memref<72x1xf32, #tpu.memory_space<vmem>>, %arg5: memref<1x72x128xbf16, #tpu.memory_space<vmem>>, %arg6: memref<128x128xbf16, #tpu.memory_space<vmem>>, %arg7: memref<1x72x128xbf16, #tpu.memory_space<vmem>>, %arg8: memref<1x2x128xf32, #tpu.memory_space<vmem>>, %arg9: memref<1x72x128xbf16, #tpu.memory_space<vmem>>, %arg10: memref<1x2x128xf32, #tpu.memory_space<vmem>>, %arg11: memref<104x128xbf16, #tpu.memory_space<vmem>>) attributes {dimension_semantics = [#tpu.dimension_semantics<parallel>], iteration_bounds = array<i64: 2>, scalar_prefetch = 0 : i64, scratch_operands = 1 : i64, tpu.core_type = #tpu.core_type<tc>, window_params = [{transform_indices = @transform_0, window_bounds = array<i64: 1, 72, 128>}, {pipeline_mode = #tpu.pipeline_mode<synchronous>, transform_indices = @transform_1, window_bounds = array<i64: 2, 128>}, {pipeline_mode = #tpu.pipeline_mode<synchronous>, transform_indices = @transform_2, window_bounds = array<i64: 1152, 128>}, {pipeline_mode = #tpu.pipeline_mode<synchronous>, transform_indices = @transform_3, window_bounds = array<i64: 72, 1>}, {transform_indices = @transform_4, window_bounds = array<i64: 1, 72, 128>}, {pipeline_mode = #tpu.pipeline_mode<synchronous>, transform_indices = @transform_5, window_bounds = array<i64: 128, 128>}, {transform_indices = @transform_6, window_bounds = array<i64: 1, 72, 128>}, {transform_indices = @transform_7, window_bounds = array<i64: 1, 2, 128>}, {transform_indices = @transform_8, window_bounds = array<i64: 1, 72, 128>}, {transform_indices = @transform_9, window_bounds = array<i64: 1, 2, 128>}]} {
    %c0 = arith.constant 0 : index
    %c0_0 = arith.constant 0 : index
    %c0_1 = arith.constant 0 : index
    %0 = vector.load %arg1[%c0, %c0_0, %c0_1] : memref<1x72x128xbf16, #tpu.memory_space<vmem>>, vector<1x72x128xbf16>
    %1 = vector.shape_cast %0 : vector<1x72x128xbf16> to vector<72x128xbf16>
    %2 = arith.extf %1 : vector<72x128xbf16> to vector<72x128xf32>
    %c0_2 = arith.constant 0 : index
    %c0_3 = arith.constant 0 : index
    %3 = vector.load %arg2[%c0_2, %c0_3] : memref<2x128xf32, #tpu.memory_space<vmem>>, vector<1x128xf32>
    %4 = vector.broadcast %3 : vector<1x128xf32> to vector<72x128xf32>
    %5 = arith.mulf %2, %4 : vector<72x128xf32>
    %c1 = arith.constant 1 : index
    %c0_4 = arith.constant 0 : index
    %6 = vector.load %arg2[%c1, %c0_4] : memref<2x128xf32, #tpu.memory_space<vmem>>, vector<1x128xf32>
    %7 = vector.broadcast %6 : vector<1x128xf32> to vector<72x128xf32>
    %8 = arith.addf %5, %7 : vector<72x128xf32>
    %cst = arith.constant 0.000000e+00 : f32
    %9 = vector.broadcast %cst : f32 to vector<72x128xf32>
    %10 = arith.maximumf %8, %9 : vector<72x128xf32>
    %c0_5 = arith.constant 0 : index
    %c0_6 = arith.constant 0 : index
    %11 = vector.load %arg4[%c0_5, %c0_6] : memref<72x1xf32, #tpu.memory_space<vmem>>, vector<72x1xf32>
    %12 = vector.broadcast %11 : vector<72x1xf32> to vector<72x128xf32>
    %13 = arith.mulf %10, %12 : vector<72x128xf32>
    %cst_7 = arith.constant 0.000000e+00 : bf16
    %14 = vector.broadcast %cst_7 : bf16 to vector<16x128xbf16>
    %c0_8 = arith.constant 0 : index
    %c0_9 = arith.constant 0 : index
    %15 = vector.load %arg11[%c0_8, %c0_9] : memref<104x128xbf16, #tpu.memory_space<vmem>>, vector<16x128xbf16>
    tpu.vector_store %arg11[%c0_8, %c0_9], %14 {strides = array<i32>} : memref<104x128xbf16, #tpu.memory_space<vmem>>, vector<16x128xbf16>,
    %16 = arith.truncf %13 : vector<72x128xf32> to vector<72x128xbf16>
    %c16 = arith.constant 16 : index
    %c0_10 = arith.constant 0 : index
    %17 = vector.load %arg11[%c16, %c0_10] : memref<104x128xbf16, #tpu.memory_space<vmem>>, vector<72x128xbf16>
    tpu.vector_store %arg11[%c16, %c0_10], %16 {strides = array<i32>} : memref<104x128xbf16, #tpu.memory_space<vmem>>, vector<72x128xbf16>,
    %cst_11 = arith.constant 0.000000e+00 : bf16
    %18 = vector.broadcast %cst_11 : bf16 to vector<16x128xbf16>
    %c88 = arith.constant 88 : index
    %c0_12 = arith.constant 0 : index
    %19 = vector.load %arg11[%c88, %c0_12] : memref<104x128xbf16, #tpu.memory_space<vmem>>, vector<16x128xbf16>
    tpu.vector_store %arg11[%c88, %c0_12], %18 {strides = array<i32>} : memref<104x128xbf16, #tpu.memory_space<vmem>>, vector<16x128xbf16>,
    %cst_13 = arith.constant 0.000000e+00 : f32
    %20 = vector.broadcast %cst_13 : f32 to vector<2x128xf32>
    %cst_14 = arith.constant 0.000000e+00 : f32
    %21 = vector.broadcast %cst_14 : f32 to vector<72x128xf32>
    %c6 = arith.constant 6 : index
    %c0_15 = arith.constant 0 : index
    %22 = vector.load %arg11[%c6, %c0_15] : memref<104x128xbf16, #tpu.memory_space<vmem>>, vector<72x128xbf16>
    %c0_16 = arith.constant 0 : index
    %c0_17 = arith.constant 0 : index
    %23 = vector.load %arg3[%c0_16, %c0_17] : memref<1152x128xbf16, #tpu.memory_space<vmem>>, vector<128x128xbf16>
    %cst_18 = arith.constant dense<0.000000e+00> : vector<72x128xf32>
    %24 = tpu.matmul %22, %23, %cst_18 {dimension_numbers = #tpu.dot_dimension_numbers<[1], [0], [0], [1], [0, 0, 1, 1], [], []>} : vector<72x128xbf16>, vector<128x128xbf16>, vector<72x128xf32> -> vector<72x128xf32>
    %25 = arith.addf %21, %24 : vector<72x128xf32>
    %c7 = arith.constant 7 : index
    %c0_19 = arith.constant 0 : index
    %26 = vector.load %arg11[%c7, %c0_19] : memref<104x128xbf16, #tpu.memory_space<vmem>>, vector<72x128xbf16>
    %c128 = arith.constant 128 : index
    %c0_20 = arith.constant 0 : index
    %27 = vector.load %arg3[%c128, %c0_20] : memref<1152x128xbf16, #tpu.memory_space<vmem>>, vector<128x128xbf16>
    %cst_21 = arith.constant dense<0.000000e+00> : vector<72x128xf32>
    %28 = tpu.matmul %26, %27, %cst_21 {dimension_numbers = #tpu.dot_dimension_numbers<[1], [0], [0], [1], [0, 0, 1, 1], [], []>} : vector<72x128xbf16>, vector<128x128xbf16>, vector<72x128xf32> -> vector<72x128xf32>
    %29 = arith.addf %25, %28 : vector<72x128xf32>
    %c8 = arith.constant 8 : index
    %c0_22 = arith.constant 0 : index
    %30 = vector.load %arg11[%c8, %c0_22] : memref<104x128xbf16, #tpu.memory_space<vmem>>, vector<72x128xbf16>
    %c256 = arith.constant 256 : index
    %c0_23 = arith.constant 0 : index
    %31 = vector.load %arg3[%c256, %c0_23] : memref<1152x128xbf16, #tpu.memory_space<vmem>>, vector<128x128xbf16>
    %cst_24 = arith.constant dense<0.000000e+00> : vector<72x128xf32>
    %32 = tpu.matmul %30, %31, %cst_24 {dimension_numbers = #tpu.dot_dimension_numbers<[1], [0], [0], [1], [0, 0, 1, 1], [], []>} : vector<72x128xbf16>, vector<128x128xbf16>, vector<72x128xf32> -> vector<72x128xf32>
    %33 = arith.addf %29, %32 : vector<72x128xf32>
    %c15 = arith.constant 15 : index
    %c0_25 = arith.constant 0 : index
    %34 = vector.load %arg11[%c15, %c0_25] : memref<104x128xbf16, #tpu.memory_space<vmem>>, vector<72x128xbf16>
    %c384 = arith.constant 384 : index
    %c0_26 = arith.constant 0 : index
    %35 = vector.load %arg3[%c384, %c0_26] : memref<1152x128xbf16, #tpu.memory_space<vmem>>, vector<128x128xbf16>
    %cst_27 = arith.constant dense<0.000000e+00> : vector<72x128xf32>
    %36 = tpu.matmul %34, %35, %cst_27 {dimension_numbers = #tpu.dot_dimension_numbers<[1], [0], [0], [1], [0, 0, 1, 1], [], []>} : vector<72x128xbf16>, vector<128x128xbf16>, vector<72x128xf32> -> vector<72x128xf32>
    %37 = arith.addf %33, %36 : vector<72x128xf32>
    %c16_28 = arith.constant 16 : index
    %c0_29 = arith.constant 0 : index
    %38 = vector.load %arg11[%c16_28, %c0_29] : memref<104x128xbf16, #tpu.memory_space<vmem>>, vector<72x128xbf16>
    %c512 = arith.constant 512 : index
    %c0_30 = arith.constant 0 : index
    %39 = vector.load %arg3[%c512, %c0_30] : memref<1152x128xbf16, #tpu.memory_space<vmem>>, vector<128x128xbf16>
    %cst_31 = arith.constant dense<0.000000e+00> : vector<72x128xf32>
    %40 = tpu.matmul %38, %39, %cst_31 {dimension_numbers = #tpu.dot_dimension_numbers<[1], [0], [0], [1], [0, 0, 1, 1], [], []>} : vector<72x128xbf16>, vector<128x128xbf16>, vector<72x128xf32> -> vector<72x128xf32>
    %41 = arith.addf %37, %40 : vector<72x128xf32>
    %c17 = arith.constant 17 : index
    %c0_32 = arith.constant 0 : index
    %42 = vector.load %arg11[%c17, %c0_32] : memref<104x128xbf16, #tpu.memory_space<vmem>>, vector<72x128xbf16>
    %c640 = arith.constant 640 : index
    %c0_33 = arith.constant 0 : index
    %43 = vector.load %arg3[%c640, %c0_33] : memref<1152x128xbf16, #tpu.memory_space<vmem>>, vector<128x128xbf16>
    %cst_34 = arith.constant dense<0.000000e+00> : vector<72x128xf32>
    %44 = tpu.matmul %42, %43, %cst_34 {dimension_numbers = #tpu.dot_dimension_numbers<[1], [0], [0], [1], [0, 0, 1, 1], [], []>} : vector<72x128xbf16>, vector<128x128xbf16>, vector<72x128xf32> -> vector<72x128xf32>
    %45 = arith.addf %41, %44 : vector<72x128xf32>
    %c24 = arith.constant 24 : index
    %c0_35 = arith.constant 0 : index
    %46 = vector.load %arg11[%c24, %c0_35] : memref<104x128xbf16, #tpu.memory_space<vmem>>, vector<72x128xbf16>
    %c768 = arith.constant 768 : index
    %c0_36 = arith.constant 0 : index
    %47 = vector.load %arg3[%c768, %c0_36] : memref<1152x128xbf16, #tpu.memory_space<vmem>>, vector<128x128xbf16>
    %cst_37 = arith.constant dense<0.000000e+00> : vector<72x128xf32>
    %48 = tpu.matmul %46, %47, %cst_37 {dimension_numbers = #tpu.dot_dimension_numbers<[1], [0], [0], [1], [0, 0, 1, 1], [], []>} : vector<72x128xbf16>, vector<128x128xbf16>, vector<72x128xf32> -> vector<72x128xf32>
    %49 = arith.addf %45, %48 : vector<72x128xf32>
    %c25 = arith.constant 25 : index
    %c0_38 = arith.constant 0 : index
    %50 = vector.load %arg11[%c25, %c0_38] : memref<104x128xbf16, #tpu.memory_space<vmem>>, vector<72x128xbf16>
    %c896 = arith.constant 896 : index
    %c0_39 = arith.constant 0 : index
    %51 = vector.load %arg3[%c896, %c0_39] : memref<1152x128xbf16, #tpu.memory_space<vmem>>, vector<128x128xbf16>
    %cst_40 = arith.constant dense<0.000000e+00> : vector<72x128xf32>
    %52 = tpu.matmul %50, %51, %cst_40 {dimension_numbers = #tpu.dot_dimension_numbers<[1], [0], [0], [1], [0, 0, 1, 1], [], []>} : vector<72x128xbf16>, vector<128x128xbf16>, vector<72x128xf32> -> vector<72x128xf32>
    %53 = arith.addf %49, %52 : vector<72x128xf32>
    %c26 = arith.constant 26 : index
    %c0_41 = arith.constant 0 : index
    %54 = vector.load %arg11[%c26, %c0_41] : memref<104x128xbf16, #tpu.memory_space<vmem>>, vector<72x128xbf16>
    %c1024 = arith.constant 1024 : index
    %c0_42 = arith.constant 0 : index
    %55 = vector.load %arg3[%c1024, %c0_42] : memref<1152x128xbf16, #tpu.memory_space<vmem>>, vector<128x128xbf16>
    %cst_43 = arith.constant dense<0.000000e+00> : vector<72x128xf32>
    %56 = tpu.matmul %54, %55, %cst_43 {dimension_numbers = #tpu.dot_dimension_numbers<[1], [0], [0], [1], [0, 0, 1, 1], [], []>} : vector<72x128xbf16>, vector<128x128xbf16>, vector<72x128xf32> -> vector<72x128xf32>
    %57 = arith.addf %53, %56 : vector<72x128xf32>
    %c0_44 = arith.constant 0 : index
    %c0_45 = arith.constant 0 : index
    %58 = vector.load %arg4[%c0_44, %c0_45] : memref<72x1xf32, #tpu.memory_space<vmem>>, vector<72x1xf32>
    %59 = vector.broadcast %58 : vector<72x1xf32> to vector<72x128xf32>
    %60 = arith.mulf %57, %59 : vector<72x128xf32>
    %61 = arith.truncf %60 : vector<72x128xf32> to vector<72x128xbf16>
    %c0_46 = arith.constant 0 : index
    %c0_47 = arith.constant 0 : index
    %c0_48 = arith.constant 0 : index
    %62 = vector.load %arg7[%c0_46, %c0_47, %c0_48] : memref<1x72x128xbf16, #tpu.memory_space<vmem>>, vector<1x72x128xbf16>
    %63 = vector.shape_cast %62 : vector<1x72x128xbf16> to vector<72x128xbf16>
    %64 = vector.shape_cast %61 : vector<72x128xbf16> to vector<1x72x128xbf16>
    tpu.vector_store %arg7[%c0_46, %c0_47, %c0_48], %64 {strides = array<i32>} : memref<1x72x128xbf16, #tpu.memory_space<vmem>>, vector<1x72x128xbf16>,
    %cst_49 = arith.constant dense<0.000000e+00> : vector<128xf32>
    %65 = vector.multi_reduction <add>, %60, %cst_49 [0] : vector<72x128xf32> to vector<128xf32>
    %66 = vector.shape_cast %65 : vector<128xf32> to vector<1x128xf32>
    %67 = arith.mulf %60, %60 : vector<72x128xf32>
    %cst_50 = arith.constant dense<0.000000e+00> : vector<128xf32>
    %68 = vector.multi_reduction <add>, %67, %cst_50 [0] : vector<72x128xf32> to vector<128xf32>
    %69 = vector.shape_cast %68 : vector<128xf32> to vector<1x128xf32>
    %70 = tpu.concatenate %66, %69 in 0 : vector<1x128xf32>, vector<1x128xf32> -> vector<2x128xf32>
    %71 = arith.addf %20, %70 : vector<2x128xf32>
    %c0_51 = arith.constant 0 : index
    %c0_52 = arith.constant 0 : index
    %c0_53 = arith.constant 0 : index
    %72 = vector.load %arg5[%c0_51, %c0_52, %c0_53] : memref<1x72x128xbf16, #tpu.memory_space<vmem>>, vector<1x72x128xbf16>
    %73 = vector.shape_cast %72 : vector<1x72x128xbf16> to vector<72x128xbf16>
    %c0_54 = arith.constant 0 : index
    %c0_55 = arith.constant 0 : index
    %74 = vector.load %arg6[%c0_54, %c0_55] : memref<128x128xbf16, #tpu.memory_space<vmem>>, vector<128x128xbf16>
    %cst_56 = arith.constant dense<0.000000e+00> : vector<72x128xf32>
    %75 = tpu.matmul %73, %74, %cst_56 {dimension_numbers = #tpu.dot_dimension_numbers<[1], [0], [0], [1], [0, 0, 1, 1], [], []>} : vector<72x128xbf16>, vector<128x128xbf16>, vector<72x128xf32> -> vector<72x128xf32>
    %76 = vector.broadcast %58 : vector<72x1xf32> to vector<72x128xf32>
    %77 = arith.mulf %75, %76 : vector<72x128xf32>
    %78 = arith.truncf %77 : vector<72x128xf32> to vector<72x128xbf16>
    %c0_57 = arith.constant 0 : index
    %c0_58 = arith.constant 0 : index
    %c0_59 = arith.constant 0 : index
    %79 = vector.load %arg9[%c0_57, %c0_58, %c0_59] : memref<1x72x128xbf16, #tpu.memory_space<vmem>>, vector<1x72x128xbf16>
    %80 = vector.shape_cast %79 : vector<1x72x128xbf16> to vector<72x128xbf16>
    %81 = vector.shape_cast %78 : vector<72x128xbf16> to vector<1x72x128xbf16>
    tpu.vector_store %arg9[%c0_57, %c0_58, %c0_59], %81 {strides = array<i32>} : memref<1x72x128xbf16, #tpu.memory_space<vmem>>, vector<1x72x128xbf16>,
    %cst_60 = arith.constant dense<0.000000e+00> : vector<128xf32>
    %82 = vector.multi_reduction <add>, %77, %cst_60 [0] : vector<72x128xf32> to vector<128xf32>
    %83 = vector.shape_cast %82 : vector<128xf32> to vector<1x128xf32>
    %84 = arith.mulf %77, %77 : vector<72x128xf32>
    %cst_61 = arith.constant dense<0.000000e+00> : vector<128xf32>
    %85 = vector.multi_reduction <add>, %84, %cst_61 [0] : vector<72x128xf32> to vector<128xf32>
    %86 = vector.shape_cast %85 : vector<128xf32> to vector<1x128xf32>
    %87 = tpu.concatenate %83, %86 in 0 : vector<1x128xf32>, vector<1x128xf32> -> vector<2x128xf32>
    %88 = arith.addf %20, %87 : vector<2x128xf32>
    %c0_62 = arith.constant 0 : index
    %c0_63 = arith.constant 0 : index
    %c0_64 = arith.constant 0 : index
    %89 = vector.load %arg8[%c0_62, %c0_63, %c0_64] : memref<1x2x128xf32, #tpu.memory_space<vmem>>, vector<1x2x128xf32>
    %90 = vector.shape_cast %89 : vector<1x2x128xf32> to vector<2x128xf32>
    %91 = vector.shape_cast %71 : vector<2x128xf32> to vector<1x2x128xf32>
    tpu.vector_store %arg8[%c0_62, %c0_63, %c0_64], %91 {strides = array<i32>} : memref<1x2x128xf32, #tpu.memory_space<vmem>>, vector<1x2x128xf32>,
    %c0_65 = arith.constant 0 : index
    %c0_66 = arith.constant 0 : index
    %c0_67 = arith.constant 0 : index
    %92 = vector.load %arg10[%c0_65, %c0_66, %c0_67] : memref<1x2x128xf32, #tpu.memory_space<vmem>>, vector<1x2x128xf32>
    %93 = vector.shape_cast %92 : vector<1x2x128xf32> to vector<2x128xf32>
    %94 = vector.shape_cast %88 : vector<2x128xf32> to vector<1x2x128xf32>
    tpu.vector_store %arg10[%c0_65, %c0_66, %c0_67], %94 {strides = array<i32>} : memref<1x2x128xf32, #tpu.memory_space<vmem>>, vector<1x2x128xf32>,
    return
  }
  func.func @transform_0(%arg0: i32) -> (i32, i32, i32) {
    %c0_i32 = arith.constant 0 : i32
    %c0_i32_0 = arith.constant 0 : i32
    %c0_i32_1 = arith.constant 0 : i32
    return %arg0, %c0_i32, %c0_i32_0 : i32, i32, i32
  }
  func.func @transform_1(%arg0: i32) -> (i32, i32) {
    %c0_i32 = arith.constant 0 : i32
    %c0_i32_0 = arith.constant 0 : i32
    %c0_i32_1 = arith.constant 0 : i32
    return %c0_i32, %c0_i32_0 : i32, i32
  }
  func.func @transform_2(%arg0: i32) -> (i32, i32) {
    %c0_i32 = arith.constant 0 : i32
    %c0_i32_0 = arith.constant 0 : i32
    %c0_i32_1 = arith.constant 0 : i32
    return %c0_i32, %c0_i32_0 : i32, i32
  }
  func.func @transform_3(%arg0: i32) -> (i32, i32) {
    %c0_i32 = arith.constant 0 : i32
    %c0_i32_0 = arith.constant 0 : i32
    %c0_i32_1 = arith.constant 0 : i32
    return %c0_i32, %c0_i32_0 : i32, i32
  }
  func.func @transform_4(%arg0: i32) -> (i32, i32, i32) {
    %c0_i32 = arith.constant 0 : i32
    %c0_i32_0 = arith.constant 0 : i32
    %c0_i32_1 = arith.constant 0 : i32
    return %arg0, %c0_i32, %c0_i32_0 : i32, i32, i32
  }
  func.func @transform_5(%arg0: i32) -> (i32, i32) {
    %c0_i32 = arith.constant 0 : i32
    %c0_i32_0 = arith.constant 0 : i32
    %c0_i32_1 = arith.constant 0 : i32
    return %c0_i32, %c0_i32_0 : i32, i32
  }
  func.func @transform_6(%arg0: i32) -> (i32, i32, i32) {
    %c0_i32 = arith.constant 0 : i32
    %c0_i32_0 = arith.constant 0 : i32
    %c0_i32_1 = arith.constant 0 : i32
    return %arg0, %c0_i32, %c0_i32_0 : i32, i32, i32
  }
  func.func @transform_7(%arg0: i32) -> (i32, i32, i32) {
    %c0_i32 = arith.constant 0 : i32
    %c0_i32_0 = arith.constant 0 : i32
    %c0_i32_1 = arith.constant 0 : i32
    return %arg0, %c0_i32, %c0_i32_0 : i32, i32, i32
  }
  func.func @transform_8(%arg0: i32) -> (i32, i32, i32) {
    %c0_i32 = arith.constant 0 : i32
    %c0_i32_0 = arith.constant 0 : i32
    %c0_i32_1 = arith.constant 0 : i32
    return %arg0, %c0_i32, %c0_i32_0 : i32, i32, i32
  }
  func.func @transform_9(%arg0: i32) -> (i32, i32, i32) {
    %c0_i32 = arith.constant 0 : i32
    %c0_i32_0 = arith.constant 0 : i32
    %c0_i32_1 = arith.constant 0 : i32
    return %arg0, %c0_i32, %c0_i32_0 : i32, i32, i32
  }
}

</mosaic_0001>

<llo_original>
// kernel: basic_block_forward.3
$region0: #{basic_block_forward.3}
  #allocation0 [shape = 'u32[]', space=smem, size = 0x4, offset = 0x4, fixed_abs, tag = 'smem constant byte address 0x4 - core index']
  #allocation1 [shape = 'u32[72,128]{1,0:T(1,128)}', space=vmem, size = 0x9000, scoped, tag = 'internal scratch']
  %s0 = inlined_call_operand.vmem [shape: bf16[2,4,88,128], index: 0, kind: input, shape index: {}]
  %s1 = inlined_call_operand.vmem [shape: bf16[1152,128], index: 1, kind: input, shape index: {}]
  %s2 = inlined_call_operand.vmem [shape: f32[72,1], index: 2, kind: input, shape index: {}]
  %s3 = inlined_call_operand.vmem [shape: bf16[2,72,128], index: 3, kind: output, shape index: {0}]
  %s4 = inlined_call_operand.vmem [shape: f32[2,2,128], index: 4, kind: output, shape index: {1}]
  %5 = xla_tuple %s3, %s4
  %s6 = sld [smem:[#allocation0]]
  $region53: #{basic_block_forward.3} parent=0
    _
  %s8 = ssub.s32 1, %s6
  %s9 = scalar_select 0, %s8, %s6
  loop: start=0, step=1, limit=4
  $region2: #{basic_block_forward.3} parent=0 // loop_pre_header
    _
  $region3: #{basic_block_forward.3} parent=0 // loop_header
    %s11 = sphi 0, %s15
    %p12 = scmp.ge.s32.totalorder %s11, 4
    %s21 = sphi 0, %s23
    %s24 = sphi 0, %s21
    %s25 = sphi 0, %s24
    %s41 = sphi 0, %s25
    %s45 = sphi 0, %s45
    %s47 = sphi 0, %s45
    %s48 = sphi 0, %s47
    %s62 = sphi 0, %s48
    %s66 = sphi 0, %s66
    %s68 = sphi 0, %s66
    %s69 = sphi 0, %s68
    %s83 = sphi 0, %s69
    %s89 = sphi 0, %s91
    %s92 = sphi 0, %s89
    %s93 = sphi 0, %s92
    %s109 = sphi 0, %s93
    %s115 = sphi 0, %s117
    %s118 = sphi 0, %s115
    %s119 = sphi 0, %s118
    %s135 = sphi 0, %s119
  $region4: #{basic_block_forward.3} parent=0 // loop_header_branch
    %14 = sbr.rel (%p12) target = $region8
  $region5: #{basic_block_forward.3} parent=0 // loop_body
    %s16 = ssub.s32 %s11, 1
    %s17 = ssub.s32 %s11, 2
    %s18 = sadd.s32 %s11, 1
    %s19 = ssub.s32 %s11, %s18
    %p20 = scmp.eq.s32.totalorder %s19, 0
    %s22 = sadd.s32 %s21, 1
    %s23 = scalar_select %p20, %s21, %s22
    %p26 = pneg %p20
    %p27 = scmp.eq.s32.totalorder %s11, 1
    %p28 = por %p26, %p27
    %p29 = scmp.ne.s32.totalorder %s21, %s24
    %p30 = scmp.eq.s32.totalorder %s11, 0
    %p31 = por %p29, %p30
    %p32 = scmp.ne.s32.totalorder %s21, %s24
    %p33 = scmp.eq.s32.totalorder %s16, 1
    %p34 = por %p32, %p33
    %p35 = scmp.ne.s32.totalorder %s24, %s25
    %p36 = scmp.eq.s32.totalorder %s16, 0
    %p37 = por %p35, %p36
    %p38 = scmp.ne.s32.totalorder %s24, %s25
    %p39 = scmp.eq.s32.totalorder %s17, 1
    %p40 = por %p38, %p39
    %p42 = scmp.ne.s32.totalorder %s25, %s41
    %p43 = scmp.eq.s32.totalorder %s17, 0
    %p44 = por %p42, %p43
    %s46 = sadd.s32 %s45, 1
    %p49 = scmp.eq.s32.totalorder %s11, 1
    %p50 = scmp.ne.s32.totalorder %s45, %s47
    %p51 = scmp.eq.s32.totalorder %s11, 0
    %p52 = por %p50, %p51
    %p53 = scmp.ne.s32.totalorder %s45, %s47
    %p54 = scmp.eq.s32.totalorder %s16, 1
    %p55 = por %p53, %p54
    %p56 = scmp.ne.s32.totalorder %s47, %s48
    %p57 = scmp.eq.s32.totalorder %s16, 0
    %p58 = por %p56, %p57
    %p59 = scmp.ne.s32.totalorder %s47, %s48
    %p60 = scmp.eq.s32.totalorder %s17, 1
    %p61 = por %p59, %p60
    %p63 = scmp.ne.s32.totalorder %s48, %s62
    %p64 = scmp.eq.s32.totalorder %s17, 0
    %p65 = por %p63, %p64
    %s67 = sadd.s32 %s66, 1
    %p70 = scmp.eq.s32.totalorder %s11, 1
    %p71 = scmp.ne.s32.totalorder %s66, %s68
    %p72 = scmp.eq.s32.totalorder %s11, 0
    %p73 = por %p71, %p72
    %p74 = scmp.ne.s32.totalorder %s66, %s68
    %p75 = scmp.eq.s32.totalorder %s16, 1
    %p76 = por %p74, %p75
    %p77 = scmp.ne.s32.totalorder %s68, %s69
    %p78 = scmp.eq.s32.totalorder %s16, 0
    %p79 = por %p77, %p78
    %p80 = scmp.ne.s32.totalorder %s68, %s69
    %p81 = scmp.eq.s32.totalorder %s17, 1
    %p82 = por %p80, %p81
    %p84 = scmp.ne.s32.totalorder %s69, %s83
    %p85 = scmp.eq.s32.totalorder %s17, 0
    %p86 = por %p84, %p85
    %s87 = ssub.s32 %s11, %s18
    %p88 = scmp.eq.s32.totalorder %s87, 0
    %s90 = sadd.s32 %s89, 1
    %s91 = scalar_select %p88, %s89, %s90
    %p94 = pneg %p88
    %p95 = scmp.eq.s32.totalorder %s11, 1
    %p96 = por %p94, %p95
    %p97 = scmp.ne.s32.totalorder %s89, %s92
    %p98 = scmp.eq.s32.totalorder %s11, 0
    %p99 = por %p97, %p98
    %p100 = scmp.ne.s32.totalorder %s89, %s92
    %p101 = scmp.eq.s32.totalorder %s16, 1
    %p102 = por %p100, %p101
    %p103 = scmp.ne.s32.totalorder %s92, %s93
    %p104 = scmp.eq.s32.totalorder %s16, 0
    %p105 = por %p103, %p104
    %p106 = scmp.ne.s32.totalorder %s92, %s93
    %p107 = scmp.eq.s32.totalorder %s17, 1
    %p108 = por %p106, %p107
    %p110 = scmp.ne.s32.totalorder %s93, %s109
    %p111 = scmp.eq.s32.totalorder %s17, 0
    %p112 = por %p110, %p111
    %s113 = ssub.s32 %s11, %s18
    %p114 = scmp.eq.s32.totalorder %s113, 0
    %s116 = sadd.s32 %s115, 1
    %s117 = scalar_select %p114, %s115, %s116
    %p120 = pneg %p114
    %p121 = scmp.eq.s32.totalorder %s11, 1
    %p122 = por %p120, %p121
    %p123 = scmp.ne.s32.totalorder %s115, %s118
    %p124 = scmp.eq.s32.totalorder %s11, 0
    %p125 = por %p123, %p124
    %p126 = scmp.ne.s32.totalorder %s115, %s118
    %p127 = scmp.eq.s32.totalorder %s16, 1
    %p128 = por %p126, %p127
    %p129 = scmp.ne.s32.totalorder %s118, %s119
    %p130 = scmp.eq.s32.totalorder %s16, 0
    %p131 = por %p129, %p130
    %p132 = scmp.ne.s32.totalorder %s118, %s119
    %p133 = scmp.eq.s32.totalorder %s17, 1
    %p134 = por %p132, %p133
    %p136 = scmp.ne.s32.totalorder %s119, %s135
    %p137 = scmp.eq.s32.totalorder %s17, 0
    %p138 = por %p136, %p137
    %p139 = scmp.le.s32.totalorder 1, %s11
    %p140 = scmp.lt.s32.totalorder %s11, 3
    %p141 = pnand %p139, %p140
    %p142 = pneg %p141
    // Predicated region
    $region9: #{basic_block_forward.3} parent=5 // pred_check
      _
    $region10: #{basic_block_forward.3} parent=5 // pred_check_branch
      %144 = sbr.rel (%p141) target = $region12
    $region11: #{basic_block_forward.3} parent=5 // pred_region
      %s145 = ssub.s32 %s11, 1
      // Predicated region
      $region13: #{basic_block_forward.3} parent=11 // pred_check
        %p146 = pneg %p58
      $region14: #{basic_block_forward.3} parent=11 // pred_check_branch
        %148 = sbr.rel (%p146) target = $region16
      $region15: #{basic_block_forward.3} parent=11 // pred_region
        _
      $region16: #{basic_block_forward.3} parent=11 // pred_fallthru
        _
      // Predicated region
      $region17: #{basic_block_forward.3} parent=11 // pred_check
        %p149 = pneg %p79
      $region18: #{basic_block_forward.3} parent=11 // pred_check_branch
        %151 = sbr.rel (%p149) target = $region20
      $region19: #{basic_block_forward.3} parent=11 // pred_region
        _
      $region20: #{basic_block_forward.3} parent=11 // pred_fallthru
        _
    $region12: #{basic_block_forward.3} parent=5 // pred_fallthru
      _
    %p152 = scmp.lt.s32.totalorder %s11, 2
    // Predicated region
    $region21: #{basic_block_forward.3} parent=5 // pred_check
      %p153 = pneg %p152
    $region22: #{basic_block_forward.3} parent=5 // pred_check_branch
      %155 = sbr.rel (%p153) target = $region24
    $region23: #{basic_block_forward.3} parent=5 // pred_region
      // Predicated region
      $region25: #{basic_block_forward.3} parent=23 // pred_check
        %p156 = pneg %p31
      $region26: #{basic_block_forward.3} parent=23 // pred_check_branch
        %158 = sbr.rel (%p156) target = $region28
      $region27: #{basic_block_forward.3} parent=23 // pred_region
        %p159 = scmp.lt.s32.totalorder %s11, 1
        %s160 = scalar_select %p159, %s11, 1
        %s161 = smul.addr %s160, 44
        %s162 = smul.addr %s161, 4
        %s163 = scalar_lea.vmem %s0, %s162
      $region28: #{basic_block_forward.3} parent=23 // pred_fallthru
        _
    $region24: #{basic_block_forward.3} parent=5 // pred_fallthru
      _
    %p164 = scmp.le.s32.totalorder 1, %s11
    %p165 = scmp.lt.s32.totalorder %s11, 3
    %p166 = pnand %p164, %p165
    %p167 = pneg %p166
    // Predicated region
    $region29: #{basic_block_forward.3} parent=5 // pred_check
      _
    $region30: #{basic_block_forward.3} parent=5 // pred_check_branch
      %169 = sbr.rel (%p166) target = $region32
    $region31: #{basic_block_forward.3} parent=5 // pred_region
      %s170 = ssub.s32 %s11, 1
      %p171 = scmp.lt.s32.totalorder %s16, 1
      %s172 = scalar_select %p171, %s16, 1
      %s173 = smul.addr %s172, 44
      %s174 = smul.addr %s173, 4
      %s175 = scalar_lea.vmem %s0, %s174
      %p176 = pneg %p37
      %p177 = pneg %p34
      %p178 = pneg %p58
      %p179 = pneg %p55
      %p180 = pneg %p79
      %p181 = pneg %p76
      %p182 = pneg %p105
      %p183 = pneg %p102
      %p184 = scmp.lt.s32.totalorder %s16, 1
      %s185 = scalar_select %p184, %s16, 1
      %s186 = smul.addr %s185, 9
      %s187 = smul.addr %s186, 4
      %s188 = scalar_lea.vmem %s3, %s187
      %p189 = pneg %p131
      %p190 = pneg %p128
      %p191 = scmp.lt.s32.totalorder %s16, 1
      %s192 = scalar_select %p191, %s16, 1
      %s193 = smul.addr %s192, 2
      %s194 = scalar_lea.vmem %s4, %s193
      %p195 = scmp.lt.s32.totalorder %s16, 1
      %s196 = scalar_select %p195, %s16, 1
      %s197 = smul.addr %s196, 44
      %s198 = smul.addr %s197, 4
      %s199 = scalar_lea.vmem %s0, %s198
      %p200 = scmp.lt.s32.totalorder %s16, 1
      %s201 = scalar_select %p200, %s16, 1
      %s202 = smul.addr %s201, 9
      %s203 = smul.addr %s202, 4
      %s204 = scalar_lea.vmem %s3, %s203
      %p205 = scmp.lt.s32.totalorder %s16, 1
      %s206 = scalar_select %p205, %s16, 1
      %s207 = smul.addr %s206, 2
      %s208 = scalar_lea.vmem %s4, %s207
      %v209 = vld [vmem:[%s199] sm:$0xf]
      %v210 = vld [vmem:[%s199 + $0x4] sm:$0xf]
      %v211 = vld [vmem:[%s199 + $0x8] sm:$0xf]
      %v212 = vld [vmem:[%s199 + $0xc] sm:$0xf]
      %v213 = vld [vmem:[%s199 + $0x10] sm:$0xf]
      %v214 = vld [vmem:[%s199 + $0x14] sm:$0xf]
      %v215 = vld [vmem:[%s199 + $0x18] sm:$0xf]
      %v216 = vld [vmem:[%s199 + $0x1c] sm:$0xf]
      %v217 = vld [vmem:[%s199 + $0x20] sm:$0xf]
      %v218 = vld [vmem:[%s1] sm:$0xf]
      %v219 = vld [vmem:[%s1 + $0x4] sm:$0xf]
      %v220 = vld [vmem:[%s1 + $0x8] sm:$0xf]
      %v221 = vld [vmem:[%s1 + $0xc] sm:$0xf]
      %v222 = vld [vmem:[%s1 + $0x10] sm:$0xf]
      %v223 = vld [vmem:[%s1 + $0x14] sm:$0xf]
      %v224 = vld [vmem:[%s1 + $0x18] sm:$0xf]
      %v225 = vld [vmem:[%s1 + $0x1c] sm:$0xf]
      %v226 = vld [vmem:[%s1 + $0x20] sm:$0xf]
      %v227 = vld [vmem:[%s1 + $0x24] sm:$0xf]
      %v228 = vld [vmem:[%s1 + $0x28] sm:$0xf]
      %v229 = vld [vmem:[%s1 + $0x2c] sm:$0xf]
      %v230 = vld [vmem:[%s1 + $0x30] sm:$0xf]
      %v231 = vld [vmem:[%s1 + $0x34] sm:$0xf]
      %v232 = vld [vmem:[%s1 + $0x38] sm:$0xf]
      %v233 = vld [vmem:[%s1 + $0x3c] sm:$0xf]
      %s234 = scalar_lea.vmem %s199, 44
      %v235 = vld [vmem:[%s234] sm:$0xf]
      %v236 = vld [vmem:[%s234 + $0x4] sm:$0xf]
      %v237 = vld [vmem:[%s234 + $0x8] sm:$0xf]
      %v238 = vld [vmem:[%s234 + $0xc] sm:$0xf]
      %v239 = vld [vmem:[%s234 + $0x10] sm:$0xf]
      %v240 = vld [vmem:[%s234 + $0x14] sm:$0xf]
      %v241 = vld [vmem:[%s234 + $0x18] sm:$0xf]
      %v242 = vld [vmem:[%s234 + $0x1c] sm:$0xf]
      %v243 = vld [vmem:[%s234 + $0x20] sm:$0xf]
      %v244 = vld [vmem:[%s1 + $0x40] sm:$0xf]
      %v245 = vld [vmem:[%s1 + $0x44] sm:$0xf]
      %v246 = vld [vmem:[%s1 + $0x48] sm:$0xf]
      %v247 = vld [vmem:[%s1 + $0x4c] sm:$0xf]
      %v248 = vld [vmem:[%s1 + $0x50] sm:$0xf]
      %v249 = vld [vmem:[%s1 + $0x54] sm:$0xf]
      %v250 = vld [vmem:[%s1 + $0x58] sm:$0xf]
      %v251 = vld [vmem:[%s1 + $0x5c] sm:$0xf]
      %v252 = vld [vmem:[%s1 + $0x60] sm:$0xf]
      %v253 = vld [vmem:[%s1 + $0x64] sm:$0xf]
      %v254 = vld [vmem:[%s1 + $0x68] sm:$0xf]
      %v255 = vld [vmem:[%s1 + $0x6c] sm:$0xf]
      %v256 = vld [vmem:[%s1 + $0x70] sm:$0xf]
      %v257 = vld [vmem:[%s1 + $0x74] sm:$0xf]
      %v258 = vld [vmem:[%s1 + $0x78] sm:$0xf]
      %v259 = vld [vmem:[%s1 + $0x7c] sm:$0xf]
      %v269 = vunpack.c.l.b16 %v235
      %v270 = vunpack.c.l.b16 %v236
      %v271 = vunpack.c.l.b16 %v237
      %v272 = vunpack.c.l.b16 %v238
      %v273 = vunpack.c.l.b16 %v239
      %v274 = vunpack.c.l.b16 %v240
      %v275 = vunpack.c.l.b16 %v241
      %v276 = vunpack.c.l.b16 %v242
      %v277 = vunpack.c.l.b16 %v243
      %v278 = vpack.c.b16 %v270, %v269
      %v279 = vpack.c.b16 %v272, %v271
      %v280 = vpack.c.b16 %v274, %v273
      %v281 = vpack.c.b16 %v276, %v275
      %v282 = vpack.c.b16 %v277, %v277
      %v304 = vunpack.c.l.b16 %v244
      %v305 = vunpack.c.l.b16 %v245
      %v306 = vunpack.c.l.b16 %v246
      %v307 = vunpack.c.l.b16 %v247
      %v308 = vunpack.c.l.b16 %v248
      %v309 = vunpack.c.l.b16 %v249
      %v310 = vunpack.c.l.b16 %v250
      %v311 = vunpack.c.l.b16 %v251
      %v312 = vunpack.c.l.b16 %v252
      %v313 = vunpack.c.l.b16 %v253
      %v314 = vunpack.c.l.b16 %v254
      %v315 = vunpack.c.l.b16 %v255
      %v316 = vunpack.c.l.b16 %v256
      %v317 = vunpack.c.l.b16 %v257
      %v318 = vunpack.c.l.b16 %v258
      %v319 = vunpack.c.l.b16 %v259
      %v320 = vpack.c.b16 %v305, %v304
      %v321 = vpack.c.b16 %v307, %v306
      %v322 = vpack.c.b16 %v309, %v308
      %v323 = vpack.c.b16 %v311, %v310
      %v324 = vpack.c.b16 %v313, %v312
      %v325 = vpack.c.b16 %v315, %v314
      %v326 = vpack.c.b16 %v317, %v316
      %v327 = vpack.c.b16 %v319, %v318
      %336 = vmatpush.bf16.msra.mxu0 %v327
      %337 = vmatpush.bf16.msra.mxu0 %v326
      %338 = vmatpush.bf16.msra.mxu0 %v325
      %339 = vmatpush.bf16.msra.mxu0 %v324
      %340 = vmatpush.bf16.msra.mxu0 %v323
      %341 = vmatpush.bf16.msra.mxu0 %v322
      %342 = vmatpush.bf16.msra.mxu0 %v321
      %343 = vmatpush.bf16.msra.mxu0 %v320
      %344 = vmatmul.bf16.gmra.mxu0 %v278
      %v345 = vpop.f32.mrf.mxu0
      %v346 = vadd.f32 0.0, %v345
      %v347 = vpop.f32.mrf.mxu0
      %v348 = vadd.f32 0.0, %v347
      %349 = vmatmul.bf16.gmra.mxu0 %v279
      %v350 = vpop.f32.mrf.mxu0
      %v351 = vadd.f32 0.0, %v350
      %v352 = vpop.f32.mrf.mxu0
      %v353 = vadd.f32 0.0, %v352
      %354 = vmatmul.bf16.gmra.mxu0 %v280
      %v355 = vpop.f32.mrf.mxu0
      %v356 = vadd.f32 0.0, %v355
      %v357 = vpop.f32.mrf.mxu0
      %v358 = vadd.f32 0.0, %v357
      %359 = vmatmul.bf16.gmra.mxu0 %v281
      %v360 = vpop.f32.mrf.mxu0
      %v361 = vadd.f32 0.0, %v360
      %v362 = vpop.f32.mrf.mxu0
      %v363 = vadd.f32 0.0, %v362
      %364 = vmatmul.bf16.gmra.mxu0 %v282
      %v365 = vpop.f32.mrf.mxu0
      %v366 = vadd.f32 0.0, %v365
      %v367 = vpop.f32.mrf.mxu0
      %368 = vdwg.mxu0
      %v378 = vunpack.c.l.b16 %v209
      %v379 = vunpack.c.l.b16 %v210
      %v380 = vunpack.c.l.b16 %v211
      %v381 = vunpack.c.l.b16 %v212
      %v382 = vunpack.c.l.b16 %v213
      %v383 = vunpack.c.l.b16 %v214
      %v384 = vunpack.c.l.b16 %v215
      %v385 = vunpack.c.l.b16 %v216
      %v386 = vunpack.c.l.b16 %v217
      %v387 = vpack.c.b16 %v379, %v378
      %v388 = vpack.c.b16 %v381, %v380
      %v389 = vpack.c.b16 %v383, %v382
      %v390 = vpack.c.b16 %v385, %v384
      %v391 = vpack.c.b16 %v386, %v386
      %v413 = vunpack.c.l.b16 %v218
      %v414 = vunpack.c.l.b16 %v219
      %v415 = vunpack.c.l.b16 %v220
      %v416 = vunpack.c.l.b16 %v221
      %v417 = vunpack.c.l.b16 %v222
      %v418 = vunpack.c.l.b16 %v223
      %v419 = vunpack.c.l.b16 %v224
      %v420 = vunpack.c.l.b16 %v225
      %v421 = vunpack.c.l.b16 %v226
      %v422 = vunpack.c.l.b16 %v227
      %v423 = vunpack.c.l.b16 %v228
      %v424 = vunpack.c.l.b16 %v229
      %v425 = vunpack.c.l.b16 %v230
      %v426 = vunpack.c.l.b16 %v231
      %v427 = vunpack.c.l.b16 %v232
      %v428 = vunpack.c.l.b16 %v233
      %v429 = vpack.c.b16 %v414, %v413
      %v430 = vpack.c.b16 %v416, %v415
      %v431 = vpack.c.b16 %v418, %v417
      %v432 = vpack.c.b16 %v420, %v419
      %v433 = vpack.c.b16 %v422, %v421
      %v434 = vpack.c.b16 %v424, %v423
      %v435 = vpack.c.b16 %v426, %v425
      %v436 = vpack.c.b16 %v428, %v427
      %445 = vmatpush.bf16.msra.mxu0 %v436
      %446 = vmatpush.bf16.msra.mxu0 %v435
      %447 = vmatpush.bf16.msra.mxu0 %v434
      %448 = vmatpush.bf16.msra.mxu0 %v433
      %449 = vmatpush.bf16.msra.mxu0 %v432
      %450 = vmatpush.bf16.msra.mxu0 %v431
      %451 = vmatpush.bf16.msra.mxu0 %v430
      %452 = vmatpush.bf16.msra.mxu0 %v429
      %453 = vmatmul.bf16.gmra.mxu0 %v387
      %v454 = vpop.f32.mrf.mxu0
      %v455 = vadd.f32 %v346, %v454
      %v456 = vpop.f32.mrf.mxu0
      %v457 = vadd.f32 %v348, %v456
      %458 = vmatmul.bf16.gmra.mxu0 %v388
      %v459 = vpop.f32.mrf.mxu0
      %v460 = vadd.f32 %v351, %v459
      %v461 = vpop.f32.mrf.mxu0
      %v462 = vadd.f32 %v353, %v461
      %463 = vmatmul.bf16.gmra.mxu0 %v389
      %v464 = vpop.f32.mrf.mxu0
      %v465 = vadd.f32 %v356, %v464
      %v466 = vpop.f32.mrf.mxu0
      %v467 = vadd.f32 %v358, %v466
      %468 = vmatmul.bf16.gmra.mxu0 %v390
      %v469 = vpop.f32.mrf.mxu0
      %v470 = vadd.f32 %v361, %v469
      %v471 = vpop.f32.mrf.mxu0
      %v472 = vadd.f32 %v363, %v471
      %473 = vmatmul.bf16.gmra.mxu0 %v391
      %v474 = vpop.f32.mrf.mxu0
      %v475 = vadd.f32 %v366, %v474
      %v476 = vpop.f32.mrf.mxu0
      %477 = vdwg.mxu0
      %v478 = vld [vmem:[%s199] sm:$0xf]
      %v479 = vld [vmem:[%s199 + $0x4] sm:$0xf]
      %v480 = vld [vmem:[%s199 + $0x8] sm:$0xf]
      %v481 = vld [vmem:[%s199 + $0xc] sm:$0xf]
      %v482 = vld [vmem:[%s199 + $0x10] sm:$0xf]
      %v483 = vld [vmem:[%s199 + $0x14] sm:$0xf]
      %v484 = vld [vmem:[%s199 + $0x18] sm:$0xf]
      %v485 = vld [vmem:[%s199 + $0x1c] sm:$0xf]
      %v486 = vld [vmem:[%s199 + $0x20] sm:$0xf]
      %v487 = vld [vmem:[%s199 + $0x24] sm:$0x1]
      %v488 = vld [vmem:[%s1 + $0x80] sm:$0xf]
      %v489 = vld [vmem:[%s1 + $0x84] sm:$0xf]
      %v490 = vld [vmem:[%s1 + $0x88] sm:$0xf]
      %v491 = vld [vmem:[%s1 + $0x8c] sm:$0xf]
      %v492 = vld [vmem:[%s1 + $0x90] sm:$0xf]
      %v493 = vld [vmem:[%s1 + $0x94] sm:$0xf]
      %v494 = vld [vmem:[%s1 + $0x98] sm:$0xf]
      %v495 = vld [vmem:[%s1 + $0x9c] sm:$0xf]
      %v496 = vld [vmem:[%s1 + $0xa0] sm:$0xf]
      %v497 = vld [vmem:[%s1 + $0xa4] sm:$0xf]
      %v498 = vld [vmem:[%s1 + $0xa8] sm:$0xf]
      %v499 = vld [vmem:[%s1 + $0xac] sm:$0xf]
      %v500 = vld [vmem:[%s1 + $0xb0] sm:$0xf]
      %v501 = vld [vmem:[%s1 + $0xb4] sm:$0xf]
      %v502 = vld [vmem:[%s1 + $0xb8] sm:$0xf]
      %v503 = vld [vmem:[%s1 + $0xbc] sm:$0xf]
      %v514 = vunpack.c.l.b16 %v478
      %v515 = vunpack.c.l.b16 %v479
      %v516 = vunpack.c.l.b16 %v480
      %v517 = vunpack.c.l.b16 %v481
      %v518 = vunpack.c.l.b16 %v482
      %v519 = vunpack.c.l.b16 %v483
      %v520 = vunpack.c.l.b16 %v484
      %v521 = vunpack.c.l.b16 %v485
      %v522 = vunpack.c.l.b16 %v486
      %v523 = vunpack.c.l.b16 %v487
      %v524 = vpack.c.b16 %v515, %v514
      %v525 = vpack.c.b16 %v517, %v516
      %v526 = vpack.c.b16 %v519, %v518
      %v527 = vpack.c.b16 %v521, %v520
      %v528 = vpack.c.b16 %v523, %v522
      %vm529 = vsmask.f32 7424
      %v531 = vshrl.u32 %v524, 16
      %v533 = vshll.u32 %v524, 16
      %v535 = vrot.slane %v533, 1
      %v536 = vor.u32 %v531, %v535
      %v538 = vshll.u32 %v525, 16
      %v540 = vrot.slane %v538, 1
      %v541 = vsel %vm529, %v536, %v540
      %v542 = vshrl.u32 %v525, 16
      %v544 = vor.u32 %v542, %v540
      %v546 = vshll.u32 %v526, 16
      %v548 = vrot.slane %v546, 1
      %v549 = vsel %vm529, %v544, %v548
      %v550 = vshrl.u32 %v526, 16
      %v552 = vor.u32 %v550, %v548
      %v554 = vshll.u32 %v527, 16
      %v556 = vrot.slane %v554, 1
      %v557 = vsel %vm529, %v552, %v556
      %v558 = vshrl.u32 %v527, 16
      %v560 = vor.u32 %v558, %v556
      %v562 = vshll.u32 %v528, 16
      %v564 = vrot.slane %v562, 1
      %v565 = vsel %vm529, %v560, %v564
      %v566 = vshrl.u32 %v528, 16
      %v568 = vor.u32 %v566, %v564
      %v590 = vunpack.c.l.b16 %v488
      %v591 = vunpack.c.l.b16 %v489
      %v592 = vunpack.c.l.b16 %v490
      %v593 = vunpack.c.l.b16 %v491
      %v594 = vunpack.c.l.b16 %v492
      %v595 = vunpack.c.l.b16 %v493
      %v596 = vunpack.c.l.b16 %v494
      %v597 = vunpack.c.l.b16 %v495
      %v598 = vunpack.c.l.b16 %v496
      %v599 = vunpack.c.l.b16 %v497
      %v600 = vunpack.c.l.b16 %v498
      %v601 = vunpack.c.l.b16 %v499
      %v602 = vunpack.c.l.b16 %v500
      %v603 = vunpack.c.l.b16 %v501
      %v604 = vunpack.c.l.b16 %v502
      %v605 = vunpack.c.l.b16 %v503
      %v606 = vpack.c.b16 %v591, %v590
      %v607 = vpack.c.b16 %v593, %v592
      %v608 = vpack.c.b16 %v595, %v594
      %v609 = vpack.c.b16 %v597, %v596
      %v610 = vpack.c.b16 %v599, %v598
      %v611 = vpack.c.b16 %v601, %v600
      %v612 = vpack.c.b16 %v603, %v602
      %v613 = vpack.c.b16 %v605, %v604
      %622 = vmatpush.bf16.msra.mxu0 %v613
      %623 = vmatpush.bf16.msra.mxu0 %v612
      %624 = vmatpush.bf16.msra.mxu0 %v611
      %625 = vmatpush.bf16.msra.mxu0 %v610
      %626 = vmatpush.bf16.msra.mxu0 %v609
      %627 = vmatpush.bf16.msra.mxu0 %v608
      %628 = vmatpush.bf16.msra.mxu0 %v607
      %629 = vmatpush.bf16.msra.mxu0 %v606
      %630 = vmatmul.bf16.gmra.mxu0 %v541
      %v631 = vpop.f32.mrf.mxu0
      %v632 = vadd.f32 0.0, %v631
      %v633 = vpop.f32.mrf.mxu0
      %v634 = vadd.f32 0.0, %v633
      %635 = vmatmul.bf16.gmra.mxu0 %v549
      %v636 = vpop.f32.mrf.mxu0
      %v637 = vadd.f32 0.0, %v636
      %v638 = vpop.f32.mrf.mxu0
      %v639 = vadd.f32 0.0, %v638
      %640 = vmatmul.bf16.gmra.mxu0 %v557
      %v641 = vpop.f32.mrf.mxu0
      %v642 = vadd.f32 0.0, %v641
      %v643 = vpop.f32.mrf.mxu0
      %v644 = vadd.f32 0.0, %v643
      %645 = vmatmul.bf16.gmra.mxu0 %v565
      %v646 = vpop.f32.mrf.mxu0
      %v647 = vadd.f32 0.0, %v646
      %v648 = vpop.f32.mrf.mxu0
      %v649 = vadd.f32 0.0, %v648
      %650 = vmatmul.bf16.gmra.mxu0 %v568
      %v651 = vpop.f32.mrf.mxu0
      %v652 = vadd.f32 0.0, %v651
      %v653 = vpop.f32.mrf.mxu0
      %654 = vdwg.mxu0
      %v655 = vadd.f32 %v455, %v632
      %v656 = vadd.f32 %v457, %v634
      %v657 = vadd.f32 %v460, %v637
      %v658 = vadd.f32 %v462, %v639
      %v659 = vadd.f32 %v465, %v642
      %v660 = vadd.f32 %v467, %v644
      %v661 = vadd.f32 %v470, %v647
      %v662 = vadd.f32 %v472, %v649
      %v663 = vadd.f32 %v475, %v652
      %s664 = scalar_lea.vmem %s199, 88
      %v665 = vld [vmem:[%s664] sm:$0xf]
      %v666 = vld [vmem:[%s664 + $0x4] sm:$0xf]
      %v667 = vld [vmem:[%s664 + $0x8] sm:$0xf]
      %v668 = vld [vmem:[%s664 + $0xc] sm:$0xf]
      %v669 = vld [vmem:[%s664 + $0x10] sm:$0xf]
      %v670 = vld [vmem:[%s664 + $0x14] sm:$0xf]
      %v671 = vld [vmem:[%s664 + $0x18] sm:$0xf]
      %v672 = vld [vmem:[%s664 + $0x1c] sm:$0xf]
      %v673 = vld [vmem:[%s664 + $0x20] sm:$0xf]
      %v674 = vld [vmem:[%s1 + $0xc0] sm:$0xf]
      %v675 = vld [vmem:[%s1 + $0xc4] sm:$0xf]
      %v676 = vld [vmem:[%s1 + $0xc8] sm:$0xf]
      %v677 = vld [vmem:[%s1 + $0xcc] sm:$0xf]
      %v678 = vld [vmem:[%s1 + $0xd0] sm:$0xf]
      %v679 = vld [vmem:[%s1 + $0xd4] sm:$0xf]
      %v680 = vld [vmem:[%s1 + $0xd8] sm:$0xf]
      %v681 = vld [vmem:[%s1 + $0xdc] sm:$0xf]
      %v682 = vld [vmem:[%s1 + $0xe0] sm:$0xf]
      %v683 = vld [vmem:[%s1 + $0xe4] sm:$0xf]
      %v684 = vld [vmem:[%s1 + $0xe8] sm:$0xf]
      %v685 = vld [vmem:[%s1 + $0xec] sm:$0xf]
      %v686 = vld [vmem:[%s1 + $0xf0] sm:$0xf]
      %v687 = vld [vmem:[%s1 + $0xf4] sm:$0xf]
      %v688 = vld [vmem:[%s1 + $0xf8] sm:$0xf]
      %v689 = vld [vmem:[%s1 + $0xfc] sm:$0xf]
      %v699 = vunpack.c.l.b16 %v665
      %v700 = vunpack.c.l.b16 %v666
      %v701 = vunpack.c.l.b16 %v667
      %v702 = vunpack.c.l.b16 %v668
      %v703 = vunpack.c.l.b16 %v669
      %v704 = vunpack.c.l.b16 %v670
      %v705 = vunpack.c.l.b16 %v671
      %v706 = vunpack.c.l.b16 %v672
      %v707 = vunpack.c.l.b16 %v673
      %v708 = vpack.c.b16 %v700, %v699
      %v709 = vpack.c.b16 %v702, %v701
      %v710 = vpack.c.b16 %v704, %v703
      %v711 = vpack.c.b16 %v706, %v705
      %v712 = vpack.c.b16 %v707, %v707
      %v734 = vunpack.c.l.b16 %v674
      %v735 = vunpack.c.l.b16 %v675
      %v736 = vunpack.c.l.b16 %v676
      %v737 = vunpack.c.l.b16 %v677
      %v738 = vunpack.c.l.b16 %v678
      %v739 = vunpack.c.l.b16 %v679
      %v740 = vunpack.c.l.b16 %v680
      %v741 = vunpack.c.l.b16 %v681
      %v742 = vunpack.c.l.b16 %v682
      %v743 = vunpack.c.l.b16 %v683
      %v744 = vunpack.c.l.b16 %v684
      %v745 = vunpack.c.l.b16 %v685
      %v746 = vunpack.c.l.b16 %v686
      %v747 = vunpack.c.l.b16 %v687
      %v748 = vunpack.c.l.b16 %v688
      %v749 = vunpack.c.l.b16 %v689
      %v750 = vpack.c.b16 %v735, %v734
      %v751 = vpack.c.b16 %v737, %v736
      %v752 = vpack.c.b16 %v739, %v738
      %v753 = vpack.c.b16 %v741, %v740
      %v754 = vpack.c.b16 %v743, %v742
      %v755 = vpack.c.b16 %v745, %v744
      %v756 = vpack.c.b16 %v747, %v746
      %v757 = vpack.c.b16 %v749, %v748
      %766 = vmatpush.bf16.msra.mxu0 %v757
      %767 = vmatpush.bf16.msra.mxu0 %v756
      %768 = vmatpush.bf16.msra.mxu0 %v755
      %769 = vmatpush.bf16.msra.mxu0 %v754
      %770 = vmatpush.bf16.msra.mxu0 %v753
      %771 = vmatpush.bf16.msra.mxu0 %v752
      %772 = vmatpush.bf16.msra.mxu0 %v751
      %773 = vmatpush.bf16.msra.mxu0 %v750
      %774 = vmatmul.bf16.gmra.mxu0 %v708
      %v775 = vpop.f32.mrf.mxu0
      %v776 = vadd.f32 0.0, %v775
      %v777 = vpop.f32.mrf.mxu0
      %v778 = vadd.f32 0.0, %v777
      %779 = vmatmul.bf16.gmra.mxu0 %v709
      %v780 = vpop.f32.mrf.mxu0
      %v781 = vadd.f32 0.0, %v780
      %v782 = vpop.f32.mrf.mxu0
      %v783 = vadd.f32 0.0, %v782
      %784 = vmatmul.bf16.gmra.mxu0 %v710
      %v785 = vpop.f32.mrf.mxu0
      %v786 = vadd.f32 0.0, %v785
      %v787 = vpop.f32.mrf.mxu0
      %v788 = vadd.f32 0.0, %v787
      %789 = vmatmul.bf16.gmra.mxu0 %v711
      %v790 = vpop.f32.mrf.mxu0
      %v791 = vadd.f32 0.0, %v790
      %v792 = vpop.f32.mrf.mxu0
      %v793 = vadd.f32 0.0, %v792
      %794 = vmatmul.bf16.gmra.mxu0 %v712
      %v795 = vpop.f32.mrf.mxu0
      %v796 = vadd.f32 0.0, %v795
      %v797 = vpop.f32.mrf.mxu0
      %798 = vdwg.mxu0
      %v799 = vadd.f32 %v655, %v776
      %v800 = vadd.f32 %v656, %v778
      %v801 = vadd.f32 %v657, %v781
      %v802 = vadd.f32 %v658, %v783
      %v803 = vadd.f32 %v659, %v786
      %v804 = vadd.f32 %v660, %v788
      %v805 = vadd.f32 %v661, %v791
      %v806 = vadd.f32 %v662, %v793
      %v807 = vadd.f32 %v663, %v796
      %s808 = scalar_lea.vmem %s199, 132
      %v809 = vld [vmem:[%s808] sm:$0xf]
      %v810 = vld [vmem:[%s808 + $0x4] sm:$0xf]
      %v811 = vld [vmem:[%s808 + $0x8] sm:$0xf]
      %v812 = vld [vmem:[%s808 + $0xc] sm:$0xf]
      %v813 = vld [vmem:[%s808 + $0x10] sm:$0xf]
      %v814 = vld [vmem:[%s808 + $0x14] sm:$0xf]
      %v815 = vld [vmem:[%s808 + $0x18] sm:$0xf]
      %v816 = vld [vmem:[%s808 + $0x1c] sm:$0xf]
      %v817 = vld [vmem:[%s808 + $0x20] sm:$0xf]
      %v818 = vld [vmem:[%s1 + $0x100] sm:$0xf]
      %v819 = vld [vmem:[%s1 + $0x104] sm:$0xf]
      %v820 = vld [vmem:[%s1 + $0x108] sm:$0xf]
      %v821 = vld [vmem:[%s1 + $0x10c] sm:$0xf]
      %v822 = vld [vmem:[%s1 + $0x110] sm:$0xf]
      %v823 = vld [vmem:[%s1 + $0x114] sm:$0xf]
      %v824 = vld [vmem:[%s1 + $0x118] sm:$0xf]
      %v825 = vld [vmem:[%s1 + $0x11c] sm:$0xf]
      %v826 = vld [vmem:[%s1 + $0x120] sm:$0xf]
      %v827 = vld [vmem:[%s1 + $0x124] sm:$0xf]
      %v828 = vld [vmem:[%s1 + $0x128] sm:$0xf]
      %v829 = vld [vmem:[%s1 + $0x12c] sm:$0xf]
      %v830 = vld [vmem:[%s1 + $0x130] sm:$0xf]
      %v831 = vld [vmem:[%s1 + $0x134] sm:$0xf]
      %v832 = vld [vmem:[%s1 + $0x138] sm:$0xf]
      %v833 = vld [vmem:[%s1 + $0x13c] sm:$0xf]
      %v843 = vunpack.c.l.b16 %v809
      %v844 = vunpack.c.l.b16 %v810
      %v845 = vunpack.c.l.b16 %v811
      %v846 = vunpack.c.l.b16 %v812
      %v847 = vunpack.c.l.b16 %v813
      %v848 = vunpack.c.l.b16 %v814
      %v849 = vunpack.c.l.b16 %v815
      %v850 = vunpack.c.l.b16 %v816
      %v851 = vunpack.c.l.b16 %v817
      %v852 = vpack.c.b16 %v844, %v843
      %v853 = vpack.c.b16 %v846, %v845
      %v854 = vpack.c.b16 %v848, %v847
      %v855 = vpack.c.b16 %v850, %v849
      %v856 = vpack.c.b16 %v851, %v851
      %v878 = vunpack.c.l.b16 %v818
      %v879 = vunpack.c.l.b16 %v819
      %v880 = vunpack.c.l.b16 %v820
      %v881 = vunpack.c.l.b16 %v821
      %v882 = vunpack.c.l.b16 %v822
      %v883 = vunpack.c.l.b16 %v823
      %v884 = vunpack.c.l.b16 %v824
      %v885 = vunpack.c.l.b16 %v825
      %v886 = vunpack.c.l.b16 %v826
      %v887 = vunpack.c.l.b16 %v827
      %v888 = vunpack.c.l.b16 %v828
      %v889 = vunpack.c.l.b16 %v829
      %v890 = vunpack.c.l.b16 %v830
      %v891 = vunpack.c.l.b16 %v831
      %v892 = vunpack.c.l.b16 %v832
      %v893 = vunpack.c.l.b16 %v833
      %v894 = vpack.c.b16 %v879, %v878
      %v895 = vpack.c.b16 %v881, %v880
      %v896 = vpack.c.b16 %v883, %v882
      %v897 = vpack.c.b16 %v885, %v884
      %v898 = vpack.c.b16 %v887, %v886
      %v899 = vpack.c.b16 %v889, %v888
      %v900 = vpack.c.b16 %v891, %v890
      %v901 = vpack.c.b16 %v893, %v892
      %910 = vmatpush.bf16.msra.mxu0 %v901
      %911 = vmatpush.bf16.msra.mxu0 %v900
      %912 = vmatpush.bf16.msra.mxu0 %v899
      %913 = vmatpush.bf16.msra.mxu0 %v898
      %914 = vmatpush.bf16.msra.mxu0 %v897
      %915 = vmatpush.bf16.msra.mxu0 %v896
      %916 = vmatpush.bf16.msra.mxu0 %v895
      %917 = vmatpush.bf16.msra.mxu0 %v894
      %918 = vmatmul.bf16.gmra.mxu0 %v852
      %v919 = vpop.f32.mrf.mxu0
      %v920 = vadd.f32 0.0, %v919
      %v921 = vpop.f32.mrf.mxu0
      %v922 = vadd.f32 0.0, %v921
      %923 = vmatmul.bf16.gmra.mxu0 %v853
      %v924 = vpop.f32.mrf.mxu0
      %v925 = vadd.f32 0.0, %v924
      %v926 = vpop.f32.mrf.mxu0
      %v927 = vadd.f32 0.0, %v926
      %928 = vmatmul.bf16.gmra.mxu0 %v854
      %v929 = vpop.f32.mrf.mxu0
      %v930 = vadd.f32 0.0, %v929
      %v931 = vpop.f32.mrf.mxu0
      %v932 = vadd.f32 0.0, %v931
      %933 = vmatmul.bf16.gmra.mxu0 %v855
      %v934 = vpop.f32.mrf.mxu0
      %v935 = vadd.f32 0.0, %v934
      %v936 = vpop.f32.mrf.mxu0
      %v937 = vadd.f32 0.0, %v936
      %938 = vmatmul.bf16.gmra.mxu0 %v856
      %v939 = vpop.f32.mrf.mxu0
      %v940 = vadd.f32 0.0, %v939
      %v941 = vpop.f32.mrf.mxu0
      %942 = vdwg.mxu0
      %v943 = vadd.f32 %v799, %v920
      %v944 = vadd.f32 %v800, %v922
      %v945 = vadd.f32 %v801, %v925
      %v946 = vadd.f32 %v802, %v927
      %v947 = vadd.f32 %v803, %v930
      %v948 = vadd.f32 %v804, %v932
      %v949 = vadd.f32 %v805, %v935
      %v950 = vadd.f32 %v806, %v937
      %v951 = vadd.f32 %v807, %v940
      %v952 = vld [vmem:[%s664] sm:$0xf]
      %v953 = vld [vmem:[%s664 + $0x4] sm:$0xf]
      %v954 = vld [vmem:[%s664 + $0x8] sm:$0xf]
      %v955 = vld [vmem:[%s664 + $0xc] sm:$0xf]
      %v956 = vld [vmem:[%s664 + $0x10] sm:$0xf]
      %v957 = vld [vmem:[%s664 + $0x14] sm:$0xf]
      %v958 = vld [vmem:[%s664 + $0x18] sm:$0xf]
      %v959 = vld [vmem:[%s664 + $0x1c] sm:$0xf]
      %v960 = vld [vmem:[%s664 + $0x20] sm:$0xf]
      %v961 = vld [vmem:[%s664 + $0x24] sm:$0x1]
      %v962 = vld [vmem:[%s1 + $0x140] sm:$0xf]
      %v963 = vld [vmem:[%s1 + $0x144] sm:$0xf]
      %v964 = vld [vmem:[%s1 + $0x148] sm:$0xf]
      %v965 = vld [vmem:[%s1 + $0x14c] sm:$0xf]
      %v966 = vld [vmem:[%s1 + $0x150] sm:$0xf]
      %v967 = vld [vmem:[%s1 + $0x154] sm:$0xf]
      %v968 = vld [vmem:[%s1 + $0x158] sm:$0xf]
      %v969 = vld [vmem:[%s1 + $0x15c] sm:$0xf]
      %v970 = vld [vmem:[%s1 + $0x160] sm:$0xf]
      %v971 = vld [vmem:[%s1 + $0x164] sm:$0xf]
      %v972 = vld [vmem:[%s1 + $0x168] sm:$0xf]
      %v973 = vld [vmem:[%s1 + $0x16c] sm:$0xf]
      %v974 = vld [vmem:[%s1 + $0x170] sm:$0xf]
      %v975 = vld [vmem:[%s1 + $0x174] sm:$0xf]
      %v976 = vld [vmem:[%s1 + $0x178] sm:$0xf]
      %v977 = vld [vmem:[%s1 + $0x17c] sm:$0xf]
      %v988 = vunpack.c.l.b16 %v952
      %v989 = vunpack.c.l.b16 %v953
      %v990 = vunpack.c.l.b16 %v954
      %v991 = vunpack.c.l.b16 %v955
      %v992 = vunpack.c.l.b16 %v956
      %v993 = vunpack.c.l.b16 %v957
      %v994 = vunpack.c.l.b16 %v958
      %v995 = vunpack.c.l.b16 %v959
      %v996 = vunpack.c.l.b16 %v960
      %v997 = vunpack.c.l.b16 %v961
      %v998 = vpack.c.b16 %v989, %v988
      %v999 = vpack.c.b16 %v991, %v990
      %v1000 = vpack.c.b16 %v993, %v992
      %v1001 = vpack.c.b16 %v995, %v994
      %v1002 = vpack.c.b16 %v997, %v996
      %v1004 = vshrl.u32 %v998, 16
      %v1006 = vshll.u32 %v998, 16
      %v1008 = vrot.slane %v1006, 1
      %v1009 = vor.u32 %v1004, %v1008
      %v1011 = vshll.u32 %v999, 16
      %v1013 = vrot.slane %v1011, 1
      %v1014 = vsel %vm529, %v1009, %v1013
      %v1015 = vshrl.u32 %v999, 16
      %v1017 = vor.u32 %v1015, %v1013
      %v1019 = vshll.u32 %v1000, 16
      %v1021 = vrot.slane %v1019, 1
      %v1022 = vsel %vm529, %v1017, %v1021
      %v1023 = vshrl.u32 %v1000, 16
      %v1025 = vor.u32 %v1023, %v1021
      %v1027 = vshll.u32 %v1001, 16
      %v1029 = vrot.slane %v1027, 1
      %v1030 = vsel %vm529, %v1025, %v1029
      %v1031 = vshrl.u32 %v1001, 16
      %v1033 = vor.u32 %v1031, %v1029
      %v1035 = vshll.u32 %v1002, 16
      %v1037 = vrot.slane %v1035, 1
      %v1038 = vsel %vm529, %v1033, %v1037
      %v1039 = vshrl.u32 %v1002, 16
      %v1041 = vor.u32 %v1039, %v1037
      %v1063 = vunpack.c.l.b16 %v962
      %v1064 = vunpack.c.l.b16 %v963
      %v1065 = vunpack.c.l.b16 %v964
      %v1066 = vunpack.c.l.b16 %v965
      %v1067 = vunpack.c.l.b16 %v966
      %v1068 = vunpack.c.l.b16 %v967
      %v1069 = vunpack.c.l.b16 %v968
      %v1070 = vunpack.c.l.b16 %v969
      %v1071 = vunpack.c.l.b16 %v970
      %v1072 = vunpack.c.l.b16 %v971
      %v1073 = vunpack.c.l.b16 %v972
      %v1074 = vunpack.c.l.b16 %v973
      %v1075 = vunpack.c.l.b16 %v974
      %v1076 = vunpack.c.l.b16 %v975
      %v1077 = vunpack.c.l.b16 %v976
      %v1078 = vunpack.c.l.b16 %v977
      %v1079 = vpack.c.b16 %v1064, %v1063
      %v1080 = vpack.c.b16 %v1066, %v1065
      %v1081 = vpack.c.b16 %v1068, %v1067
      %v1082 = vpack.c.b16 %v1070, %v1069
      %v1083 = vpack.c.b16 %v1072, %v1071
      %v1084 = vpack.c.b16 %v1074, %v1073
      %v1085 = vpack.c.b16 %v1076, %v1075
      %v1086 = vpack.c.b16 %v1078, %v1077
      %1095 = vmatpush.bf16.msra.mxu0 %v1086
      %1096 = vmatpush.bf16.msra.mxu0 %v1085
      %1097 = vmatpush.bf16.msra.mxu0 %v1084
      %1098 = vmatpush.bf16.msra.mxu0 %v1083
      %1099 = vmatpush.bf16.msra.mxu0 %v1082
      %1100 = vmatpush.bf16.msra.mxu0 %v1081
      %1101 = vmatpush.bf16.msra.mxu0 %v1080
      %1102 = vmatpush.bf16.msra.mxu0 %v1079
      %1103 = vmatmul.bf16.gmra.mxu0 %v1014
      %v1104 = vpop.f32.mrf.mxu0
      %v1105 = vadd.f32 0.0, %v1104
      %v1106 = vpop.f32.mrf.mxu0
      %v1107 = vadd.f32 0.0, %v1106
      %1108 = vmatmul.bf16.gmra.mxu0 %v1022
      %v1109 = vpop.f32.mrf.mxu0
      %v1110 = vadd.f32 0.0, %v1109
      %v1111 = vpop.f32.mrf.mxu0
      %v1112 = vadd.f32 0.0, %v1111
      %1113 = vmatmul.bf16.gmra.mxu0 %v1030
      %v1114 = vpop.f32.mrf.mxu0
      %v1115 = vadd.f32 0.0, %v1114
      %v1116 = vpop.f32.mrf.mxu0
      %v1117 = vadd.f32 0.0, %v1116
      %1118 = vmatmul.bf16.gmra.mxu0 %v1038
      %v1119 = vpop.f32.mrf.mxu0
      %v1120 = vadd.f32 0.0, %v1119
      %v1121 = vpop.f32.mrf.mxu0
      %v1122 = vadd.f32 0.0, %v1121
      %1123 = vmatmul.bf16.gmra.mxu0 %v1041
      %v1124 = vpop.f32.mrf.mxu0
      %v1125 = vadd.f32 0.0, %v1124
      %v1126 = vpop.f32.mrf.mxu0
      %1127 = vdwg.mxu0
      %v1128 = vadd.f32 %v943, %v1105
      %v1129 = vadd.f32 %v944, %v1107
      %v1130 = vadd.f32 %v945, %v1110
      %v1131 = vadd.f32 %v946, %v1112
      %v1132 = vadd.f32 %v947, %v1115
      %v1133 = vadd.f32 %v948, %v1117
      %v1134 = vadd.f32 %v949, %v1120
      %v1135 = vadd.f32 %v950, %v1122
      %v1136 = vadd.f32 %v951, %v1125
      %v1137 = vld [vmem:[%s199 + $0x4] sm:$0xf]
      %v1138 = vld [vmem:[%s199 + $0x8] sm:$0xf]
      %v1139 = vld [vmem:[%s199 + $0xc] sm:$0xf]
      %v1140 = vld [vmem:[%s199 + $0x10] sm:$0xf]
      %v1141 = vld [vmem:[%s199 + $0x14] sm:$0xf]
      %v1142 = vld [vmem:[%s199 + $0x18] sm:$0xf]
      %v1143 = vld [vmem:[%s199 + $0x1c] sm:$0xf]
      %v1144 = vld [vmem:[%s199 + $0x20] sm:$0xf]
      %v1145 = vld [vmem:[%s199 + $0x24] sm:$0xf]
      %v1146 = vld [vmem:[%s199 + $0x28] sm:$0x1]
      %v1147 = vld [vmem:[%s1 + $0x180] sm:$0xf]
      %v1148 = vld [vmem:[%s1 + $0x184] sm:$0xf]
      %v1149 = vld [vmem:[%s1 + $0x188] sm:$0xf]
      %v1150 = vld [vmem:[%s1 + $0x18c] sm:$0xf]
      %v1151 = vld [vmem:[%s1 + $0x190] sm:$0xf]
      %v1152 = vld [vmem:[%s1 + $0x194] sm:$0xf]
      %v1153 = vld [vmem:[%s1 + $0x198] sm:$0xf]
      %v1154 = vld [vmem:[%s1 + $0x19c] sm:$0xf]
      %v1155 = vld [vmem:[%s1 + $0x1a0] sm:$0xf]
      %v1156 = vld [vmem:[%s1 + $0x1a4] sm:$0xf]
      %v1157 = vld [vmem:[%s1 + $0x1a8] sm:$0xf]
      %v1158 = vld [vmem:[%s1 + $0x1ac] sm:$0xf]
      %v1159 = vld [vmem:[%s1 + $0x1b0] sm:$0xf]
      %v1160 = vld [vmem:[%s1 + $0x1b4] sm:$0xf]
      %v1161 = vld [vmem:[%s1 + $0x1b8] sm:$0xf]
      %v1162 = vld [vmem:[%s1 + $0x1bc] sm:$0xf]
      %v1173 = vunpack.c.l.b16 %v1137
      %v1174 = vunpack.c.l.b16 %v1138
      %v1175 = vunpack.c.l.b16 %v1139
      %v1176 = vunpack.c.l.b16 %v1140
      %v1177 = vunpack.c.l.b16 %v1141
      %v1178 = vunpack.c.l.b16 %v1142
      %v1179 = vunpack.c.l.b16 %v1143
      %v1180 = vunpack.c.l.b16 %v1144
      %v1181 = vunpack.c.l.b16 %v1145
      %v1182 = vunpack.c.l.b16 %v1146
      %v1183 = vpack.c.b16 %v1174, %v1173
      %v1184 = vpack.c.b16 %v1176, %v1175
      %v1185 = vpack.c.b16 %v1178, %v1177
      %v1186 = vpack.c.b16 %v1180, %v1179
      %v1187 = vpack.c.b16 %v1182, %v1181
      %v1189 = vshrl.u32 %v1183, 16
      %v1191 = vshll.u32 %v1183, 16
      %v1193 = vrot.slane %v1191, 1
      %v1194 = vor.u32 %v1189, %v1193
      %v1196 = vshll.u32 %v1184, 16
      %v1198 = vrot.slane %v1196, 1
      %v1199 = vsel %vm529, %v1194, %v1198
      %v1200 = vshrl.u32 %v1184, 16
      %v1202 = vor.u32 %v1200, %v1198
      %v1204 = vshll.u32 %v1185, 16
      %v1206 = vrot.slane %v1204, 1
      %v1207 = vsel %vm529, %v1202, %v1206
      %v1208 = vshrl.u32 %v1185, 16
      %v1210 = vor.u32 %v1208, %v1206
      %v1212 = vshll.u32 %v1186, 16
      %v1214 = vrot.slane %v1212, 1
      %v1215 = vsel %vm529, %v1210, %v1214
      %v1216 = vshrl.u32 %v1186, 16
      %v1218 = vor.u32 %v1216, %v1214
      %v1220 = vshll.u32 %v1187, 16
      %v1222 = vrot.slane %v1220, 1
      %v1223 = vsel %vm529, %v1218, %v1222
      %v1224 = vshrl.u32 %v1187, 16
      %v1226 = vor.u32 %v1224, %v1222
      %v1248 = vunpack.c.l.b16 %v1147
      %v1249 = vunpack.c.l.b16 %v1148
      %v1250 = vunpack.c.l.b16 %v1149
      %v1251 = vunpack.c.l.b16 %v1150
      %v1252 = vunpack.c.l.b16 %v1151
      %v1253 = vunpack.c.l.b16 %v1152
      %v1254 = vunpack.c.l.b16 %v1153
      %v1255 = vunpack.c.l.b16 %v1154
      %v1256 = vunpack.c.l.b16 %v1155
      %v1257 = vunpack.c.l.b16 %v1156
      %v1258 = vunpack.c.l.b16 %v1157
      %v1259 = vunpack.c.l.b16 %v1158
      %v1260 = vunpack.c.l.b16 %v1159
      %v1261 = vunpack.c.l.b16 %v1160
      %v1262 = vunpack.c.l.b16 %v1161
      %v1263 = vunpack.c.l.b16 %v1162
      %v1264 = vpack.c.b16 %v1249, %v1248
      %v1265 = vpack.c.b16 %v1251, %v1250
      %v1266 = vpack.c.b16 %v1253, %v1252
      %v1267 = vpack.c.b16 %v1255, %v1254
      %v1268 = vpack.c.b16 %v1257, %v1256
      %v1269 = vpack.c.b16 %v1259, %v1258
      %v1270 = vpack.c.b16 %v1261, %v1260
      %v1271 = vpack.c.b16 %v1263, %v1262
      %1280 = vmatpush.bf16.msra.mxu0 %v1271
      %1281 = vmatpush.bf16.msra.mxu0 %v1270
      %1282 = vmatpush.bf16.msra.mxu0 %v1269
      %1283 = vmatpush.bf16.msra.mxu0 %v1268
      %1284 = vmatpush.bf16.msra.mxu0 %v1267
      %1285 = vmatpush.bf16.msra.mxu0 %v1266
      %1286 = vmatpush.bf16.msra.mxu0 %v1265
      %1287 = vmatpush.bf16.msra.mxu0 %v1264
      %1288 = vmatmul.bf16.gmra.mxu0 %v1199
      %v1289 = vpop.f32.mrf.mxu0
      %v1290 = vadd.f32 0.0, %v1289
      %v1291 = vpop.f32.mrf.mxu0
      %v1292 = vadd.f32 0.0, %v1291
      %1293 = vmatmul.bf16.gmra.mxu0 %v1207
      %v1294 = vpop.f32.mrf.mxu0
      %v1295 = vadd.f32 0.0, %v1294
      %v1296 = vpop.f32.mrf.mxu0
      %v1297 = vadd.f32 0.0, %v1296
      %1298 = vmatmul.bf16.gmra.mxu0 %v1215
      %v1299 = vpop.f32.mrf.mxu0
      %v1300 = vadd.f32 0.0, %v1299
      %v1301 = vpop.f32.mrf.mxu0
      %v1302 = vadd.f32 0.0, %v1301
      %1303 = vmatmul.bf16.gmra.mxu0 %v1223
      %v1304 = vpop.f32.mrf.mxu0
      %v1305 = vadd.f32 0.0, %v1304
      %v1306 = vpop.f32.mrf.mxu0
      %v1307 = vadd.f32 0.0, %v1306
      %1308 = vmatmul.bf16.gmra.mxu0 %v1226
      %v1309 = vpop.f32.mrf.mxu0
      %v1310 = vadd.f32 0.0, %v1309
      %v1311 = vpop.f32.mrf.mxu0
      %1312 = vdwg.mxu0
      %v1313 = vadd.f32 %v1128, %v1290
      %v1314 = vadd.f32 %v1129, %v1292
      %v1315 = vadd.f32 %v1130, %v1295
      %v1316 = vadd.f32 %v1131, %v1297
      %v1317 = vadd.f32 %v1132, %v1300
      %v1318 = vadd.f32 %v1133, %v1302
      %v1319 = vadd.f32 %v1134, %v1305
      %v1320 = vadd.f32 %v1135, %v1307
      %v1321 = vadd.f32 %v1136, %v1310
      %v1322 = vld [vmem:[%s234 + $0x4] sm:$0xf]
      %v1323 = vld [vmem:[%s234 + $0x8] sm:$0xf]
      %v1324 = vld [vmem:[%s234 + $0xc] sm:$0xf]
      %v1325 = vld [vmem:[%s234 + $0x10] sm:$0xf]
      %v1326 = vld [vmem:[%s234 + $0x14] sm:$0xf]
      %v1327 = vld [vmem:[%s234 + $0x18] sm:$0xf]
      %v1328 = vld [vmem:[%s234 + $0x1c] sm:$0xf]
      %v1329 = vld [vmem:[%s234 + $0x20] sm:$0xf]
      %v1330 = vld [vmem:[%s234 + $0x24] sm:$0xf]
      %v1331 = vld [vmem:[%s234 + $0x28] sm:$0x1]
      %v1332 = vld [vmem:[%s1 + $0x1c0] sm:$0xf]
      %v1333 = vld [vmem:[%s1 + $0x1c4] sm:$0xf]
      %v1334 = vld [vmem:[%s1 + $0x1c8] sm:$0xf]
      %v1335 = vld [vmem:[%s1 + $0x1cc] sm:$0xf]
      %v1336 = vld [vmem:[%s1 + $0x1d0] sm:$0xf]
      %v1337 = vld [vmem:[%s1 + $0x1d4] sm:$0xf]
      %v1338 = vld [vmem:[%s1 + $0x1d8] sm:$0xf]
      %v1339 = vld [vmem:[%s1 + $0x1dc] sm:$0xf]
      %v1340 = vld [vmem:[%s1 + $0x1e0] sm:$0xf]
      %v1341 = vld [vmem:[%s1 + $0x1e4] sm:$0xf]
      %v1342 = vld [vmem:[%s1 + $0x1e8] sm:$0xf]
      %v1343 = vld [vmem:[%s1 + $0x1ec] sm:$0xf]
      %v1344 = vld [vmem:[%s1 + $0x1f0] sm:$0xf]
      %v1345 = vld [vmem:[%s1 + $0x1f4] sm:$0xf]
      %v1346 = vld [vmem:[%s1 + $0x1f8] sm:$0xf]
      %v1347 = vld [vmem:[%s1 + $0x1fc] sm:$0xf]
      %v1358 = vunpack.c.l.b16 %v1322
      %v1359 = vunpack.c.l.b16 %v1323
      %v1360 = vunpack.c.l.b16 %v1324
      %v1361 = vunpack.c.l.b16 %v1325
      %v1362 = vunpack.c.l.b16 %v1326
      %v1363 = vunpack.c.l.b16 %v1327
      %v1364 = vunpack.c.l.b16 %v1328
      %v1365 = vunpack.c.l.b16 %v1329
      %v1366 = vunpack.c.l.b16 %v1330
      %v1367 = vunpack.c.l.b16 %v1331
      %v1368 = vpack.c.b16 %v1359, %v1358
      %v1369 = vpack.c.b16 %v1361, %v1360
      %v1370 = vpack.c.b16 %v1363, %v1362
      %v1371 = vpack.c.b16 %v1365, %v1364
      %v1372 = vpack.c.b16 %v1367, %v1366
      %v1374 = vshrl.u32 %v1368, 16
      %v1376 = vshll.u32 %v1368, 16
      %v1378 = vrot.slane %v1376, 1
      %v1379 = vor.u32 %v1374, %v1378
      %v1381 = vshll.u32 %v1369, 16
      %v1383 = vrot.slane %v1381, 1
      %v1384 = vsel %vm529, %v1379, %v1383
      %v1385 = vshrl.u32 %v1369, 16
      %v1387 = vor.u32 %v1385, %v1383
      %v1389 = vshll.u32 %v1370, 16
      %v1391 = vrot.slane %v1389, 1
      %v1392 = vsel %vm529, %v1387, %v1391
      %v1393 = vshrl.u32 %v1370, 16
      %v1395 = vor.u32 %v1393, %v1391
      %v1397 = vshll.u32 %v1371, 16
      %v1399 = vrot.slane %v1397, 1
      %v1400 = vsel %vm529, %v1395, %v1399
      %v1401 = vshrl.u32 %v1371, 16
      %v1403 = vor.u32 %v1401, %v1399
      %v1405 = vshll.u32 %v1372, 16
      %v1407 = vrot.slane %v1405, 1
      %v1408 = vsel %vm529, %v1403, %v1407
      %v1409 = vshrl.u32 %v1372, 16
      %v1411 = vor.u32 %v1409, %v1407
      %v1433 = vunpack.c.l.b16 %v1332
      %v1434 = vunpack.c.l.b16 %v1333
      %v1435 = vunpack.c.l.b16 %v1334
      %v1436 = vunpack.c.l.b16 %v1335
      %v1437 = vunpack.c.l.b16 %v1336
      %v1438 = vunpack.c.l.b16 %v1337
      %v1439 = vunpack.c.l.b16 %v1338
      %v1440 = vunpack.c.l.b16 %v1339
      %v1441 = vunpack.c.l.b16 %v1340
      %v1442 = vunpack.c.l.b16 %v1341
      %v1443 = vunpack.c.l.b16 %v1342
      %v1444 = vunpack.c.l.b16 %v1343
      %v1445 = vunpack.c.l.b16 %v1344
      %v1446 = vunpack.c.l.b16 %v1345
      %v1447 = vunpack.c.l.b16 %v1346
      %v1448 = vunpack.c.l.b16 %v1347
      %v1449 = vpack.c.b16 %v1434, %v1433
      %v1450 = vpack.c.b16 %v1436, %v1435
      %v1451 = vpack.c.b16 %v1438, %v1437
      %v1452 = vpack.c.b16 %v1440, %v1439
      %v1453 = vpack.c.b16 %v1442, %v1441
      %v1454 = vpack.c.b16 %v1444, %v1443
      %v1455 = vpack.c.b16 %v1446, %v1445
      %v1456 = vpack.c.b16 %v1448, %v1447
      %1465 = vmatpush.bf16.msra.mxu0 %v1456
      %1466 = vmatpush.bf16.msra.mxu0 %v1455
      %1467 = vmatpush.bf16.msra.mxu0 %v1454
      %1468 = vmatpush.bf16.msra.mxu0 %v1453
      %1469 = vmatpush.bf16.msra.mxu0 %v1452
      %1470 = vmatpush.bf16.msra.mxu0 %v1451
      %1471 = vmatpush.bf16.msra.mxu0 %v1450
      %1472 = vmatpush.bf16.msra.mxu0 %v1449
      %1473 = vmatmul.bf16.gmra.mxu0 %v1384
      %v1474 = vpop.f32.mrf.mxu0
      %v1475 = vadd.f32 0.0, %v1474
      %v1476 = vpop.f32.mrf.mxu0
      %v1477 = vadd.f32 0.0, %v1476
      %1478 = vmatmul.bf16.gmra.mxu0 %v1392
      %v1479 = vpop.f32.mrf.mxu0
      %v1480 = vadd.f32 0.0, %v1479
      %v1481 = vpop.f32.mrf.mxu0
      %v1482 = vadd.f32 0.0, %v1481
      %1483 = vmatmul.bf16.gmra.mxu0 %v1400
      %v1484 = vpop.f32.mrf.mxu0
      %v1485 = vadd.f32 0.0, %v1484
      %v1486 = vpop.f32.mrf.mxu0
      %v1487 = vadd.f32 0.0, %v1486
      %1488 = vmatmul.bf16.gmra.mxu0 %v1408
      %v1489 = vpop.f32.mrf.mxu0
      %v1490 = vadd.f32 0.0, %v1489
      %v1491 = vpop.f32.mrf.mxu0
      %v1492 = vadd.f32 0.0, %v1491
      %1493 = vmatmul.bf16.gmra.mxu0 %v1411
      %v1494 = vpop.f32.mrf.mxu0
      %v1495 = vadd.f32 0.0, %v1494
      %v1496 = vpop.f32.mrf.mxu0
      %1497 = vdwg.mxu0
      %v1498 = vadd.f32 %v1313, %v1475
      %v1499 = vadd.f32 %v1314, %v1477
      %v1500 = vadd.f32 %v1315, %v1480
      %v1501 = vadd.f32 %v1316, %v1482
      %v1502 = vadd.f32 %v1317, %v1485
      %v1503 = vadd.f32 %v1318, %v1487
      %v1504 = vadd.f32 %v1319, %v1490
      %v1505 = vadd.f32 %v1320, %v1492
      %v1506 = vadd.f32 %v1321, %v1495
      %v1507 = vld [vmem:[%s199 + $0x4] sm:$0xe]
      %v1508 = vld [vmem:[%s1 + $0x200] sm:$0xf]
      %v1509 = vld [vmem:[%s1 + $0x204] sm:$0xf]
      %v1510 = vld [vmem:[%s1 + $0x208] sm:$0xf]
      %v1511 = vld [vmem:[%s1 + $0x20c] sm:$0xf]
      %v1512 = vld [vmem:[%s1 + $0x210] sm:$0xf]
      %v1513 = vld [vmem:[%s1 + $0x214] sm:$0xf]
      %v1514 = vld [vmem:[%s1 + $0x218] sm:$0xf]
      %v1515 = vld [vmem:[%s1 + $0x21c] sm:$0xf]
      %v1516 = vld [vmem:[%s1 + $0x220] sm:$0xf]
      %v1517 = vld [vmem:[%s1 + $0x224] sm:$0xf]
      %v1518 = vld [vmem:[%s1 + $0x228] sm:$0xf]
      %v1519 = vld [vmem:[%s1 + $0x22c] sm:$0xf]
      %v1520 = vld [vmem:[%s1 + $0x230] sm:$0xf]
      %v1521 = vld [vmem:[%s1 + $0x234] sm:$0xf]
      %v1522 = vld [vmem:[%s1 + $0x238] sm:$0xf]
      %v1523 = vld [vmem:[%s1 + $0x23c] sm:$0xf]
      %v1525 = vunpack.c.l.b16 %v1507
      %v1526 = vpack.c.b16 %v1174, %v1525
      %vm1527 = vcmask 1046528
      %v1528 = vrot.slane %v1526, 1
      %v1529 = vrot.slane %v1184, 1
      %v1530 = vsel %vm1527, %v1528, %v1529
      %v1531 = vrot.slane %v1185, 1
      %v1532 = vsel %vm1527, %v1529, %v1531
      %v1533 = vrot.slane %v1186, 1
      %v1534 = vsel %vm1527, %v1531, %v1533
      %v1535 = vrot.slane %v1187, 1
      %v1536 = vsel %vm1527, %v1533, %v1535
      %v1558 = vunpack.c.l.b16 %v1508
      %v1559 = vunpack.c.l.b16 %v1509
      %v1560 = vunpack.c.l.b16 %v1510
      %v1561 = vunpack.c.l.b16 %v1511
      %v1562 = vunpack.c.l.b16 %v1512
      %v1563 = vunpack.c.l.b16 %v1513
      %v1564 = vunpack.c.l.b16 %v1514
      %v1565 = vunpack.c.l.b16 %v1515
      %v1566 = vunpack.c.l.b16 %v1516
      %v1567 = vunpack.c.l.b16 %v1517
      %v1568 = vunpack.c.l.b16 %v1518
      %v1569 = vunpack.c.l.b16 %v1519
      %v1570 = vunpack.c.l.b16 %v1520
      %v1571 = vunpack.c.l.b16 %v1521
      %v1572 = vunpack.c.l.b16 %v1522
      %v1573 = vunpack.c.l.b16 %v1523
      %v1574 = vpack.c.b16 %v1559, %v1558
      %v1575 = vpack.c.b16 %v1561, %v1560
      %v1576 = vpack.c.b16 %v1563, %v1562
      %v1577 = vpack.c.b16 %v1565, %v1564
      %v1578 = vpack.c.b16 %v1567, %v1566
      %v1579 = vpack.c.b16 %v1569, %v1568
      %v1580 = vpack.c.b16 %v1571, %v1570
      %v1581 = vpack.c.b16 %v1573, %v1572
      %1590 = vmatpush.bf16.msra.mxu0 %v1581
      %1591 = vmatpush.bf16.msra.mxu0 %v1580
      %1592 = vmatpush.bf16.msra.mxu0 %v1579
      %1593 = vmatpush.bf16.msra.mxu0 %v1578
      %1594 = vmatpush.bf16.msra.mxu0 %v1577
      %1595 = vmatpush.bf16.msra.mxu0 %v1576
      %1596 = vmatpush.bf16.msra.mxu0 %v1575
      %1597 = vmatpush.bf16.msra.mxu0 %v1574
      %1598 = vmatmul.bf16.gmra.mxu0 %v1530
      %v1599 = vpop.f32.mrf.mxu0
      %v1600 = vadd.f32 0.0, %v1599
      %v1601 = vpop.f32.mrf.mxu0
      %v1602 = vadd.f32 0.0, %v1601
      %1603 = vmatmul.bf16.gmra.mxu0 %v1532
      %v1604 = vpop.f32.mrf.mxu0
      %v1605 = vadd.f32 0.0, %v1604
      %v1606 = vpop.f32.mrf.mxu0
      %v1607 = vadd.f32 0.0, %v1606
      %1608 = vmatmul.bf16.gmra.mxu0 %v1534
      %v1609 = vpop.f32.mrf.mxu0
      %v1610 = vadd.f32 0.0, %v1609
      %v1611 = vpop.f32.mrf.mxu0
      %v1612 = vadd.f32 0.0, %v1611
      %1613 = vmatmul.bf16.gmra.mxu0 %v1536
      %v1614 = vpop.f32.mrf.mxu0
      %v1615 = vadd.f32 0.0, %v1614
      %v1616 = vpop.f32.mrf.mxu0
      %v1617 = vadd.f32 0.0, %v1616
      %1618 = vmatmul.bf16.gmra.mxu0 %v1535
      %v1619 = vpop.f32.mrf.mxu0
      %v1620 = vadd.f32 0.0, %v1619
      %v1621 = vpop.f32.mrf.mxu0
      %1622 = vdwg.mxu0
      %v1623 = vadd.f32 %v1498, %v1600
      %v1624 = vadd.f32 %v1499, %v1602
      %v1625 = vadd.f32 %v1500, %v1605
      %v1626 = vadd.f32 %v1501, %v1607
      %v1627 = vadd.f32 %v1502, %v1610
      %v1628 = vadd.f32 %v1503, %v1612
      %v1629 = vadd.f32 %v1504, %v1615
      %v1630 = vadd.f32 %v1505, %v1617
      %v1631 = vadd.f32 %v1506, %v1620
      %v1632 = vld [vmem:[%s2] sm:$0xff]
      %v1633 = vld [vmem:[%s2 + $0x8] sm:$0xff]
      %v1634 = vld [vmem:[%s2 + $0x10] sm:$0xff]
      %v1635 = vld [vmem:[%s2 + $0x18] sm:$0xff]
      %v1636 = vld [vmem:[%s2 + $0x20] sm:$0xff]
      %v1637 = vld [vmem:[%s2 + $0x28] sm:$0xff]
      %v1638 = vld [vmem:[%s2 + $0x30] sm:$0xff]
      %v1639 = vld [vmem:[%s2 + $0x38] sm:$0xff]
      %v1640 = vld [vmem:[%s2 + $0x40] sm:$0xff]
      %1642 = vset.pattern.permute.xlu0 0
      %1643 = vperm.xlu0 %1642, %v1632
      %v1644 = vpop.permute.xlu0 %1643
      %1647 = vset.pattern.permute.xlu0 0
      %1648 = vperm.xlu0 %1647, %v1633
      %v1649 = vpop.permute.xlu0 %1648
      %1652 = vset.pattern.permute.xlu0 0
      %1653 = vperm.xlu0 %1652, %v1634
      %v1654 = vpop.permute.xlu0 %1653
      %1657 = vset.pattern.permute.xlu0 0
      %1658 = vperm.xlu0 %1657, %v1635
      %v1659 = vpop.permute.xlu0 %1658
      %1662 = vset.pattern.permute.xlu0 0
      %1663 = vperm.xlu0 %1662, %v1636
      %v1664 = vpop.permute.xlu0 %1663
      %1667 = vset.pattern.permute.xlu0 0
      %1668 = vperm.xlu0 %1667, %v1637
      %v1669 = vpop.permute.xlu0 %1668
      %1672 = vset.pattern.permute.xlu0 0
      %1673 = vperm.xlu0 %1672, %v1638
      %v1674 = vpop.permute.xlu0 %1673
      %1677 = vset.pattern.permute.xlu0 0
      %1678 = vperm.xlu0 %1677, %v1639
      %v1679 = vpop.permute.xlu0 %1678
      %1682 = vset.pattern.permute.xlu0 0
      %1683 = vperm.xlu0 %1682, %v1640
      %v1684 = vpop.permute.xlu0 %1683
      %v1686 = vmul.f32 %v1623, %v1644
      %v1687 = vmul.f32 %v1624, %v1649
      %v1688 = vmul.f32 %v1625, %v1654
      %v1689 = vmul.f32 %v1626, %v1659
      %v1690 = vmul.f32 %v1627, %v1664
      %v1691 = vmul.f32 %v1628, %v1669
      %v1692 = vmul.f32 %v1629, %v1674
      %v1693 = vmul.f32 %v1630, %v1679
      %v1694 = vmul.f32 %v1631, %v1684
      %v1695 = vpack.c.bf16 %v1686, %v1686
      %v1696 = vpack.c.bf16 %v1687, %v1687
      %v1697 = vpack.c.bf16 %v1688, %v1688
      %v1698 = vpack.c.bf16 %v1689, %v1689
      %v1699 = vpack.c.bf16 %v1690, %v1690
      %v1700 = vpack.c.bf16 %v1691, %v1691
      %v1701 = vpack.c.bf16 %v1692, %v1692
      %v1702 = vpack.c.bf16 %v1693, %v1693
      %v1703 = vpack.c.bf16 %v1694, %v1694
      %1704 = vst [vmem:[%s204] sm:$0xf] %v1695
      %1705 = vst [vmem:[%s204 + $0x4] sm:$0xf] %v1696
      %1706 = vst [vmem:[%s204 + $0x8] sm:$0xf] %v1697
      %1707 = vst [vmem:[%s204 + $0xc] sm:$0xf] %v1698
      %1708 = vst [vmem:[%s204 + $0x10] sm:$0xf] %v1699
      %1709 = vst [vmem:[%s204 + $0x14] sm:$0xf] %v1700
      %1710 = vst [vmem:[%s204 + $0x18] sm:$0xf] %v1701
      %1711 = vst [vmem:[%s204 + $0x1c] sm:$0xf] %v1702
      %1712 = vst [vmem:[%s204 + $0x20] sm:$0xf] %v1703
      %v1713 = vadd.f32 %v1686, %v1687
      %v1714 = vadd.f32 %v1713, %v1688
      %v1715 = vadd.f32 %v1714, %v1689
      %v1716 = vadd.f32 %v1715, %v1690
      %v1717 = vadd.f32 %v1716, %v1691
      %v1718 = vadd.f32 %v1717, %v1692
      %v1719 = vadd.f32 %v1718, %v1693
      %v1720 = vadd.f32 %v1719, %v1694
      %v1721 = vrot.slane %v1720, 4
      %v1722 = vadd.f32 %v1720, %v1721
      %v1723 = vrot.slane %v1722, 2
      %v1724 = vadd.f32 %v1722, %v1723
      %v1725 = vrot.slane %v1724, 1
      %v1726 = vadd.f32 %v1724, %v1725
      %v1727 = vmul.f32 %v1686, %v1686
      %v1728 = vmul.f32 %v1687, %v1687
      %v1729 = vmul.f32 %v1688, %v1688
      %v1730 = vmul.f32 %v1689, %v1689
      %v1731 = vmul.f32 %v1690, %v1690
      %v1732 = vmul.f32 %v1691, %v1691
      %v1733 = vmul.f32 %v1692, %v1692
      %v1734 = vmul.f32 %v1693, %v1693
      %v1735 = vmul.f32 %v1694, %v1694
      %v1736 = vadd.f32 %v1727, %v1728
      %v1737 = vadd.f32 %v1736, %v1729
      %v1738 = vadd.f32 %v1737, %v1730
      %v1739 = vadd.f32 %v1738, %v1731
      %v1740 = vadd.f32 %v1739, %v1732
      %v1741 = vadd.f32 %v1740, %v1733
      %v1742 = vadd.f32 %v1741, %v1734
      %v1743 = vadd.f32 %v1742, %v1735
      %v1744 = vrot.slane %v1743, 4
      %v1745 = vadd.f32 %v1743, %v1744
      %v1746 = vrot.slane %v1745, 2
      %v1747 = vadd.f32 %v1745, %v1746
      %v1748 = vrot.slane %v1747, 1
      %v1749 = vadd.f32 %v1747, %v1748
      %vm1750 = vcmask 1040384
      %v1751 = vsel %vm1750, %v1726, %v1749
      %v1752 = vadd.f32 %v1751, 0.0
      %1753 = vst [vmem:[%s208] sm:$0x3] %v1752
      %p1754 = scmp.lt.s32.totalorder %s16, 1
      %s1755 = scalar_select %p1754, %s16, 1
      %s1756 = smul.addr %s1755, 9
      %s1757 = smul.addr %s1756, 4
      %s1758 = scalar_lea.vmem %s3, %s1757
      %p1759 = scmp.lt.s32.totalorder %s16, 1
      %s1760 = scalar_select %p1759, %s16, 1
      %s1761 = smul.addr %s1760, 2
      %s1762 = scalar_lea.vmem %s4, %s1761
      // Predicated region
      $region33: #{basic_block_forward.3} parent=31 // pred_check
        %p1763 = pneg %p102
      $region34: #{basic_block_forward.3} parent=31 // pred_check_branch
        %1765 = sbr.rel (%p1763) target = $region36
      $region35: #{basic_block_forward.3} parent=31 // pred_region
        _
      $region36: #{basic_block_forward.3} parent=31 // pred_fallthru
        _
      // Predicated region
      $region37: #{basic_block_forward.3} parent=31 // pred_check
        %p1766 = pneg %p128
      $region38: #{basic_block_forward.3} parent=31 // pred_check_branch
        %1768 = sbr.rel (%p1766) target = $region40
      $region39: #{basic_block_forward.3} parent=31 // pred_region
        _
      $region40: #{basic_block_forward.3} parent=31 // pred_fallthru
        _
    $region32: #{basic_block_forward.3} parent=5 // pred_fallthru
      _
    %p1769 = scmp.le.s32.totalorder 2, %s11
    // Predicated region
    $region41: #{basic_block_forward.3} parent=5 // pred_check
      %p1770 = pneg %p1769
    $region42: #{basic_block_forward.3} parent=5 // pred_check_branch
      %1772 = sbr.rel (%p1770) target = $region44
    $region43: #{basic_block_forward.3} parent=5 // pred_region
      %s1773 = ssub.s32 %s11, 2
      // Predicated region
      $region45: #{basic_block_forward.3} parent=43 // pred_check
        %p1774 = pneg %p108
      $region46: #{basic_block_forward.3} parent=43 // pred_check_branch
        %1776 = sbr.rel (%p1774) target = $region48
      $region47: #{basic_block_forward.3} parent=43 // pred_region
        %p1777 = scmp.lt.s32.totalorder %s17, 1
        %s1778 = scalar_select %p1777, %s17, 1
        %s1779 = smul.addr %s1778, 9
        %s1780 = smul.addr %s1779, 4
        %s1781 = scalar_lea.vmem %s3, %s1780
      $region48: #{basic_block_forward.3} parent=43 // pred_fallthru
        _
      // Predicated region
      $region49: #{basic_block_forward.3} parent=43 // pred_check
        %p1782 = pneg %p134
      $region50: #{basic_block_forward.3} parent=43 // pred_check_branch
        %1784 = sbr.rel (%p1782) target = $region52
      $region51: #{basic_block_forward.3} parent=43 // pred_region
        %p1785 = scmp.lt.s32.totalorder %s17, 1
        %s1786 = scalar_select %p1785, %s17, 1
        %s1787 = smul.addr %s1786, 2
        %s1788 = scalar_lea.vmem %s4, %s1787
      $region52: #{basic_block_forward.3} parent=43 // pred_fallthru
        _
    $region44: #{basic_block_forward.3} parent=5 // pred_fallthru
      _
  $region6: #{basic_block_forward.3} parent=0 // loop_footer
    %s15 = sadd.s32 1, %s11
  $region7: #{basic_block_forward.3} parent=0 // loop_footer_branch
    %10 = sbr.rel target = $region3
  $region8: #{basic_block_forward.3} parent=0 // loop_exit
    _

// kernel: basic_block_forward.5
$region0: #{basic_block_forward.5}
  #allocation0 [shape = 'u32[]', space=smem, size = 0x4, offset = 0x4, fixed_abs, tag = 'smem constant byte address 0x4 - core index']
  #allocation1 [shape = 'u32[72,128]{1,0:T(1,128)}', space=vmem, size = 0x9000, scoped, tag = 'internal scratch']
  %s0 = inlined_call_operand.vmem [shape: bf16[144,128], index: 0, kind: input, shape index: {}]
  %s1 = inlined_call_operand.vmem [shape: bf16[144,128], index: 1, kind: input, shape index: {}]
  %s2 = inlined_call_operand.vmem [shape: f32[2,128], index: 2, kind: input, shape index: {}]
  %s3 = inlined_call_operand.vmem [shape: f32[2,128], index: 3, kind: input, shape index: {}]
  %s4 = inlined_call_operand.vmem [shape: bf16[144,128], index: 4, kind: output, shape index: {}]
  %s5 = sld [smem:[#allocation0]]
  $region26: #{basic_block_forward.5} parent=0
    _
  %s7 = ssub.s32 1, %s5
  %s8 = scalar_select 0, %s7, %s5
  // Predicated region
  $region2: #{basic_block_forward.5} parent=0 // pred_check
    _
  $region3: #{basic_block_forward.5} parent=0 // pred_check_branch
    %10 = sbr.rel (0) target = $region5
  $region4: #{basic_block_forward.5} parent=0 // pred_region
    _
  $region5: #{basic_block_forward.5} parent=0 // pred_fallthru
    _
  // Predicated region
  $region6: #{basic_block_forward.5} parent=0 // pred_check
    _
  $region7: #{basic_block_forward.5} parent=0 // pred_check_branch
    %12 = sbr.rel (0) target = $region9
  $region8: #{basic_block_forward.5} parent=0 // pred_region
    _
  $region9: #{basic_block_forward.5} parent=0 // pred_fallthru
    _
  // Predicated region
  $region10: #{basic_block_forward.5} parent=0 // pred_check
    _
  $region11: #{basic_block_forward.5} parent=0 // pred_check_branch
    %14 = sbr.rel (0) target = $region13
  $region12: #{basic_block_forward.5} parent=0 // pred_region
    _
  $region13: #{basic_block_forward.5} parent=0 // pred_fallthru
    _
  // Predicated region
  $region14: #{basic_block_forward.5} parent=0 // pred_check
    _
  $region15: #{basic_block_forward.5} parent=0 // pred_check_branch
    %16 = sbr.rel (0) target = $region17
  $region16: #{basic_block_forward.5} parent=0 // pred_region
    _
  $region17: #{basic_block_forward.5} parent=0 // pred_fallthru
    _
  %v17 = vld [vmem:[%s0] sm:$0xf]
  %v18 = vld [vmem:[%s0 + $0x4] sm:$0xf]
  %v19 = vld [vmem:[%s0 + $0x8] sm:$0xf]
  %v20 = vld [vmem:[%s0 + $0xc] sm:$0xf]
  %v21 = vld [vmem:[%s0 + $0x10] sm:$0xf]
  %v22 = vld [vmem:[%s0 + $0x14] sm:$0xf]
  %v23 = vld [vmem:[%s0 + $0x18] sm:$0xf]
  %v24 = vld [vmem:[%s0 + $0x1c] sm:$0xf]
  %v25 = vld [vmem:[%s0 + $0x20] sm:$0xf]
  %v26 = vld [vmem:[%s0 + $0x24] sm:$0xf]
  %v27 = vld [vmem:[%s0 + $0x28] sm:$0xf]
  %v28 = vld [vmem:[%s0 + $0x2c] sm:$0xf]
  %v29 = vld [vmem:[%s0 + $0x30] sm:$0xf]
  %v30 = vld [vmem:[%s0 + $0x34] sm:$0xf]
  %v31 = vld [vmem:[%s0 + $0x38] sm:$0xf]
  %v32 = vld [vmem:[%s0 + $0x3c] sm:$0xf]
  %v33 = vld [vmem:[%s0 + $0x40] sm:$0xf]
  %v34 = vld [vmem:[%s0 + $0x44] sm:$0xf]
  %v35 = vunpack.c.l.bf16 %v17
  %v36 = vunpack.c.l.bf16 %v18
  %v37 = vunpack.c.l.bf16 %v19
  %v38 = vunpack.c.l.bf16 %v20
  %v39 = vunpack.c.l.bf16 %v21
  %v40 = vunpack.c.l.bf16 %v22
  %v41 = vunpack.c.l.bf16 %v23
  %v42 = vunpack.c.l.bf16 %v24
  %v43 = vunpack.c.l.bf16 %v25
  %v44 = vunpack.c.l.bf16 %v26
  %v45 = vunpack.c.l.bf16 %v27
  %v46 = vunpack.c.l.bf16 %v28
  %v47 = vunpack.c.l.bf16 %v29
  %v48 = vunpack.c.l.bf16 %v30
  %v49 = vunpack.c.l.bf16 %v31
  %v50 = vunpack.c.l.bf16 %v32
  %v51 = vunpack.c.l.bf16 %v33
  %v52 = vunpack.c.l.bf16 %v34
  %v53 = vld [vmem:[%s2] sm:$0x1]
  %v54 = vperm.slane %v53, 0
  %v55 = vmul.f32 %v35, %v54
  %v56 = vmul.f32 %v36, %v54
  %v57 = vmul.f32 %v37, %v54
  %v58 = vmul.f32 %v38, %v54
  %v59 = vmul.f32 %v39, %v54
  %v60 = vmul.f32 %v40, %v54
  %v61 = vmul.f32 %v41, %v54
  %v62 = vmul.f32 %v42, %v54
  %v63 = vmul.f32 %v43, %v54
  %v64 = vmul.f32 %v44, %v54
  %v65 = vmul.f32 %v45, %v54
  %v66 = vmul.f32 %v46, %v54
  %v67 = vmul.f32 %v47, %v54
  %v68 = vmul.f32 %v48, %v54
  %v69 = vmul.f32 %v49, %v54
  %v70 = vmul.f32 %v50, %v54
  %v71 = vmul.f32 %v51, %v54
  %v72 = vmul.f32 %v52, %v54
  %v73 = vld [vmem:[%s2 + $0x1] sm:$0x1]
  %v74 = vperm.slane %v73, 0
  %v75 = vadd.f32 %v55, %v74
  %v76 = vadd.f32 %v56, %v74
  %v77 = vadd.f32 %v57, %v74
  %v78 = vadd.f32 %v58, %v74
  %v79 = vadd.f32 %v59, %v74
  %v80 = vadd.f32 %v60, %v74
  %v81 = vadd.f32 %v61, %v74
  %v82 = vadd.f32 %v62, %v74
  %v83 = vadd.f32 %v63, %v74
  %v84 = vadd.f32 %v64, %v74
  %v85 = vadd.f32 %v65, %v74
  %v86 = vadd.f32 %v66, %v74
  %v87 = vadd.f32 %v67, %v74
  %v88 = vadd.f32 %v68, %v74
  %v89 = vadd.f32 %v69, %v74
  %v90 = vadd.f32 %v70, %v74
  %v91 = vadd.f32 %v71, %v74
  %v92 = vadd.f32 %v72, %v74
  %v93 = vld [vmem:[%s1] sm:$0xf]
  %v94 = vld [vmem:[%s1 + $0x4] sm:$0xf]
  %v95 = vld [vmem:[%s1 + $0x8] sm:$0xf]
  %v96 = vld [vmem:[%s1 + $0xc] sm:$0xf]
  %v97 = vld [vmem:[%s1 + $0x10] sm:$0xf]
  %v98 = vld [vmem:[%s1 + $0x14] sm:$0xf]
  %v99 = vld [vmem:[%s1 + $0x18] sm:$0xf]
  %v100 = vld [vmem:[%s1 + $0x1c] sm:$0xf]
  %v101 = vld [vmem:[%s1 + $0x20] sm:$0xf]
  %v102 = vld [vmem:[%s1 + $0x24] sm:$0xf]
  %v103 = vld [vmem:[%s1 + $0x28] sm:$0xf]
  %v104 = vld [vmem:[%s1 + $0x2c] sm:$0xf]
  %v105 = vld [vmem:[%s1 + $0x30] sm:$0xf]
  %v106 = vld [vmem:[%s1 + $0x34] sm:$0xf]
  %v107 = vld [vmem:[%s1 + $0x38] sm:$0xf]
  %v108 = vld [vmem:[%s1 + $0x3c] sm:$0xf]
  %v109 = vld [vmem:[%s1 + $0x40] sm:$0xf]
  %v110 = vld [vmem:[%s1 + $0x44] sm:$0xf]
  %v111 = vunpack.c.l.bf16 %v93
  %v112 = vunpack.c.l.bf16 %v94
  %v113 = vunpack.c.l.bf16 %v95
  %v114 = vunpack.c.l.bf16 %v96
  %v115 = vunpack.c.l.bf16 %v97
  %v116 = vunpack.c.l.bf16 %v98
  %v117 = vunpack.c.l.bf16 %v99
  %v118 = vunpack.c.l.bf16 %v100
  %v119 = vunpack.c.l.bf16 %v101
  %v120 = vunpack.c.l.bf16 %v102
  %v121 = vunpack.c.l.bf16 %v103
  %v122 = vunpack.c.l.bf16 %v104
  %v123 = vunpack.c.l.bf16 %v105
  %v124 = vunpack.c.l.bf16 %v106
  %v125 = vunpack.c.l.bf16 %v107
  %v126 = vunpack.c.l.bf16 %v108
  %v127 = vunpack.c.l.bf16 %v109
  %v128 = vunpack.c.l.bf16 %v110
  %v129 = vld [vmem:[%s3] sm:$0x1]
  %v130 = vperm.slane %v129, 0
  %v131 = vmul.f32 %v111, %v130
  %v132 = vmul.f32 %v112, %v130
  %v133 = vmul.f32 %v113, %v130
  %v134 = vmul.f32 %v114, %v130
  %v135 = vmul.f32 %v115, %v130
  %v136 = vmul.f32 %v116, %v130
  %v137 = vmul.f32 %v117, %v130
  %v138 = vmul.f32 %v118, %v130
  %v139 = vmul.f32 %v119, %v130
  %v140 = vmul.f32 %v120, %v130
  %v141 = vmul.f32 %v121, %v130
  %v142 = vmul.f32 %v122, %v130
  %v143 = vmul.f32 %v123, %v130
  %v144 = vmul.f32 %v124, %v130
  %v145 = vmul.f32 %v125, %v130
  %v146 = vmul.f32 %v126, %v130
  %v147 = vmul.f32 %v127, %v130
  %v148 = vmul.f32 %v128, %v130
  %v149 = vld [vmem:[%s3 + $0x1] sm:$0x1]
  %v150 = vperm.slane %v149, 0
  %v151 = vadd.f32 %v131, %v150
  %v152 = vadd.f32 %v132, %v150
  %v153 = vadd.f32 %v133, %v150
  %v154 = vadd.f32 %v134, %v150
  %v155 = vadd.f32 %v135, %v150
  %v156 = vadd.f32 %v136, %v150
  %v157 = vadd.f32 %v137, %v150
  %v158 = vadd.f32 %v138, %v150
  %v159 = vadd.f32 %v139, %v150
  %v160 = vadd.f32 %v140, %v150
  %v161 = vadd.f32 %v141, %v150
  %v162 = vadd.f32 %v142, %v150
  %v163 = vadd.f32 %v143, %v150
  %v164 = vadd.f32 %v144, %v150
  %v165 = vadd.f32 %v145, %v150
  %v166 = vadd.f32 %v146, %v150
  %v167 = vadd.f32 %v147, %v150
  %v168 = vadd.f32 %v148, %v150
  %v169 = vadd.f32 %v75, %v151
  %v170 = vadd.f32 %v76, %v152
  %v171 = vadd.f32 %v77, %v153
  %v172 = vadd.f32 %v78, %v154
  %v173 = vadd.f32 %v79, %v155
  %v174 = vadd.f32 %v80, %v156
  %v175 = vadd.f32 %v81, %v157
  %v176 = vadd.f32 %v82, %v158
  %v177 = vadd.f32 %v83, %v159
  %v178 = vadd.f32 %v84, %v160
  %v179 = vadd.f32 %v85, %v161
  %v180 = vadd.f32 %v86, %v162
  %v181 = vadd.f32 %v87, %v163
  %v182 = vadd.f32 %v88, %v164
  %v183 = vadd.f32 %v89, %v165
  %v184 = vadd.f32 %v90, %v166
  %v185 = vadd.f32 %v91, %v167
  %v186 = vadd.f32 %v92, %v168
  %v187 = vmax.f32 %v169, 0.0
  %v188 = vmax.f32 %v170, 0.0
  %v189 = vmax.f32 %v171, 0.0
  %v190 = vmax.f32 %v172, 0.0
  %v191 = vmax.f32 %v173, 0.0
  %v192 = vmax.f32 %v174, 0.0
  %v193 = vmax.f32 %v175, 0.0
  %v194 = vmax.f32 %v176, 0.0
  %v195 = vmax.f32 %v177, 0.0
  %v196 = vmax.f32 %v178, 0.0
  %v197 = vmax.f32 %v179, 0.0
  %v198 = vmax.f32 %v180, 0.0
  %v199 = vmax.f32 %v181, 0.0
  %v200 = vmax.f32 %v182, 0.0
  %v201 = vmax.f32 %v183, 0.0
  %v202 = vmax.f32 %v184, 0.0
  %v203 = vmax.f32 %v185, 0.0
  %v204 = vmax.f32 %v186, 0.0
  %v205 = vpack.c.bf16 %v187, %v187
  %v206 = vpack.c.bf16 %v188, %v188
  %v207 = vpack.c.bf16 %v189, %v189
  %v208 = vpack.c.bf16 %v190, %v190
  %v209 = vpack.c.bf16 %v191, %v191
  %v210 = vpack.c.bf16 %v192, %v192
  %v211 = vpack.c.bf16 %v193, %v193
  %v212 = vpack.c.bf16 %v194, %v194
  %v213 = vpack.c.bf16 %v195, %v195
  %v214 = vpack.c.bf16 %v196, %v196
  %v215 = vpack.c.bf16 %v197, %v197
  %v216 = vpack.c.bf16 %v198, %v198
  %v217 = vpack.c.bf16 %v199, %v199
  %v218 = vpack.c.bf16 %v200, %v200
  %v219 = vpack.c.bf16 %v201, %v201
  %v220 = vpack.c.bf16 %v202, %v202
  %v221 = vpack.c.bf16 %v203, %v203
  %v222 = vpack.c.bf16 %v204, %v204
  %223 = vst [vmem:[%s4] sm:$0xf] %v205
  %224 = vst [vmem:[%s4 + $0x4] sm:$0xf] %v206
  %225 = vst [vmem:[%s4 + $0x8] sm:$0xf] %v207
  %226 = vst [vmem:[%s4 + $0xc] sm:$0xf] %v208
  %227 = vst [vmem:[%s4 + $0x10] sm:$0xf] %v209
  %228 = vst [vmem:[%s4 + $0x14] sm:$0xf] %v210
  %229 = vst [vmem:[%s4 + $0x18] sm:$0xf] %v211
  %230 = vst [vmem:[%s4 + $0x1c] sm:$0xf] %v212
  %231 = vst [vmem:[%s4 + $0x20] sm:$0xf] %v213
  %232 = vst [vmem:[%s4 + $0x24] sm:$0xf] %v214
  %233 = vst [vmem:[%s4 + $0x28] sm:$0xf] %v215
  %234 = vst [vmem:[%s4 + $0x2c] sm:$0xf] %v216
  %235 = vst [vmem:[%s4 + $0x30] sm:$0xf] %v217
  %236 = vst [vmem:[%s4 + $0x34] sm:$0xf] %v218
  %237 = vst [vmem:[%s4 + $0x38] sm:$0xf] %v219
  %238 = vst [vmem:[%s4 + $0x3c] sm:$0xf] %v220
  %239 = vst [vmem:[%s4 + $0x40] sm:$0xf] %v221
  %240 = vst [vmem:[%s4 + $0x44] sm:$0xf] %v222
  // Predicated region
  $region18: #{basic_block_forward.5} parent=0 // pred_check
    _
  $region19: #{basic_block_forward.5} parent=0 // pred_check_branch
    %242 = sbr.rel (0) target = $region21
  $region20: #{basic_block_forward.5} parent=0 // pred_region
    _
  $region21: #{basic_block_forward.5} parent=0 // pred_fallthru
    _
  // Predicated region
  $region22: #{basic_block_forward.5} parent=0 // pred_check
    _
  $region23: #{basic_block_forward.5} parent=0 // pred_check_branch
    %244 = sbr.rel (0) target = $region25
  $region24: #{basic_block_forward.5} parent=0 // pred_region
    _
  $region25: #{basic_block_forward.5} parent=0 // pred_fallthru
    _

// kernel: basic_block_forward.4
$region0: #{basic_block_forward.4}
  #allocation0 [shape = 'u32[]', space=smem, size = 0x4, offset = 0x4, fixed_abs, tag = 'smem constant byte address 0x4 - core index']
  #allocation1 [shape = 'u32[72,128]{1,0:T(1,128)}', space=vmem, size = 0x9000, scoped, tag = 'internal scratch']
  #allocation2 [shape = 'bf16[104,128]{1,0:T(8,128)(2,1)}', space=vmem, size = 0x6800, scoped, tag = 'scratch operand']
  %s0 = inlined_call_operand.vmem [shape: bf16[2,72,128], index: 0, kind: input, shape index: {}]
  %s1 = inlined_call_operand.vmem [shape: f32[2,128], index: 1, kind: input, shape index: {}]
  %s2 = inlined_call_operand.vmem [shape: bf16[1152,128], index: 2, kind: input, shape index: {}]
  %s3 = inlined_call_operand.vmem [shape: f32[72,1], index: 3, kind: input, shape index: {}]
  %s4 = inlined_call_operand.vmem [shape: bf16[2,72,128], index: 4, kind: input, shape index: {}]
  %s5 = inlined_call_operand.vmem [shape: bf16[128,128], index: 5, kind: input, shape index: {}]
  %s6 = inlined_call_operand.vmem [shape: bf16[2,72,128], index: 6, kind: output, shape index: {0}]
  %s7 = inlined_call_operand.vmem [shape: f32[2,2,128], index: 7, kind: output, shape index: {1}]
  %s8 = inlined_call_operand.vmem [shape: bf16[2,72,128], index: 8, kind: output, shape index: {2}]
  %s9 = inlined_call_operand.vmem [shape: f32[2,2,128], index: 9, kind: output, shape index: {3}]
  %10 = xla_tuple %s6, %s7, %s8, %s9
  %s11 = sld [smem:[#allocation0]]
  $region81: #{basic_block_forward.4} parent=0
    _
  %s13 = ssub.s32 1, %s11
  %s14 = scalar_select 0, %s13, %s11
  loop: start=0, step=1, limit=4
  $region2: #{basic_block_forward.4} parent=0 // loop_pre_header
    _
  $region3: #{basic_block_forward.4} parent=0 // loop_header
    %s16 = sphi 0, %s20
    %p17 = scmp.ge.s32.totalorder %s16, 4
    %s26 = sphi 0, %s28
    %s29 = sphi 0, %s26
    %s30 = sphi 0, %s29
    %s46 = sphi 0, %s30
    %s50 = sphi 0, %s50
    %s52 = sphi 0, %s50
    %s53 = sphi 0, %s52
    %s67 = sphi 0, %s53
    %s71 = sphi 0, %s71
    %s73 = sphi 0, %s71
    %s74 = sphi 0, %s73
    %s88 = sphi 0, %s74
    %s92 = sphi 0, %s92
    %s94 = sphi 0, %s92
    %s95 = sphi 0, %s94
    %s109 = sphi 0, %s95
    %s115 = sphi 0, %s117
    %s118 = sphi 0, %s115
    %s119 = sphi 0, %s118
    %s135 = sphi 0, %s119
    %s139 = sphi 0, %s139
    %s141 = sphi 0, %s139
    %s142 = sphi 0, %s141
    %s156 = sphi 0, %s142
    %s162 = sphi 0, %s164
    %s165 = sphi 0, %s162
    %s166 = sphi 0, %s165
    %s182 = sphi 0, %s166
    %s188 = sphi 0, %s190
    %s191 = sphi 0, %s188
    %s192 = sphi 0, %s191
    %s208 = sphi 0, %s192
    %s214 = sphi 0, %s216
    %s217 = sphi 0, %s214
    %s218 = sphi 0, %s217
    %s234 = sphi 0, %s218
    %s240 = sphi 0, %s242
    %s243 = sphi 0, %s240
    %s244 = sphi 0, %s243
    %s260 = sphi 0, %s244
  $region4: #{basic_block_forward.4} parent=0 // loop_header_branch
    %19 = sbr.rel (%p17) target = $region8
  $region5: #{basic_block_forward.4} parent=0 // loop_body
    %s21 = ssub.s32 %s16, 1
    %s22 = ssub.s32 %s16, 2
    %s23 = sadd.s32 %s16, 1
    %s24 = ssub.s32 %s16, %s23
    %p25 = scmp.eq.s32.totalorder %s24, 0
    %s27 = sadd.s32 %s26, 1
    %s28 = scalar_select %p25, %s26, %s27
    %p31 = pneg %p25
    %p32 = scmp.eq.s32.totalorder %s16, 1
    %p33 = por %p31, %p32
    %p34 = scmp.ne.s32.totalorder %s26, %s29
    %p35 = scmp.eq.s32.totalorder %s16, 0
    %p36 = por %p34, %p35
    %p37 = scmp.ne.s32.totalorder %s26, %s29
    %p38 = scmp.eq.s32.totalorder %s21, 1
    %p39 = por %p37, %p38
    %p40 = scmp.ne.s32.totalorder %s29, %s30
    %p41 = scmp.eq.s32.totalorder %s21, 0
    %p42 = por %p40, %p41
    %p43 = scmp.ne.s32.totalorder %s29, %s30
    %p44 = scmp.eq.s32.totalorder %s22, 1
    %p45 = por %p43, %p44
    %p47 = scmp.ne.s32.totalorder %s30, %s46
    %p48 = scmp.eq.s32.totalorder %s22, 0
    %p49 = por %p47, %p48
    %s51 = sadd.s32 %s50, 1
    %p54 = scmp.eq.s32.totalorder %s16, 1
    %p55 = scmp.ne.s32.totalorder %s50, %s52
    %p56 = scmp.eq.s32.totalorder %s16, 0
    %p57 = por %p55, %p56
    %p58 = scmp.ne.s32.totalorder %s50, %s52
    %p59 = scmp.eq.s32.totalorder %s21, 1
    %p60 = por %p58, %p59
    %p61 = scmp.ne.s32.totalorder %s52, %s53
    %p62 = scmp.eq.s32.totalorder %s21, 0
    %p63 = por %p61, %p62
    %p64 = scmp.ne.s32.totalorder %s52, %s53
    %p65 = scmp.eq.s32.totalorder %s22, 1
    %p66 = por %p64, %p65
    %p68 = scmp.ne.s32.totalorder %s53, %s67
    %p69 = scmp.eq.s32.totalorder %s22, 0
    %p70 = por %p68, %p69
    %s72 = sadd.s32 %s71, 1
    %p75 = scmp.eq.s32.totalorder %s16, 1
    %p76 = scmp.ne.s32.totalorder %s71, %s73
    %p77 = scmp.eq.s32.totalorder %s16, 0
    %p78 = por %p76, %p77
    %p79 = scmp.ne.s32.totalorder %s71, %s73
    %p80 = scmp.eq.s32.totalorder %s21, 1
    %p81 = por %p79, %p80
    %p82 = scmp.ne.s32.totalorder %s73, %s74
    %p83 = scmp.eq.s32.totalorder %s21, 0
    %p84 = por %p82, %p83
    %p85 = scmp.ne.s32.totalorder %s73, %s74
    %p86 = scmp.eq.s32.totalorder %s22, 1
    %p87 = por %p85, %p86
    %p89 = scmp.ne.s32.totalorder %s74, %s88
    %p90 = scmp.eq.s32.totalorder %s22, 0
    %p91 = por %p89, %p90
    %s93 = sadd.s32 %s92, 1
    %p96 = scmp.eq.s32.totalorder %s16, 1
    %p97 = scmp.ne.s32.totalorder %s92, %s94
    %p98 = scmp.eq.s32.totalorder %s16, 0
    %p99 = por %p97, %p98
    %p100 = scmp.ne.s32.totalorder %s92, %s94
    %p101 = scmp.eq.s32.totalorder %s21, 1
    %p102 = por %p100, %p101
    %p103 = scmp.ne.s32.totalorder %s94, %s95
    %p104 = scmp.eq.s32.totalorder %s21, 0
    %p105 = por %p103, %p104
    %p106 = scmp.ne.s32.totalorder %s94, %s95
    %p107 = scmp.eq.s32.totalorder %s22, 1
    %p108 = por %p106, %p107
    %p110 = scmp.ne.s32.totalorder %s95, %s109
    %p111 = scmp.eq.s32.totalorder %s22, 0
    %p112 = por %p110, %p111
    %s113 = ssub.s32 %s16, %s23
    %p114 = scmp.eq.s32.totalorder %s113, 0
    %s116 = sadd.s32 %s115, 1
    %s117 = scalar_select %p114, %s115, %s116
    %p120 = pneg %p114
    %p121 = scmp.eq.s32.totalorder %s16, 1
    %p122 = por %p120, %p121
    %p123 = scmp.ne.s32.totalorder %s115, %s118
    %p124 = scmp.eq.s32.totalorder %s16, 0
    %p125 = por %p123, %p124
    %p126 = scmp.ne.s32.totalorder %s115, %s118
    %p127 = scmp.eq.s32.totalorder %s21, 1
    %p128 = por %p126, %p127
    %p129 = scmp.ne.s32.totalorder %s118, %s119
    %p130 = scmp.eq.s32.totalorder %s21, 0
    %p131 = por %p129, %p130
    %p132 = scmp.ne.s32.totalorder %s118, %s119
    %p133 = scmp.eq.s32.totalorder %s22, 1
    %p134 = por %p132, %p133
    %p136 = scmp.ne.s32.totalorder %s119, %s135
    %p137 = scmp.eq.s32.totalorder %s22, 0
    %p138 = por %p136, %p137
    %s140 = sadd.s32 %s139, 1
    %p143 = scmp.eq.s32.totalorder %s16, 1
    %p144 = scmp.ne.s32.totalorder %s139, %s141
    %p145 = scmp.eq.s32.totalorder %s16, 0
    %p146 = por %p144, %p145
    %p147 = scmp.ne.s32.totalorder %s139, %s141
    %p148 = scmp.eq.s32.totalorder %s21, 1
    %p149 = por %p147, %p148
    %p150 = scmp.ne.s32.totalorder %s141, %s142
    %p151 = scmp.eq.s32.totalorder %s21, 0
    %p152 = por %p150, %p151
    %p153 = scmp.ne.s32.totalorder %s141, %s142
    %p154 = scmp.eq.s32.totalorder %s22, 1
    %p155 = por %p153, %p154
    %p157 = scmp.ne.s32.totalorder %s142, %s156
    %p158 = scmp.eq.s32.totalorder %s22, 0
    %p159 = por %p157, %p158
    %s160 = ssub.s32 %s16, %s23
    %p161 = scmp.eq.s32.totalorder %s160, 0
    %s163 = sadd.s32 %s162, 1
    %s164 = scalar_select %p161, %s162, %s163
    %p167 = pneg %p161
    %p168 = scmp.eq.s32.totalorder %s16, 1
    %p169 = por %p167, %p168
    %p170 = scmp.ne.s32.totalorder %s162, %s165
    %p171 = scmp.eq.s32.totalorder %s16, 0
    %p172 = por %p170, %p171
    %p173 = scmp.ne.s32.totalorder %s162, %s165
    %p174 = scmp.eq.s32.totalorder %s21, 1
    %p175 = por %p173, %p174
    %p176 = scmp.ne.s32.totalorder %s165, %s166
    %p177 = scmp.eq.s32.totalorder %s21, 0
    %p178 = por %p176, %p177
    %p179 = scmp.ne.s32.totalorder %s165, %s166
    %p180 = scmp.eq.s32.totalorder %s22, 1
    %p181 = por %p179, %p180
    %p183 = scmp.ne.s32.totalorder %s166, %s182
    %p184 = scmp.eq.s32.totalorder %s22, 0
    %p185 = por %p183, %p184
    %s186 = ssub.s32 %s16, %s23
    %p187 = scmp.eq.s32.totalorder %s186, 0
    %s189 = sadd.s32 %s188, 1
    %s190 = scalar_select %p187, %s188, %s189
    %p193 = pneg %p187
    %p194 = scmp.eq.s32.totalorder %s16, 1
    %p195 = por %p193, %p194
    %p196 = scmp.ne.s32.totalorder %s188, %s191
    %p197 = scmp.eq.s32.totalorder %s16, 0
    %p198 = por %p196, %p197
    %p199 = scmp.ne.s32.totalorder %s188, %s191
    %p200 = scmp.eq.s32.totalorder %s21, 1
    %p201 = por %p199, %p200
    %p202 = scmp.ne.s32.totalorder %s191, %s192
    %p203 = scmp.eq.s32.totalorder %s21, 0
    %p204 = por %p202, %p203
    %p205 = scmp.ne.s32.totalorder %s191, %s192
    %p206 = scmp.eq.s32.totalorder %s22, 1
    %p207 = por %p205, %p206
    %p209 = scmp.ne.s32.totalorder %s192, %s208
    %p210 = scmp.eq.s32.totalorder %s22, 0
    %p211 = por %p209, %p210
    %s212 = ssub.s32 %s16, %s23
    %p213 = scmp.eq.s32.totalorder %s212, 0
    %s215 = sadd.s32 %s214, 1
    %s216 = scalar_select %p213, %s214, %s215
    %p219 = pneg %p213
    %p220 = scmp.eq.s32.totalorder %s16, 1
    %p221 = por %p219, %p220
    %p222 = scmp.ne.s32.totalorder %s214, %s217
    %p223 = scmp.eq.s32.totalorder %s16, 0
    %p224 = por %p222, %p223
    %p225 = scmp.ne.s32.totalorder %s214, %s217
    %p226 = scmp.eq.s32.totalorder %s21, 1
    %p227 = por %p225, %p226
    %p228 = scmp.ne.s32.totalorder %s217, %s218
    %p229 = scmp.eq.s32.totalorder %s21, 0
    %p230 = por %p228, %p229
    %p231 = scmp.ne.s32.totalorder %s217, %s218
    %p232 = scmp.eq.s32.totalorder %s22, 1
    %p233 = por %p231, %p232
    %p235 = scmp.ne.s32.totalorder %s218, %s234
    %p236 = scmp.eq.s32.totalorder %s22, 0
    %p237 = por %p235, %p236
    %s238 = ssub.s32 %s16, %s23
    %p239 = scmp.eq.s32.totalorder %s238, 0
    %s241 = sadd.s32 %s240, 1
    %s242 = scalar_select %p239, %s240, %s241
    %p245 = pneg %p239
    %p246 = scmp.eq.s32.totalorder %s16, 1
    %p247 = por %p245, %p246
    %p248 = scmp.ne.s32.totalorder %s240, %s243
    %p249 = scmp.eq.s32.totalorder %s16, 0
    %p250 = por %p248, %p249
    %p251 = scmp.ne.s32.totalorder %s240, %s243
    %p252 = scmp.eq.s32.totalorder %s21, 1
    %p253 = por %p251, %p252
    %p254 = scmp.ne.s32.totalorder %s243, %s244
    %p255 = scmp.eq.s32.totalorder %s21, 0
    %p256 = por %p254, %p255
    %p257 = scmp.ne.s32.totalorder %s243, %s244
    %p258 = scmp.eq.s32.totalorder %s22, 1
    %p259 = por %p257, %p258
    %p261 = scmp.ne.s32.totalorder %s244, %s260
    %p262 = scmp.eq.s32.totalorder %s22, 0
    %p263 = por %p261, %p262
    %p264 = scmp.le.s32.totalorder 1, %s16
    %p265 = scmp.lt.s32.totalorder %s16, 3
    %p266 = pnand %p264, %p265
    %p267 = pneg %p266
    // Predicated region
    $region9: #{basic_block_forward.4} parent=5 // pred_check
      _
    $region10: #{basic_block_forward.4} parent=5 // pred_check_branch
      %269 = sbr.rel (%p266) target = $region12
    $region11: #{basic_block_forward.4} parent=5 // pred_region
      %s270 = ssub.s32 %s16, 1
      // Predicated region
      $region13: #{basic_block_forward.4} parent=11 // pred_check
        %p271 = pneg %p63
      $region14: #{basic_block_forward.4} parent=11 // pred_check_branch
        %273 = sbr.rel (%p271) target = $region16
      $region15: #{basic_block_forward.4} parent=11 // pred_region
        _
      $region16: #{basic_block_forward.4} parent=11 // pred_fallthru
        _
      // Predicated region
      $region17: #{basic_block_forward.4} parent=11 // pred_check
        %p274 = pneg %p84
      $region18: #{basic_block_forward.4} parent=11 // pred_check_branch
        %276 = sbr.rel (%p274) target = $region20
      $region19: #{basic_block_forward.4} parent=11 // pred_region
        _
      $region20: #{basic_block_forward.4} parent=11 // pred_fallthru
        _
      // Predicated region
      $region21: #{basic_block_forward.4} parent=11 // pred_check
        %p277 = pneg %p105
      $region22: #{basic_block_forward.4} parent=11 // pred_check_branch
        %279 = sbr.rel (%p277) target = $region24
      $region23: #{basic_block_forward.4} parent=11 // pred_region
        _
      $region24: #{basic_block_forward.4} parent=11 // pred_fallthru
        _
      // Predicated region
      $region25: #{basic_block_forward.4} parent=11 // pred_check
        %p280 = pneg %p152
      $region26: #{basic_block_forward.4} parent=11 // pred_check_branch
        %282 = sbr.rel (%p280) target = $region28
      $region27: #{basic_block_forward.4} parent=11 // pred_region
        _
      $region28: #{basic_block_forward.4} parent=11 // pred_fallthru
        _
    $region12: #{basic_block_forward.4} parent=5 // pred_fallthru
      _
    %p283 = scmp.lt.s32.totalorder %s16, 2
    // Predicated region
    $region29: #{basic_block_forward.4} parent=5 // pred_check
      %p284 = pneg %p283
    $region30: #{basic_block_forward.4} parent=5 // pred_check_branch
      %286 = sbr.rel (%p284) target = $region32
    $region31: #{basic_block_forward.4} parent=5 // pred_region
      // Predicated region
      $region33: #{basic_block_forward.4} parent=31 // pred_check
        %p287 = pneg %p36
      $region34: #{basic_block_forward.4} parent=31 // pred_check_branch
        %289 = sbr.rel (%p287) target = $region36
      $region35: #{basic_block_forward.4} parent=31 // pred_region
        %p290 = scmp.lt.s32.totalorder %s16, 1
        %s291 = scalar_select %p290, %s16, 1
        %s292 = smul.addr %s291, 9
        %s293 = smul.addr %s292, 4
        %s294 = scalar_lea.vmem %s0, %s293
      $region36: #{basic_block_forward.4} parent=31 // pred_fallthru
        _
      // Predicated region
      $region37: #{basic_block_forward.4} parent=31 // pred_check
        %p295 = pneg %p125
      $region38: #{basic_block_forward.4} parent=31 // pred_check_branch
        %297 = sbr.rel (%p295) target = $region40
      $region39: #{basic_block_forward.4} parent=31 // pred_region
        %p298 = scmp.lt.s32.totalorder %s16, 1
        %s299 = scalar_select %p298, %s16, 1
        %s300 = smul.addr %s299, 9
        %s301 = smul.addr %s300, 4
        %s302 = scalar_lea.vmem %s4, %s301
      $region40: #{basic_block_forward.4} parent=31 // pred_fallthru
        _
    $region32: #{basic_block_forward.4} parent=5 // pred_fallthru
      _
    %p303 = scmp.le.s32.totalorder 1, %s16
    %p304 = scmp.lt.s32.totalorder %s16, 3
    %p305 = pnand %p303, %p304
    %p306 = pneg %p305
    // Predicated region
    $region41: #{basic_block_forward.4} parent=5 // pred_check
      _
    $region42: #{basic_block_forward.4} parent=5 // pred_check_branch
      %308 = sbr.rel (%p305) target = $region44
    $region43: #{basic_block_forward.4} parent=5 // pred_region
      %s309 = ssub.s32 %s16, 1
      %p310 = scmp.lt.s32.totalorder %s21, 1
      %s311 = scalar_select %p310, %s21, 1
      %s312 = smul.addr %s311, 9
      %s313 = smul.addr %s312, 4
      %s314 = scalar_lea.vmem %s0, %s313
      %p315 = pneg %p42
      %p316 = pneg %p39
      %p317 = pneg %p63
      %p318 = pneg %p60
      %p319 = pneg %p84
      %p320 = pneg %p81
      %p321 = pneg %p105
      %p322 = pneg %p102
      %p323 = scmp.lt.s32.totalorder %s21, 1
      %s324 = scalar_select %p323, %s21, 1
      %s325 = smul.addr %s324, 9
      %s326 = smul.addr %s325, 4
      %s327 = scalar_lea.vmem %s4, %s326
      %p328 = pneg %p131
      %p329 = pneg %p128
      %p330 = pneg %p152
      %p331 = pneg %p149
      %p332 = pneg %p178
      %p333 = pneg %p175
      %p334 = scmp.lt.s32.totalorder %s21, 1
      %s335 = scalar_select %p334, %s21, 1
      %s336 = smul.addr %s335, 9
      %s337 = smul.addr %s336, 4
      %s338 = scalar_lea.vmem %s6, %s337
      %p339 = pneg %p204
      %p340 = pneg %p201
      %p341 = scmp.lt.s32.totalorder %s21, 1
      %s342 = scalar_select %p341, %s21, 1
      %s343 = smul.addr %s342, 2
      %s344 = scalar_lea.vmem %s7, %s343
      %p345 = pneg %p230
      %p346 = pneg %p227
      %p347 = scmp.lt.s32.totalorder %s21, 1
      %s348 = scalar_select %p347, %s21, 1
      %s349 = smul.addr %s348, 9
      %s350 = smul.addr %s349, 4
      %s351 = scalar_lea.vmem %s8, %s350
      %p352 = pneg %p256
      %p353 = pneg %p253
      %p354 = scmp.lt.s32.totalorder %s21, 1
      %s355 = scalar_select %p354, %s21, 1
      %s356 = smul.addr %s355, 2
      %s357 = scalar_lea.vmem %s9, %s356
      %p358 = scmp.lt.s32.totalorder %s21, 1
      %s359 = scalar_select %p358, %s21, 1
      %s360 = smul.addr %s359, 9
      %s361 = smul.addr %s360, 4
      %s362 = scalar_lea.vmem %s0, %s361
      %p363 = scmp.lt.s32.totalorder %s21, 1
      %s364 = scalar_select %p363, %s21, 1
      %s365 = smul.addr %s364, 9
      %s366 = smul.addr %s365, 4
      %s367 = scalar_lea.vmem %s4, %s366
      %p368 = scmp.lt.s32.totalorder %s21, 1
      %s369 = scalar_select %p368, %s21, 1
      %s370 = smul.addr %s369, 9
      %s371 = smul.addr %s370, 4
      %s372 = scalar_lea.vmem %s6, %s371
      %p373 = scmp.lt.s32.totalorder %s21, 1
      %s374 = scalar_select %p373, %s21, 1
      %s375 = smul.addr %s374, 2
      %s376 = scalar_lea.vmem %s7, %s375
      %p377 = scmp.lt.s32.totalorder %s21, 1
      %s378 = scalar_select %p377, %s21, 1
      %s379 = smul.addr %s378, 9
      %s380 = smul.addr %s379, 4
      %s381 = scalar_lea.vmem %s8, %s380
      %p382 = scmp.lt.s32.totalorder %s21, 1
      %s383 = scalar_select %p382, %s21, 1
      %s384 = smul.addr %s383, 2
      %s385 = scalar_lea.vmem %s9, %s384
      %v387 = vld [vmem:[%s362] sm:$0xf]
      %v388 = vld [vmem:[%s362 + $0x4] sm:$0xf]
      %v389 = vld [vmem:[%s362 + $0x8] sm:$0xf]
      %v390 = vld [vmem:[%s362 + $0xc] sm:$0xf]
      %v391 = vld [vmem:[%s362 + $0x10] sm:$0xf]
      %v392 = vld [vmem:[%s362 + $0x14] sm:$0xf]
      %v393 = vld [vmem:[%s362 + $0x18] sm:$0xf]
      %v394 = vld [vmem:[%s362 + $0x1c] sm:$0xf]
      %v395 = vld [vmem:[%s362 + $0x20] sm:$0xf]
      %v396 = vunpack.c.l.bf16 %v387
      %v397 = vunpack.c.l.bf16 %v388
      %v398 = vunpack.c.l.bf16 %v389
      %v399 = vunpack.c.l.bf16 %v390
      %v400 = vunpack.c.l.bf16 %v391
      %v401 = vunpack.c.l.bf16 %v392
      %v402 = vunpack.c.l.bf16 %v393
      %v403 = vunpack.c.l.bf16 %v394
      %v404 = vunpack.c.l.bf16 %v395
      %v405 = vld [vmem:[%s1] sm:$0x1]
      %v406 = vperm.slane %v405, 0
      %v407 = vmul.f32 %v396, %v406
      %v408 = vmul.f32 %v397, %v406
      %v409 = vmul.f32 %v398, %v406
      %v410 = vmul.f32 %v399, %v406
      %v411 = vmul.f32 %v400, %v406
      %v412 = vmul.f32 %v401, %v406
      %v413 = vmul.f32 %v402, %v406
      %v414 = vmul.f32 %v403, %v406
      %v415 = vmul.f32 %v404, %v406
      %v416 = vld [vmem:[%s1 + $0x1] sm:$0x1]
      %v417 = vperm.slane %v416, 0
      %v418 = vadd.f32 %v407, %v417
      %v419 = vadd.f32 %v408, %v417
      %v420 = vadd.f32 %v409, %v417
      %v421 = vadd.f32 %v410, %v417
      %v422 = vadd.f32 %v411, %v417
      %v423 = vadd.f32 %v412, %v417
      %v424 = vadd.f32 %v413, %v417
      %v425 = vadd.f32 %v414, %v417
      %v426 = vadd.f32 %v415, %v417
      %v427 = vmax.f32 %v418, 0.0
      %v428 = vmax.f32 %v419, 0.0
      %v429 = vmax.f32 %v420, 0.0
      %v430 = vmax.f32 %v421, 0.0
      %v431 = vmax.f32 %v422, 0.0
      %v432 = vmax.f32 %v423, 0.0
      %v433 = vmax.f32 %v424, 0.0
      %v434 = vmax.f32 %v425, 0.0
      %v435 = vmax.f32 %v426, 0.0
      %v436 = vld [vmem:[%s3] sm:$0xff]
      %v437 = vld [vmem:[%s3 + $0x8] sm:$0xff]
      %v438 = vld [vmem:[%s3 + $0x10] sm:$0xff]
      %v439 = vld [vmem:[%s3 + $0x18] sm:$0xff]
      %v440 = vld [vmem:[%s3 + $0x20] sm:$0xff]
      %v441 = vld [vmem:[%s3 + $0x28] sm:$0xff]
      %v442 = vld [vmem:[%s3 + $0x30] sm:$0xff]
      %v443 = vld [vmem:[%s3 + $0x38] sm:$0xff]
      %v444 = vld [vmem:[%s3 + $0x40] sm:$0xff]
      %446 = vset.pattern.permute.xlu0 0
      %447 = vperm.xlu0 %446, %v436
      %v448 = vpop.permute.xlu0 %447
      %451 = vset.pattern.permute.xlu0 0
      %452 = vperm.xlu0 %451, %v437
      %v453 = vpop.permute.xlu0 %452
      %456 = vset.pattern.permute.xlu0 0
      %457 = vperm.xlu0 %456, %v438
      %v458 = vpop.permute.xlu0 %457
      %461 = vset.pattern.permute.xlu0 0
      %462 = vperm.xlu0 %461, %v439
      %v463 = vpop.permute.xlu0 %462
      %466 = vset.pattern.permute.xlu0 0
      %467 = vperm.xlu0 %466, %v440
      %v468 = vpop.permute.xlu0 %467
      %471 = vset.pattern.permute.xlu0 0
      %472 = vperm.xlu0 %471, %v441
      %v473 = vpop.permute.xlu0 %472
      %476 = vset.pattern.permute.xlu0 0
      %477 = vperm.xlu0 %476, %v442
      %v478 = vpop.permute.xlu0 %477
      %481 = vset.pattern.permute.xlu0 0
      %482 = vperm.xlu0 %481, %v443
      %v483 = vpop.permute.xlu0 %482
      %486 = vset.pattern.permute.xlu0 0
      %487 = vperm.xlu0 %486, %v444
      %v488 = vpop.permute.xlu0 %487
      %v490 = vmul.f32 %v427, %v448
      %v491 = vmul.f32 %v428, %v453
      %v492 = vmul.f32 %v429, %v458
      %v493 = vmul.f32 %v430, %v463
      %v494 = vmul.f32 %v431, %v468
      %v495 = vmul.f32 %v432, %v473
      %v496 = vmul.f32 %v433, %v478
      %v497 = vmul.f32 %v434, %v483
      %v498 = vmul.f32 %v435, %v488
      %499 = vst [vmem:[#allocation2] sm:$0xf] 0
      %500 = vst [vmem:[#allocation2 + $0x4] sm:$0xf] 0
      %v501 = vpack.c.bf16 %v490, %v490
      %v502 = vpack.c.bf16 %v491, %v491
      %v503 = vpack.c.bf16 %v492, %v492
      %v504 = vpack.c.bf16 %v493, %v493
      %v505 = vpack.c.bf16 %v494, %v494
      %v506 = vpack.c.bf16 %v495, %v495
      %v507 = vpack.c.bf16 %v496, %v496
      %v508 = vpack.c.bf16 %v497, %v497
      %v509 = vpack.c.bf16 %v498, %v498
      %510 = vst [vmem:[#allocation2 + $0x8] sm:$0xf] %v501
      %511 = vst [vmem:[#allocation2 + $0xc] sm:$0xf] %v502
      %512 = vst [vmem:[#allocation2 + $0x10] sm:$0xf] %v503
      %513 = vst [vmem:[#allocation2 + $0x14] sm:$0xf] %v504
      %514 = vst [vmem:[#allocation2 + $0x18] sm:$0xf] %v505
      %515 = vst [vmem:[#allocation2 + $0x1c] sm:$0xf] %v506
      %516 = vst [vmem:[#allocation2 + $0x20] sm:$0xf] %v507
      %517 = vst [vmem:[#allocation2 + $0x24] sm:$0xf] %v508
      %518 = vst [vmem:[#allocation2 + $0x28] sm:$0xf] %v509
      %519 = vst [vmem:[#allocation2 + $0x2c] sm:$0xf] 0
      %520 = vst [vmem:[#allocation2 + $0x30] sm:$0xf] 0
      %v521 = vld [vmem:[#allocation2] sm:$0x8]
      %v522 = vld [vmem:[#allocation2 + $0x4] sm:$0xf]
      %v523 = vld [vmem:[#allocation2 + $0x8] sm:$0xf]
      %v524 = vld [vmem:[#allocation2 + $0xc] sm:$0xf]
      %v525 = vld [vmem:[#allocation2 + $0x10] sm:$0xf]
      %v526 = vld [vmem:[#allocation2 + $0x14] sm:$0xf]
      %v527 = vld [vmem:[#allocation2 + $0x18] sm:$0xf]
      %v528 = vld [vmem:[#allocation2 + $0x1c] sm:$0xf]
      %v529 = vld [vmem:[#allocation2 + $0x20] sm:$0xf]
      %v530 = vld [vmem:[#allocation2 + $0x24] sm:$0x7]
      %v531 = vld [vmem:[%s2] sm:$0xf]
      %v532 = vld [vmem:[%s2 + $0x4] sm:$0xf]
      %v533 = vld [vmem:[%s2 + $0x8] sm:$0xf]
      %v534 = vld [vmem:[%s2 + $0xc] sm:$0xf]
      %v535 = vld [vmem:[%s2 + $0x10] sm:$0xf]
      %v536 = vld [vmem:[%s2 + $0x14] sm:$0xf]
      %v537 = vld [vmem:[%s2 + $0x18] sm:$0xf]
      %v538 = vld [vmem:[%s2 + $0x1c] sm:$0xf]
      %v539 = vld [vmem:[%s2 + $0x20] sm:$0xf]
      %v540 = vld [vmem:[%s2 + $0x24] sm:$0xf]
      %v541 = vld [vmem:[%s2 + $0x28] sm:$0xf]
      %v542 = vld [vmem:[%s2 + $0x2c] sm:$0xf]
      %v543 = vld [vmem:[%s2 + $0x30] sm:$0xf]
      %v544 = vld [vmem:[%s2 + $0x34] sm:$0xf]
      %v545 = vld [vmem:[%s2 + $0x38] sm:$0xf]
      %v546 = vld [vmem:[%s2 + $0x3c] sm:$0xf]
      %v547 = vld [vmem:[#allocation2 + $0x24] sm:$0xf]
      %v548 = vld [vmem:[%s2 + $0x40] sm:$0xf]
      %v549 = vld [vmem:[%s2 + $0x44] sm:$0xf]
      %v550 = vld [vmem:[%s2 + $0x48] sm:$0xf]
      %v551 = vld [vmem:[%s2 + $0x4c] sm:$0xf]
      %v552 = vld [vmem:[%s2 + $0x50] sm:$0xf]
      %v553 = vld [vmem:[%s2 + $0x54] sm:$0xf]
      %v554 = vld [vmem:[%s2 + $0x58] sm:$0xf]
      %v555 = vld [vmem:[%s2 + $0x5c] sm:$0xf]
      %v556 = vld [vmem:[%s2 + $0x60] sm:$0xf]
      %v557 = vld [vmem:[%s2 + $0x64] sm:$0xf]
      %v558 = vld [vmem:[%s2 + $0x68] sm:$0xf]
      %v559 = vld [vmem:[%s2 + $0x6c] sm:$0xf]
      %v560 = vld [vmem:[%s2 + $0x70] sm:$0xf]
      %v561 = vld [vmem:[%s2 + $0x74] sm:$0xf]
      %v562 = vld [vmem:[%s2 + $0x78] sm:$0xf]
      %v563 = vld [vmem:[%s2 + $0x7c] sm:$0xf]
      %v574 = vunpack.c.l.b16 %v521
      %v575 = vunpack.c.l.b16 %v522
      %v576 = vunpack.c.l.b16 %v523
      %v577 = vunpack.c.l.b16 %v524
      %v578 = vunpack.c.l.b16 %v525
      %v579 = vunpack.c.l.b16 %v526
      %v580 = vunpack.c.l.b16 %v527
      %v581 = vunpack.c.l.b16 %v528
      %v582 = vunpack.c.l.b16 %v529
      %v583 = vunpack.c.l.b16 %v547
      %v584 = vpack.c.b16 %v575, %v574
      %v585 = vpack.c.b16 %v577, %v576
      %v586 = vpack.c.b16 %v579, %v578
      %v587 = vpack.c.b16 %v581, %v580
      %v588 = vpack.c.b16 %v583, %v582
      %vm589 = vsmask.f32 4352
      %v591 = vshrl.u32 %v584, 16
      %v593 = vrot.slane %v591, 3
      %v594 = vshll.u32 %v584, 16
      %v596 = vrot.slane %v594, 4
      %v597 = vor.u32 %v593, %v596
      %v599 = vshrl.u32 %v585, 16
      %v601 = vrot.slane %v599, 3
      %v602 = vshll.u32 %v585, 16
      %v604 = vrot.slane %v602, 4
      %v605 = vor.u32 %v601, %v604
      %v606 = vsel %vm589, %v597, %v605
      %v608 = vshrl.u32 %v586, 16
      %v610 = vrot.slane %v608, 3
      %v611 = vshll.u32 %v586, 16
      %v613 = vrot.slane %v611, 4
      %v614 = vor.u32 %v610, %v613
      %v615 = vsel %vm589, %v605, %v614
      %v617 = vshrl.u32 %v587, 16
      %v619 = vrot.slane %v617, 3
      %v620 = vshll.u32 %v587, 16
      %v622 = vrot.slane %v620, 4
      %v623 = vor.u32 %v619, %v622
      %v624 = vsel %vm589, %v614, %v623
      %v626 = vshrl.u32 %v588, 16
      %v628 = vrot.slane %v626, 3
      %v629 = vshll.u32 %v588, 16
      %v631 = vrot.slane %v629, 4
      %v632 = vor.u32 %v628, %v631
      %v633 = vsel %vm589, %v623, %v632
      %v655 = vunpack.c.l.b16 %v548
      %v656 = vunpack.c.l.b16 %v549
      %v657 = vunpack.c.l.b16 %v550
      %v658 = vunpack.c.l.b16 %v551
      %v659 = vunpack.c.l.b16 %v552
      %v660 = vunpack.c.l.b16 %v553
      %v661 = vunpack.c.l.b16 %v554
      %v662 = vunpack.c.l.b16 %v555
      %v663 = vunpack.c.l.b16 %v556
      %v664 = vunpack.c.l.b16 %v557
      %v665 = vunpack.c.l.b16 %v558
      %v666 = vunpack.c.l.b16 %v559
      %v667 = vunpack.c.l.b16 %v560
      %v668 = vunpack.c.l.b16 %v561
      %v669 = vunpack.c.l.b16 %v562
      %v670 = vunpack.c.l.b16 %v563
      %v671 = vpack.c.b16 %v656, %v655
      %v672 = vpack.c.b16 %v658, %v657
      %v673 = vpack.c.b16 %v660, %v659
      %v674 = vpack.c.b16 %v662, %v661
      %v675 = vpack.c.b16 %v664, %v663
      %v676 = vpack.c.b16 %v666, %v665
      %v677 = vpack.c.b16 %v668, %v667
      %v678 = vpack.c.b16 %v670, %v669
      %687 = vmatpush.bf16.msra.mxu0 %v678
      %688 = vmatpush.bf16.msra.mxu0 %v677
      %689 = vmatpush.bf16.msra.mxu0 %v676
      %690 = vmatpush.bf16.msra.mxu0 %v675
      %691 = vmatpush.bf16.msra.mxu0 %v674
      %692 = vmatpush.bf16.msra.mxu0 %v673
      %693 = vmatpush.bf16.msra.mxu0 %v672
      %694 = vmatpush.bf16.msra.mxu0 %v671
      %695 = vmatmul.bf16.gmra.mxu0 %v606
      %v696 = vpop.f32.mrf.mxu0
      %v697 = vadd.f32 0.0, %v696
      %v698 = vpop.f32.mrf.mxu0
      %v699 = vadd.f32 0.0, %v698
      %700 = vmatmul.bf16.gmra.mxu0 %v615
      %v701 = vpop.f32.mrf.mxu0
      %v702 = vadd.f32 0.0, %v701
      %v703 = vpop.f32.mrf.mxu0
      %v704 = vadd.f32 0.0, %v703
      %705 = vmatmul.bf16.gmra.mxu0 %v624
      %v706 = vpop.f32.mrf.mxu0
      %v707 = vadd.f32 0.0, %v706
      %v708 = vpop.f32.mrf.mxu0
      %v709 = vadd.f32 0.0, %v708
      %710 = vmatmul.bf16.gmra.mxu0 %v633
      %v711 = vpop.f32.mrf.mxu0
      %v712 = vadd.f32 0.0, %v711
      %v713 = vpop.f32.mrf.mxu0
      %v714 = vadd.f32 0.0, %v713
      %715 = vmatmul.bf16.gmra.mxu0 %v632
      %v716 = vpop.f32.mrf.mxu0
      %v717 = vadd.f32 0.0, %v716
      %v718 = vpop.f32.mrf.mxu0
      %719 = vdwg.mxu0
      %v721 = vunpack.c.l.b16 %v530
      %v722 = vpack.c.b16 %v721, %v582
      %vm723 = vcmask 1044480
      %v724 = vrot.slane %v584, 3
      %v725 = vrot.slane %v585, 3
      %v726 = vsel %vm723, %v724, %v725
      %v727 = vrot.slane %v586, 3
      %v728 = vsel %vm723, %v725, %v727
      %v729 = vrot.slane %v587, 3
      %v730 = vsel %vm723, %v727, %v729
      %v731 = vrot.slane %v722, 3
      %v732 = vsel %vm723, %v729, %v731
      %v754 = vunpack.c.l.b16 %v531
      %v755 = vunpack.c.l.b16 %v532
      %v756 = vunpack.c.l.b16 %v533
      %v757 = vunpack.c.l.b16 %v534
      %v758 = vunpack.c.l.b16 %v535
      %v759 = vunpack.c.l.b16 %v536
      %v760 = vunpack.c.l.b16 %v537
      %v761 = vunpack.c.l.b16 %v538
      %v762 = vunpack.c.l.b16 %v539
      %v763 = vunpack.c.l.b16 %v540
      %v764 = vunpack.c.l.b16 %v541
      %v765 = vunpack.c.l.b16 %v542
      %v766 = vunpack.c.l.b16 %v543
      %v767 = vunpack.c.l.b16 %v544
      %v768 = vunpack.c.l.b16 %v545
      %v769 = vunpack.c.l.b16 %v546
      %v770 = vpack.c.b16 %v755, %v754
      %v771 = vpack.c.b16 %v757, %v756
      %v772 = vpack.c.b16 %v759, %v758
      %v773 = vpack.c.b16 %v761, %v760
      %v774 = vpack.c.b16 %v763, %v762
      %v775 = vpack.c.b16 %v765, %v764
      %v776 = vpack.c.b16 %v767, %v766
      %v777 = vpack.c.b16 %v769, %v768
      %786 = vmatpush.bf16.msra.mxu0 %v777
      %787 = vmatpush.bf16.msra.mxu0 %v776
      %788 = vmatpush.bf16.msra.mxu0 %v775
      %789 = vmatpush.bf16.msra.mxu0 %v774
      %790 = vmatpush.bf16.msra.mxu0 %v773
      %791 = vmatpush.bf16.msra.mxu0 %v772
      %792 = vmatpush.bf16.msra.mxu0 %v771
      %793 = vmatpush.bf16.msra.mxu0 %v770
      %794 = vmatmul.bf16.gmra.mxu0 %v726
      %v795 = vpop.f32.mrf.mxu0
      %v796 = vadd.f32 %v697, %v795
      %v797 = vpop.f32.mrf.mxu0
      %v798 = vadd.f32 %v699, %v797
      %799 = vmatmul.bf16.gmra.mxu0 %v728
      %v800 = vpop.f32.mrf.mxu0
      %v801 = vadd.f32 %v702, %v800
      %v802 = vpop.f32.mrf.mxu0
      %v803 = vadd.f32 %v704, %v802
      %804 = vmatmul.bf16.gmra.mxu0 %v730
      %v805 = vpop.f32.mrf.mxu0
      %v806 = vadd.f32 %v707, %v805
      %v807 = vpop.f32.mrf.mxu0
      %v808 = vadd.f32 %v709, %v807
      %809 = vmatmul.bf16.gmra.mxu0 %v732
      %v810 = vpop.f32.mrf.mxu0
      %v811 = vadd.f32 %v712, %v810
      %v812 = vpop.f32.mrf.mxu0
      %v813 = vadd.f32 %v714, %v812
      %814 = vmatmul.bf16.gmra.mxu0 %v731
      %v815 = vpop.f32.mrf.mxu0
      %v816 = vadd.f32 %v717, %v815
      %v817 = vpop.f32.mrf.mxu0
      %818 = vdwg.mxu0
      %v819 = vld [vmem:[%s2 + $0x80] sm:$0xf]
      %v820 = vld [vmem:[%s2 + $0x84] sm:$0xf]
      %v821 = vld [vmem:[%s2 + $0x88] sm:$0xf]
      %v822 = vld [vmem:[%s2 + $0x8c] sm:$0xf]
      %v823 = vld [vmem:[%s2 + $0x90] sm:$0xf]
      %v824 = vld [vmem:[%s2 + $0x94] sm:$0xf]
      %v825 = vld [vmem:[%s2 + $0x98] sm:$0xf]
      %v826 = vld [vmem:[%s2 + $0x9c] sm:$0xf]
      %v827 = vld [vmem:[%s2 + $0xa0] sm:$0xf]
      %v828 = vld [vmem:[%s2 + $0xa4] sm:$0xf]
      %v829 = vld [vmem:[%s2 + $0xa8] sm:$0xf]
      %v830 = vld [vmem:[%s2 + $0xac] sm:$0xf]
      %v831 = vld [vmem:[%s2 + $0xb0] sm:$0xf]
      %v832 = vld [vmem:[%s2 + $0xb4] sm:$0xf]
      %v833 = vld [vmem:[%s2 + $0xb8] sm:$0xf]
      %v834 = vld [vmem:[%s2 + $0xbc] sm:$0xf]
      %v835 = vpack.c.b16 %v576, %v575
      %v836 = vpack.c.b16 %v578, %v577
      %v837 = vpack.c.b16 %v580, %v579
      %v838 = vpack.c.b16 %v582, %v581
      %v839 = vpack.c.b16 %v583, %v583
      %v861 = vunpack.c.l.b16 %v819
      %v862 = vunpack.c.l.b16 %v820
      %v863 = vunpack.c.l.b16 %v821
      %v864 = vunpack.c.l.b16 %v822
      %v865 = vunpack.c.l.b16 %v823
      %v866 = vunpack.c.l.b16 %v824
      %v867 = vunpack.c.l.b16 %v825
      %v868 = vunpack.c.l.b16 %v826
      %v869 = vunpack.c.l.b16 %v827
      %v870 = vunpack.c.l.b16 %v828
      %v871 = vunpack.c.l.b16 %v829
      %v872 = vunpack.c.l.b16 %v830
      %v873 = vunpack.c.l.b16 %v831
      %v874 = vunpack.c.l.b16 %v832
      %v875 = vunpack.c.l.b16 %v833
      %v876 = vunpack.c.l.b16 %v834
      %v877 = vpack.c.b16 %v862, %v861
      %v878 = vpack.c.b16 %v864, %v863
      %v879 = vpack.c.b16 %v866, %v865
      %v880 = vpack.c.b16 %v868, %v867
      %v881 = vpack.c.b16 %v870, %v869
      %v882 = vpack.c.b16 %v872, %v871
      %v883 = vpack.c.b16 %v874, %v873
      %v884 = vpack.c.b16 %v876, %v875
      %893 = vmatpush.bf16.msra.mxu0 %v884
      %894 = vmatpush.bf16.msra.mxu0 %v883
      %895 = vmatpush.bf16.msra.mxu0 %v882
      %896 = vmatpush.bf16.msra.mxu0 %v881
      %897 = vmatpush.bf16.msra.mxu0 %v880
      %898 = vmatpush.bf16.msra.mxu0 %v879
      %899 = vmatpush.bf16.msra.mxu0 %v878
      %900 = vmatpush.bf16.msra.mxu0 %v877
      %901 = vmatmul.bf16.gmra.mxu0 %v835
      %v902 = vpop.f32.mrf.mxu0
      %v903 = vadd.f32 0.0, %v902
      %v904 = vpop.f32.mrf.mxu0
      %v905 = vadd.f32 0.0, %v904
      %906 = vmatmul.bf16.gmra.mxu0 %v836
      %v907 = vpop.f32.mrf.mxu0
      %v908 = vadd.f32 0.0, %v907
      %v909 = vpop.f32.mrf.mxu0
      %v910 = vadd.f32 0.0, %v909
      %911 = vmatmul.bf16.gmra.mxu0 %v837
      %v912 = vpop.f32.mrf.mxu0
      %v913 = vadd.f32 0.0, %v912
      %v914 = vpop.f32.mrf.mxu0
      %v915 = vadd.f32 0.0, %v914
      %916 = vmatmul.bf16.gmra.mxu0 %v838
      %v917 = vpop.f32.mrf.mxu0
      %v918 = vadd.f32 0.0, %v917
      %v919 = vpop.f32.mrf.mxu0
      %v920 = vadd.f32 0.0, %v919
      %921 = vmatmul.bf16.gmra.mxu0 %v839
      %v922 = vpop.f32.mrf.mxu0
      %v923 = vadd.f32 0.0, %v922
      %v924 = vpop.f32.mrf.mxu0
      %925 = vdwg.mxu0
      %v926 = vadd.f32 %v796, %v903
      %v927 = vadd.f32 %v798, %v905
      %v928 = vadd.f32 %v801, %v908
      %v929 = vadd.f32 %v803, %v910
      %v930 = vadd.f32 %v806, %v913
      %v931 = vadd.f32 %v808, %v915
      %v932 = vadd.f32 %v811, %v918
      %v933 = vadd.f32 %v813, %v920
      %v934 = vadd.f32 %v816, %v923
      %v935 = vld [vmem:[#allocation2 + $0x4] sm:$0x8]
      %v936 = vld [vmem:[#allocation2 + $0x8] sm:$0xf]
      %v937 = vld [vmem:[#allocation2 + $0xc] sm:$0xf]
      %v938 = vld [vmem:[#allocation2 + $0x10] sm:$0xf]
      %v939 = vld [vmem:[#allocation2 + $0x14] sm:$0xf]
      %v940 = vld [vmem:[#allocation2 + $0x18] sm:$0xf]
      %v941 = vld [vmem:[#allocation2 + $0x1c] sm:$0xf]
      %v942 = vld [vmem:[#allocation2 + $0x20] sm:$0xf]
      %v943 = vld [vmem:[#allocation2 + $0x24] sm:$0xf]
      %v944 = vld [vmem:[#allocation2 + $0x28] sm:$0xf]
      %v945 = vld [vmem:[%s2 + $0xc0] sm:$0xf]
      %v946 = vld [vmem:[%s2 + $0xc4] sm:$0xf]
      %v947 = vld [vmem:[%s2 + $0xc8] sm:$0xf]
      %v948 = vld [vmem:[%s2 + $0xcc] sm:$0xf]
      %v949 = vld [vmem:[%s2 + $0xd0] sm:$0xf]
      %v950 = vld [vmem:[%s2 + $0xd4] sm:$0xf]
      %v951 = vld [vmem:[%s2 + $0xd8] sm:$0xf]
      %v952 = vld [vmem:[%s2 + $0xdc] sm:$0xf]
      %v953 = vld [vmem:[%s2 + $0xe0] sm:$0xf]
      %v954 = vld [vmem:[%s2 + $0xe4] sm:$0xf]
      %v955 = vld [vmem:[%s2 + $0xe8] sm:$0xf]
      %v956 = vld [vmem:[%s2 + $0xec] sm:$0xf]
      %v957 = vld [vmem:[%s2 + $0xf0] sm:$0xf]
      %v958 = vld [vmem:[%s2 + $0xf4] sm:$0xf]
      %v959 = vld [vmem:[%s2 + $0xf8] sm:$0xf]
      %v960 = vld [vmem:[%s2 + $0xfc] sm:$0xf]
      %v971 = vunpack.c.l.b16 %v935
      %v972 = vunpack.c.l.b16 %v936
      %v973 = vunpack.c.l.b16 %v937
      %v974 = vunpack.c.l.b16 %v938
      %v975 = vunpack.c.l.b16 %v939
      %v976 = vunpack.c.l.b16 %v940
      %v977 = vunpack.c.l.b16 %v941
      %v978 = vunpack.c.l.b16 %v942
      %v979 = vunpack.c.l.b16 %v943
      %v980 = vunpack.c.l.b16 %v944
      %v981 = vpack.c.b16 %v972, %v971
      %v982 = vpack.c.b16 %v974, %v973
      %v983 = vpack.c.b16 %v976, %v975
      %v984 = vpack.c.b16 %v978, %v977
      %v985 = vpack.c.b16 %v980, %v979
      %v987 = vshrl.u32 %v981, 16
      %v989 = vrot.slane %v987, 3
      %v990 = vshll.u32 %v981, 16
      %v992 = vrot.slane %v990, 4
      %v993 = vor.u32 %v989, %v992
      %v995 = vshrl.u32 %v982, 16
      %v997 = vrot.slane %v995, 3
      %v998 = vshll.u32 %v982, 16
      %v1000 = vrot.slane %v998, 4
      %v1001 = vor.u32 %v997, %v1000
      %v1002 = vsel %vm589, %v993, %v1001
      %v1004 = vshrl.u32 %v983, 16
      %v1006 = vrot.slane %v1004, 3
      %v1007 = vshll.u32 %v983, 16
      %v1009 = vrot.slane %v1007, 4
      %v1010 = vor.u32 %v1006, %v1009
      %v1011 = vsel %vm589, %v1001, %v1010
      %v1013 = vshrl.u32 %v984, 16
      %v1015 = vrot.slane %v1013, 3
      %v1016 = vshll.u32 %v984, 16
      %v1018 = vrot.slane %v1016, 4
      %v1019 = vor.u32 %v1015, %v1018
      %v1020 = vsel %vm589, %v1010, %v1019
      %v1022 = vshrl.u32 %v985, 16
      %v1024 = vrot.slane %v1022, 3
      %v1025 = vshll.u32 %v985, 16
      %v1027 = vrot.slane %v1025, 4
      %v1028 = vor.u32 %v1024, %v1027
      %v1029 = vsel %vm589, %v1019, %v1028
      %v1051 = vunpack.c.l.b16 %v945
      %v1052 = vunpack.c.l.b16 %v946
      %v1053 = vunpack.c.l.b16 %v947
      %v1054 = vunpack.c.l.b16 %v948
      %v1055 = vunpack.c.l.b16 %v949
      %v1056 = vunpack.c.l.b16 %v950
      %v1057 = vunpack.c.l.b16 %v951
      %v1058 = vunpack.c.l.b16 %v952
      %v1059 = vunpack.c.l.b16 %v953
      %v1060 = vunpack.c.l.b16 %v954
      %v1061 = vunpack.c.l.b16 %v955
      %v1062 = vunpack.c.l.b16 %v956
      %v1063 = vunpack.c.l.b16 %v957
      %v1064 = vunpack.c.l.b16 %v958
      %v1065 = vunpack.c.l.b16 %v959
      %v1066 = vunpack.c.l.b16 %v960
      %v1067 = vpack.c.b16 %v1052, %v1051
      %v1068 = vpack.c.b16 %v1054, %v1053
      %v1069 = vpack.c.b16 %v1056, %v1055
      %v1070 = vpack.c.b16 %v1058, %v1057
      %v1071 = vpack.c.b16 %v1060, %v1059
      %v1072 = vpack.c.b16 %v1062, %v1061
      %v1073 = vpack.c.b16 %v1064, %v1063
      %v1074 = vpack.c.b16 %v1066, %v1065
      %1083 = vmatpush.bf16.msra.mxu0 %v1074
      %1084 = vmatpush.bf16.msra.mxu0 %v1073
      %1085 = vmatpush.bf16.msra.mxu0 %v1072
      %1086 = vmatpush.bf16.msra.mxu0 %v1071
      %1087 = vmatpush.bf16.msra.mxu0 %v1070
      %1088 = vmatpush.bf16.msra.mxu0 %v1069
      %1089 = vmatpush.bf16.msra.mxu0 %v1068
      %1090 = vmatpush.bf16.msra.mxu0 %v1067
      %1091 = vmatmul.bf16.gmra.mxu0 %v1002
      %v1092 = vpop.f32.mrf.mxu0
      %v1093 = vadd.f32 0.0, %v1092
      %v1094 = vpop.f32.mrf.mxu0
      %v1095 = vadd.f32 0.0, %v1094
      %1096 = vmatmul.bf16.gmra.mxu0 %v1011
      %v1097 = vpop.f32.mrf.mxu0
      %v1098 = vadd.f32 0.0, %v1097
      %v1099 = vpop.f32.mrf.mxu0
      %v1100 = vadd.f32 0.0, %v1099
      %1101 = vmatmul.bf16.gmra.mxu0 %v1020
      %v1102 = vpop.f32.mrf.mxu0
      %v1103 = vadd.f32 0.0, %v1102
      %v1104 = vpop.f32.mrf.mxu0
      %v1105 = vadd.f32 0.0, %v1104
      %1106 = vmatmul.bf16.gmra.mxu0 %v1029
      %v1107 = vpop.f32.mrf.mxu0
      %v1108 = vadd.f32 0.0, %v1107
      %v1109 = vpop.f32.mrf.mxu0
      %v1110 = vadd.f32 0.0, %v1109
      %1111 = vmatmul.bf16.gmra.mxu0 %v1028
      %v1112 = vpop.f32.mrf.mxu0
      %v1113 = vadd.f32 0.0, %v1112
      %v1114 = vpop.f32.mrf.mxu0
      %1115 = vdwg.mxu0
      %v1116 = vadd.f32 %v926, %v1093
      %v1117 = vadd.f32 %v927, %v1095
      %v1118 = vadd.f32 %v928, %v1098
      %v1119 = vadd.f32 %v929, %v1100
      %v1120 = vadd.f32 %v930, %v1103
      %v1121 = vadd.f32 %v931, %v1105
      %v1122 = vadd.f32 %v932, %v1108
      %v1123 = vadd.f32 %v933, %v1110
      %v1124 = vadd.f32 %v934, %v1113
      %v1125 = vld [vmem:[%s2 + $0x100] sm:$0xf]
      %v1126 = vld [vmem:[%s2 + $0x104] sm:$0xf]
      %v1127 = vld [vmem:[%s2 + $0x108] sm:$0xf]
      %v1128 = vld [vmem:[%s2 + $0x10c] sm:$0xf]
      %v1129 = vld [vmem:[%s2 + $0x110] sm:$0xf]
      %v1130 = vld [vmem:[%s2 + $0x114] sm:$0xf]
      %v1131 = vld [vmem:[%s2 + $0x118] sm:$0xf]
      %v1132 = vld [vmem:[%s2 + $0x11c] sm:$0xf]
      %v1133 = vld [vmem:[%s2 + $0x120] sm:$0xf]
      %v1134 = vld [vmem:[%s2 + $0x124] sm:$0xf]
      %v1135 = vld [vmem:[%s2 + $0x128] sm:$0xf]
      %v1136 = vld [vmem:[%s2 + $0x12c] sm:$0xf]
      %v1137 = vld [vmem:[%s2 + $0x130] sm:$0xf]
      %v1138 = vld [vmem:[%s2 + $0x134] sm:$0xf]
      %v1139 = vld [vmem:[%s2 + $0x138] sm:$0xf]
      %v1140 = vld [vmem:[%s2 + $0x13c] sm:$0xf]
      %v1141 = vpack.c.b16 %v973, %v972
      %v1142 = vpack.c.b16 %v975, %v974
      %v1143 = vpack.c.b16 %v977, %v976
      %v1144 = vpack.c.b16 %v979, %v978
      %v1145 = vpack.c.b16 %v980, %v980
      %v1167 = vunpack.c.l.b16 %v1125
      %v1168 = vunpack.c.l.b16 %v1126
      %v1169 = vunpack.c.l.b16 %v1127
      %v1170 = vunpack.c.l.b16 %v1128
      %v1171 = vunpack.c.l.b16 %v1129
      %v1172 = vunpack.c.l.b16 %v1130
      %v1173 = vunpack.c.l.b16 %v1131
      %v1174 = vunpack.c.l.b16 %v1132
      %v1175 = vunpack.c.l.b16 %v1133
      %v1176 = vunpack.c.l.b16 %v1134
      %v1177 = vunpack.c.l.b16 %v1135
      %v1178 = vunpack.c.l.b16 %v1136
      %v1179 = vunpack.c.l.b16 %v1137
      %v1180 = vunpack.c.l.b16 %v1138
      %v1181 = vunpack.c.l.b16 %v1139
      %v1182 = vunpack.c.l.b16 %v1140
      %v1183 = vpack.c.b16 %v1168, %v1167
      %v1184 = vpack.c.b16 %v1170, %v1169
      %v1185 = vpack.c.b16 %v1172, %v1171
      %v1186 = vpack.c.b16 %v1174, %v1173
      %v1187 = vpack.c.b16 %v1176, %v1175
      %v1188 = vpack.c.b16 %v1178, %v1177
      %v1189 = vpack.c.b16 %v1180, %v1179
      %v1190 = vpack.c.b16 %v1182, %v1181
      %1199 = vmatpush.bf16.msra.mxu0 %v1190
      %1200 = vmatpush.bf16.msra.mxu0 %v1189
      %1201 = vmatpush.bf16.msra.mxu0 %v1188
      %1202 = vmatpush.bf16.msra.mxu0 %v1187
      %1203 = vmatpush.bf16.msra.mxu0 %v1186
      %1204 = vmatpush.bf16.msra.mxu0 %v1185
      %1205 = vmatpush.bf16.msra.mxu0 %v1184
      %1206 = vmatpush.bf16.msra.mxu0 %v1183
      %1207 = vmatmul.bf16.gmra.mxu0 %v1141
      %v1208 = vpop.f32.mrf.mxu0
      %v1209 = vadd.f32 0.0, %v1208
      %v1210 = vpop.f32.mrf.mxu0
      %v1211 = vadd.f32 0.0, %v1210
      %1212 = vmatmul.bf16.gmra.mxu0 %v1142
      %v1213 = vpop.f32.mrf.mxu0
      %v1214 = vadd.f32 0.0, %v1213
      %v1215 = vpop.f32.mrf.mxu0
      %v1216 = vadd.f32 0.0, %v1215
      %1217 = vmatmul.bf16.gmra.mxu0 %v1143
      %v1218 = vpop.f32.mrf.mxu0
      %v1219 = vadd.f32 0.0, %v1218
      %v1220 = vpop.f32.mrf.mxu0
      %v1221 = vadd.f32 0.0, %v1220
      %1222 = vmatmul.bf16.gmra.mxu0 %v1144
      %v1223 = vpop.f32.mrf.mxu0
      %v1224 = vadd.f32 0.0, %v1223
      %v1225 = vpop.f32.mrf.mxu0
      %v1226 = vadd.f32 0.0, %v1225
      %1227 = vmatmul.bf16.gmra.mxu0 %v1145
      %v1228 = vpop.f32.mrf.mxu0
      %v1229 = vadd.f32 0.0, %v1228
      %v1230 = vpop.f32.mrf.mxu0
      %1231 = vdwg.mxu0
      %v1232 = vadd.f32 %v1116, %v1209
      %v1233 = vadd.f32 %v1117, %v1211
      %v1234 = vadd.f32 %v1118, %v1214
      %v1235 = vadd.f32 %v1119, %v1216
      %v1236 = vadd.f32 %v1120, %v1219
      %v1237 = vadd.f32 %v1121, %v1221
      %v1238 = vadd.f32 %v1122, %v1224
      %v1239 = vadd.f32 %v1123, %v1226
      %v1240 = vadd.f32 %v1124, %v1229
      %v1241 = vld [vmem:[#allocation2 + $0x8] sm:$0xf]
      %v1242 = vld [vmem:[#allocation2 + $0xc] sm:$0xf]
      %v1243 = vld [vmem:[#allocation2 + $0x10] sm:$0xf]
      %v1244 = vld [vmem:[#allocation2 + $0x14] sm:$0xf]
      %v1245 = vld [vmem:[#allocation2 + $0x18] sm:$0xf]
      %v1246 = vld [vmem:[#allocation2 + $0x1c] sm:$0xf]
      %v1247 = vld [vmem:[#allocation2 + $0x20] sm:$0xf]
      %v1248 = vld [vmem:[#allocation2 + $0x24] sm:$0xf]
      %v1249 = vld [vmem:[#allocation2 + $0x28] sm:$0xf]
      %v1250 = vld [vmem:[#allocation2 + $0x2c] sm:$0x1]
      %v1251 = vld [vmem:[%s2 + $0x140] sm:$0xf]
      %v1252 = vld [vmem:[%s2 + $0x144] sm:$0xf]
      %v1253 = vld [vmem:[%s2 + $0x148] sm:$0xf]
      %v1254 = vld [vmem:[%s2 + $0x14c] sm:$0xf]
      %v1255 = vld [vmem:[%s2 + $0x150] sm:$0xf]
      %v1256 = vld [vmem:[%s2 + $0x154] sm:$0xf]
      %v1257 = vld [vmem:[%s2 + $0x158] sm:$0xf]
      %v1258 = vld [vmem:[%s2 + $0x15c] sm:$0xf]
      %v1259 = vld [vmem:[%s2 + $0x160] sm:$0xf]
      %v1260 = vld [vmem:[%s2 + $0x164] sm:$0xf]
      %v1261 = vld [vmem:[%s2 + $0x168] sm:$0xf]
      %v1262 = vld [vmem:[%s2 + $0x16c] sm:$0xf]
      %v1263 = vld [vmem:[%s2 + $0x170] sm:$0xf]
      %v1264 = vld [vmem:[%s2 + $0x174] sm:$0xf]
      %v1265 = vld [vmem:[%s2 + $0x178] sm:$0xf]
      %v1266 = vld [vmem:[%s2 + $0x17c] sm:$0xf]
      %v1277 = vunpack.c.l.b16 %v1241
      %v1278 = vunpack.c.l.b16 %v1242
      %v1279 = vunpack.c.l.b16 %v1243
      %v1280 = vunpack.c.l.b16 %v1244
      %v1281 = vunpack.c.l.b16 %v1245
      %v1282 = vunpack.c.l.b16 %v1246
      %v1283 = vunpack.c.l.b16 %v1247
      %v1284 = vunpack.c.l.b16 %v1248
      %v1285 = vunpack.c.l.b16 %v1249
      %v1286 = vunpack.c.l.b16 %v1250
      %v1287 = vpack.c.b16 %v1278, %v1277
      %v1288 = vpack.c.b16 %v1280, %v1279
      %v1289 = vpack.c.b16 %v1282, %v1281
      %v1290 = vpack.c.b16 %v1284, %v1283
      %v1291 = vpack.c.b16 %v1286, %v1285
      %vm1292 = vsmask.f32 7424
      %v1294 = vshrl.u32 %v1287, 16
      %v1296 = vshll.u32 %v1287, 16
      %v1298 = vrot.slane %v1296, 1
      %v1299 = vor.u32 %v1294, %v1298
      %v1301 = vshll.u32 %v1288, 16
      %v1303 = vrot.slane %v1301, 1
      %v1304 = vsel %vm1292, %v1299, %v1303
      %v1305 = vshrl.u32 %v1288, 16
      %v1307 = vor.u32 %v1305, %v1303
      %v1309 = vshll.u32 %v1289, 16
      %v1311 = vrot.slane %v1309, 1
      %v1312 = vsel %vm1292, %v1307, %v1311
      %v1313 = vshrl.u32 %v1289, 16
      %v1315 = vor.u32 %v1313, %v1311
      %v1317 = vshll.u32 %v1290, 16
      %v1319 = vrot.slane %v1317, 1
      %v1320 = vsel %vm1292, %v1315, %v1319
      %v1321 = vshrl.u32 %v1290, 16
      %v1323 = vor.u32 %v1321, %v1319
      %v1325 = vshll.u32 %v1291, 16
      %v1327 = vrot.slane %v1325, 1
      %v1328 = vsel %vm1292, %v1323, %v1327
      %v1329 = vshrl.u32 %v1291, 16
      %v1331 = vor.u32 %v1329, %v1327
      %v1353 = vunpack.c.l.b16 %v1251
      %v1354 = vunpack.c.l.b16 %v1252
      %v1355 = vunpack.c.l.b16 %v1253
      %v1356 = vunpack.c.l.b16 %v1254
      %v1357 = vunpack.c.l.b16 %v1255
      %v1358 = vunpack.c.l.b16 %v1256
      %v1359 = vunpack.c.l.b16 %v1257
      %v1360 = vunpack.c.l.b16 %v1258
      %v1361 = vunpack.c.l.b16 %v1259
      %v1362 = vunpack.c.l.b16 %v1260
      %v1363 = vunpack.c.l.b16 %v1261
      %v1364 = vunpack.c.l.b16 %v1262
      %v1365 = vunpack.c.l.b16 %v1263
      %v1366 = vunpack.c.l.b16 %v1264
      %v1367 = vunpack.c.l.b16 %v1265
      %v1368 = vunpack.c.l.b16 %v1266
      %v1369 = vpack.c.b16 %v1354, %v1353
      %v1370 = vpack.c.b16 %v1356, %v1355
      %v1371 = vpack.c.b16 %v1358, %v1357
      %v1372 = vpack.c.b16 %v1360, %v1359
      %v1373 = vpack.c.b16 %v1362, %v1361
      %v1374 = vpack.c.b16 %v1364, %v1363
      %v1375 = vpack.c.b16 %v1366, %v1365
      %v1376 = vpack.c.b16 %v1368, %v1367
      %1385 = vmatpush.bf16.msra.mxu0 %v1376
      %1386 = vmatpush.bf16.msra.mxu0 %v1375
      %1387 = vmatpush.bf16.msra.mxu0 %v1374
      %1388 = vmatpush.bf16.msra.mxu0 %v1373
      %1389 = vmatpush.bf16.msra.mxu0 %v1372
      %1390 = vmatpush.bf16.msra.mxu0 %v1371
      %1391 = vmatpush.bf16.msra.mxu0 %v1370
      %1392 = vmatpush.bf16.msra.mxu0 %v1369
      %1393 = vmatmul.bf16.gmra.mxu0 %v1304
      %v1394 = vpop.f32.mrf.mxu0
      %v1395 = vadd.f32 0.0, %v1394
      %v1396 = vpop.f32.mrf.mxu0
      %v1397 = vadd.f32 0.0, %v1396
      %1398 = vmatmul.bf16.gmra.mxu0 %v1312
      %v1399 = vpop.f32.mrf.mxu0
      %v1400 = vadd.f32 0.0, %v1399
      %v1401 = vpop.f32.mrf.mxu0
      %v1402 = vadd.f32 0.0, %v1401
      %1403 = vmatmul.bf16.gmra.mxu0 %v1320
      %v1404 = vpop.f32.mrf.mxu0
      %v1405 = vadd.f32 0.0, %v1404
      %v1406 = vpop.f32.mrf.mxu0
      %v1407 = vadd.f32 0.0, %v1406
      %1408 = vmatmul.bf16.gmra.mxu0 %v1328
      %v1409 = vpop.f32.mrf.mxu0
      %v1410 = vadd.f32 0.0, %v1409
      %v1411 = vpop.f32.mrf.mxu0
      %v1412 = vadd.f32 0.0, %v1411
      %1413 = vmatmul.bf16.gmra.mxu0 %v1331
      %v1414 = vpop.f32.mrf.mxu0
      %v1415 = vadd.f32 0.0, %v1414
      %v1416 = vpop.f32.mrf.mxu0
      %1417 = vdwg.mxu0
      %v1418 = vadd.f32 %v1232, %v1395
      %v1419 = vadd.f32 %v1233, %v1397
      %v1420 = vadd.f32 %v1234, %v1400
      %v1421 = vadd.f32 %v1235, %v1402
      %v1422 = vadd.f32 %v1236, %v1405
      %v1423 = vadd.f32 %v1237, %v1407
      %v1424 = vadd.f32 %v1238, %v1410
      %v1425 = vadd.f32 %v1239, %v1412
      %v1426 = vadd.f32 %v1240, %v1415
      %v1427 = vld [vmem:[#allocation2 + $0x2c] sm:$0xf]
      %v1428 = vld [vmem:[%s2 + $0x180] sm:$0xf]
      %v1429 = vld [vmem:[%s2 + $0x184] sm:$0xf]
      %v1430 = vld [vmem:[%s2 + $0x188] sm:$0xf]
      %v1431 = vld [vmem:[%s2 + $0x18c] sm:$0xf]
      %v1432 = vld [vmem:[%s2 + $0x190] sm:$0xf]
      %v1433 = vld [vmem:[%s2 + $0x194] sm:$0xf]
      %v1434 = vld [vmem:[%s2 + $0x198] sm:$0xf]
      %v1435 = vld [vmem:[%s2 + $0x19c] sm:$0xf]
      %v1436 = vld [vmem:[%s2 + $0x1a0] sm:$0xf]
      %v1437 = vld [vmem:[%s2 + $0x1a4] sm:$0xf]
      %v1438 = vld [vmem:[%s2 + $0x1a8] sm:$0xf]
      %v1439 = vld [vmem:[%s2 + $0x1ac] sm:$0xf]
      %v1440 = vld [vmem:[%s2 + $0x1b0] sm:$0xf]
      %v1441 = vld [vmem:[%s2 + $0x1b4] sm:$0xf]
      %v1442 = vld [vmem:[%s2 + $0x1b8] sm:$0xf]
      %v1443 = vld [vmem:[%s2 + $0x1bc] sm:$0xf]
      %v1445 = vunpack.c.l.b16 %v1427
      %v1446 = vpack.c.b16 %v1279, %v1278
      %v1447 = vpack.c.b16 %v1281, %v1280
      %v1448 = vpack.c.b16 %v1283, %v1282
      %v1449 = vpack.c.b16 %v1285, %v1284
      %v1450 = vpack.c.b16 %v1445, %v1445
      %v1472 = vunpack.c.l.b16 %v1428
      %v1473 = vunpack.c.l.b16 %v1429
      %v1474 = vunpack.c.l.b16 %v1430
      %v1475 = vunpack.c.l.b16 %v1431
      %v1476 = vunpack.c.l.b16 %v1432
      %v1477 = vunpack.c.l.b16 %v1433
      %v1478 = vunpack.c.l.b16 %v1434
      %v1479 = vunpack.c.l.b16 %v1435
      %v1480 = vunpack.c.l.b16 %v1436
      %v1481 = vunpack.c.l.b16 %v1437
      %v1482 = vunpack.c.l.b16 %v1438
      %v1483 = vunpack.c.l.b16 %v1439
      %v1484 = vunpack.c.l.b16 %v1440
      %v1485 = vunpack.c.l.b16 %v1441
      %v1486 = vunpack.c.l.b16 %v1442
      %v1487 = vunpack.c.l.b16 %v1443
      %v1488 = vpack.c.b16 %v1473, %v1472
      %v1489 = vpack.c.b16 %v1475, %v1474
      %v1490 = vpack.c.b16 %v1477, %v1476
      %v1491 = vpack.c.b16 %v1479, %v1478
      %v1492 = vpack.c.b16 %v1481, %v1480
      %v1493 = vpack.c.b16 %v1483, %v1482
      %v1494 = vpack.c.b16 %v1485, %v1484
      %v1495 = vpack.c.b16 %v1487, %v1486
      %1504 = vmatpush.bf16.msra.mxu0 %v1495
      %1505 = vmatpush.bf16.msra.mxu0 %v1494
      %1506 = vmatpush.bf16.msra.mxu0 %v1493
      %1507 = vmatpush.bf16.msra.mxu0 %v1492
      %1508 = vmatpush.bf16.msra.mxu0 %v1491
      %1509 = vmatpush.bf16.msra.mxu0 %v1490
      %1510 = vmatpush.bf16.msra.mxu0 %v1489
      %1511 = vmatpush.bf16.msra.mxu0 %v1488
      %1512 = vmatmul.bf16.gmra.mxu0 %v1446
      %v1513 = vpop.f32.mrf.mxu0
      %v1514 = vadd.f32 0.0, %v1513
      %v1515 = vpop.f32.mrf.mxu0
      %v1516 = vadd.f32 0.0, %v1515
      %1517 = vmatmul.bf16.gmra.mxu0 %v1447
      %v1518 = vpop.f32.mrf.mxu0
      %v1519 = vadd.f32 0.0, %v1518
      %v1520 = vpop.f32.mrf.mxu0
      %v1521 = vadd.f32 0.0, %v1520
      %1522 = vmatmul.bf16.gmra.mxu0 %v1448
      %v1523 = vpop.f32.mrf.mxu0
      %v1524 = vadd.f32 0.0, %v1523
      %v1525 = vpop.f32.mrf.mxu0
      %v1526 = vadd.f32 0.0, %v1525
      %1527 = vmatmul.bf16.gmra.mxu0 %v1449
      %v1528 = vpop.f32.mrf.mxu0
      %v1529 = vadd.f32 0.0, %v1528
      %v1530 = vpop.f32.mrf.mxu0
      %v1531 = vadd.f32 0.0, %v1530
      %1532 = vmatmul.bf16.gmra.mxu0 %v1450
      %v1533 = vpop.f32.mrf.mxu0
      %v1534 = vadd.f32 0.0, %v1533
      %v1535 = vpop.f32.mrf.mxu0
      %1536 = vdwg.mxu0
      %v1537 = vadd.f32 %v1418, %v1514
      %v1538 = vadd.f32 %v1419, %v1516
      %v1539 = vadd.f32 %v1420, %v1519
      %v1540 = vadd.f32 %v1421, %v1521
      %v1541 = vadd.f32 %v1422, %v1524
      %v1542 = vadd.f32 %v1423, %v1526
      %v1543 = vadd.f32 %v1424, %v1529
      %v1544 = vadd.f32 %v1425, %v1531
      %v1545 = vadd.f32 %v1426, %v1534
      %v1546 = vld [vmem:[#allocation2 + $0xc] sm:$0xf]
      %v1547 = vld [vmem:[#allocation2 + $0x10] sm:$0xf]
      %v1548 = vld [vmem:[#allocation2 + $0x14] sm:$0xf]
      %v1549 = vld [vmem:[#allocation2 + $0x18] sm:$0xf]
      %v1550 = vld [vmem:[#allocation2 + $0x1c] sm:$0xf]
      %v1551 = vld [vmem:[#allocation2 + $0x20] sm:$0xf]
      %v1552 = vld [vmem:[#allocation2 + $0x24] sm:$0xf]
      %v1553 = vld [vmem:[#allocation2 + $0x28] sm:$0xf]
      %v1554 = vld [vmem:[#allocation2 + $0x2c] sm:$0xf]
      %v1555 = vld [vmem:[#allocation2 + $0x30] sm:$0x1]
      %v1556 = vld [vmem:[%s2 + $0x1c0] sm:$0xf]
      %v1557 = vld [vmem:[%s2 + $0x1c4] sm:$0xf]
      %v1558 = vld [vmem:[%s2 + $0x1c8] sm:$0xf]
      %v1559 = vld [vmem:[%s2 + $0x1cc] sm:$0xf]
      %v1560 = vld [vmem:[%s2 + $0x1d0] sm:$0xf]
      %v1561 = vld [vmem:[%s2 + $0x1d4] sm:$0xf]
      %v1562 = vld [vmem:[%s2 + $0x1d8] sm:$0xf]
      %v1563 = vld [vmem:[%s2 + $0x1dc] sm:$0xf]
      %v1564 = vld [vmem:[%s2 + $0x1e0] sm:$0xf]
      %v1565 = vld [vmem:[%s2 + $0x1e4] sm:$0xf]
      %v1566 = vld [vmem:[%s2 + $0x1e8] sm:$0xf]
      %v1567 = vld [vmem:[%s2 + $0x1ec] sm:$0xf]
      %v1568 = vld [vmem:[%s2 + $0x1f0] sm:$0xf]
      %v1569 = vld [vmem:[%s2 + $0x1f4] sm:$0xf]
      %v1570 = vld [vmem:[%s2 + $0x1f8] sm:$0xf]
      %v1571 = vld [vmem:[%s2 + $0x1fc] sm:$0xf]
      %v1582 = vunpack.c.l.b16 %v1546
      %v1583 = vunpack.c.l.b16 %v1547
      %v1584 = vunpack.c.l.b16 %v1548
      %v1585 = vunpack.c.l.b16 %v1549
      %v1586 = vunpack.c.l.b16 %v1550
      %v1587 = vunpack.c.l.b16 %v1551
      %v1588 = vunpack.c.l.b16 %v1552
      %v1589 = vunpack.c.l.b16 %v1553
      %v1590 = vunpack.c.l.b16 %v1554
      %v1591 = vunpack.c.l.b16 %v1555
      %v1592 = vpack.c.b16 %v1583, %v1582
      %v1593 = vpack.c.b16 %v1585, %v1584
      %v1594 = vpack.c.b16 %v1587, %v1586
      %v1595 = vpack.c.b16 %v1589, %v1588
      %v1596 = vpack.c.b16 %v1591, %v1590
      %v1598 = vshrl.u32 %v1592, 16
      %v1600 = vshll.u32 %v1592, 16
      %v1602 = vrot.slane %v1600, 1
      %v1603 = vor.u32 %v1598, %v1602
      %v1605 = vshll.u32 %v1593, 16
      %v1607 = vrot.slane %v1605, 1
      %v1608 = vsel %vm1292, %v1603, %v1607
      %v1609 = vshrl.u32 %v1593, 16
      %v1611 = vor.u32 %v1609, %v1607
      %v1613 = vshll.u32 %v1594, 16
      %v1615 = vrot.slane %v1613, 1
      %v1616 = vsel %vm1292, %v1611, %v1615
      %v1617 = vshrl.u32 %v1594, 16
      %v1619 = vor.u32 %v1617, %v1615
      %v1621 = vshll.u32 %v1595, 16
      %v1623 = vrot.slane %v1621, 1
      %v1624 = vsel %vm1292, %v1619, %v1623
      %v1625 = vshrl.u32 %v1595, 16
      %v1627 = vor.u32 %v1625, %v1623
      %v1629 = vshll.u32 %v1596, 16
      %v1631 = vrot.slane %v1629, 1
      %v1632 = vsel %vm1292, %v1627, %v1631
      %v1633 = vshrl.u32 %v1596, 16
      %v1635 = vor.u32 %v1633, %v1631
      %v1657 = vunpack.c.l.b16 %v1556
      %v1658 = vunpack.c.l.b16 %v1557
      %v1659 = vunpack.c.l.b16 %v1558
      %v1660 = vunpack.c.l.b16 %v1559
      %v1661 = vunpack.c.l.b16 %v1560
      %v1662 = vunpack.c.l.b16 %v1561
      %v1663 = vunpack.c.l.b16 %v1562
      %v1664 = vunpack.c.l.b16 %v1563
      %v1665 = vunpack.c.l.b16 %v1564
      %v1666 = vunpack.c.l.b16 %v1565
      %v1667 = vunpack.c.l.b16 %v1566
      %v1668 = vunpack.c.l.b16 %v1567
      %v1669 = vunpack.c.l.b16 %v1568
      %v1670 = vunpack.c.l.b16 %v1569
      %v1671 = vunpack.c.l.b16 %v1570
      %v1672 = vunpack.c.l.b16 %v1571
      %v1673 = vpack.c.b16 %v1658, %v1657
      %v1674 = vpack.c.b16 %v1660, %v1659
      %v1675 = vpack.c.b16 %v1662, %v1661
      %v1676 = vpack.c.b16 %v1664, %v1663
      %v1677 = vpack.c.b16 %v1666, %v1665
      %v1678 = vpack.c.b16 %v1668, %v1667
      %v1679 = vpack.c.b16 %v1670, %v1669
      %v1680 = vpack.c.b16 %v1672, %v1671
      %1689 = vmatpush.bf16.msra.mxu0 %v1680
      %1690 = vmatpush.bf16.msra.mxu0 %v1679
      %1691 = vmatpush.bf16.msra.mxu0 %v1678
      %1692 = vmatpush.bf16.msra.mxu0 %v1677
      %1693 = vmatpush.bf16.msra.mxu0 %v1676
      %1694 = vmatpush.bf16.msra.mxu0 %v1675
      %1695 = vmatpush.bf16.msra.mxu0 %v1674
      %1696 = vmatpush.bf16.msra.mxu0 %v1673
      %1697 = vmatmul.bf16.gmra.mxu0 %v1608
      %v1698 = vpop.f32.mrf.mxu0
      %v1699 = vadd.f32 0.0, %v1698
      %v1700 = vpop.f32.mrf.mxu0
      %v1701 = vadd.f32 0.0, %v1700
      %1702 = vmatmul.bf16.gmra.mxu0 %v1616
      %v1703 = vpop.f32.mrf.mxu0
      %v1704 = vadd.f32 0.0, %v1703
      %v1705 = vpop.f32.mrf.mxu0
      %v1706 = vadd.f32 0.0, %v1705
      %1707 = vmatmul.bf16.gmra.mxu0 %v1624
      %v1708 = vpop.f32.mrf.mxu0
      %v1709 = vadd.f32 0.0, %v1708
      %v1710 = vpop.f32.mrf.mxu0
      %v1711 = vadd.f32 0.0, %v1710
      %1712 = vmatmul.bf16.gmra.mxu0 %v1632
      %v1713 = vpop.f32.mrf.mxu0
      %v1714 = vadd.f32 0.0, %v1713
      %v1715 = vpop.f32.mrf.mxu0
      %v1716 = vadd.f32 0.0, %v1715
      %1717 = vmatmul.bf16.gmra.mxu0 %v1635
      %v1718 = vpop.f32.mrf.mxu0
      %v1719 = vadd.f32 0.0, %v1718
      %v1720 = vpop.f32.mrf.mxu0
      %1721 = vdwg.mxu0
      %v1722 = vadd.f32 %v1537, %v1699
      %v1723 = vadd.f32 %v1538, %v1701
      %v1724 = vadd.f32 %v1539, %v1704
      %v1725 = vadd.f32 %v1540, %v1706
      %v1726 = vadd.f32 %v1541, %v1709
      %v1727 = vadd.f32 %v1542, %v1711
      %v1728 = vadd.f32 %v1543, %v1714
      %v1729 = vadd.f32 %v1544, %v1716
      %v1730 = vadd.f32 %v1545, %v1719
      %v1731 = vld [vmem:[#allocation2 + $0xc] sm:$0xe]
      %v1732 = vld [vmem:[%s2 + $0x200] sm:$0xf]
      %v1733 = vld [vmem:[%s2 + $0x204] sm:$0xf]
      %v1734 = vld [vmem:[%s2 + $0x208] sm:$0xf]
      %v1735 = vld [vmem:[%s2 + $0x20c] sm:$0xf]
      %v1736 = vld [vmem:[%s2 + $0x210] sm:$0xf]
      %v1737 = vld [vmem:[%s2 + $0x214] sm:$0xf]
      %v1738 = vld [vmem:[%s2 + $0x218] sm:$0xf]
      %v1739 = vld [vmem:[%s2 + $0x21c] sm:$0xf]
      %v1740 = vld [vmem:[%s2 + $0x220] sm:$0xf]
      %v1741 = vld [vmem:[%s2 + $0x224] sm:$0xf]
      %v1742 = vld [vmem:[%s2 + $0x228] sm:$0xf]
      %v1743 = vld [vmem:[%s2 + $0x22c] sm:$0xf]
      %v1744 = vld [vmem:[%s2 + $0x230] sm:$0xf]
      %v1745 = vld [vmem:[%s2 + $0x234] sm:$0xf]
      %v1746 = vld [vmem:[%s2 + $0x238] sm:$0xf]
      %v1747 = vld [vmem:[%s2 + $0x23c] sm:$0xf]
      %v1749 = vunpack.c.l.b16 %v1731
      %v1750 = vpack.c.b16 %v1583, %v1749
      %vm1751 = vcmask 1046528
      %v1752 = vrot.slane %v1750, 1
      %v1753 = vrot.slane %v1593, 1
      %v1754 = vsel %vm1751, %v1752, %v1753
      %v1755 = vrot.slane %v1594, 1
      %v1756 = vsel %vm1751, %v1753, %v1755
      %v1757 = vrot.slane %v1595, 1
      %v1758 = vsel %vm1751, %v1755, %v1757
      %v1759 = vrot.slane %v1596, 1
      %v1760 = vsel %vm1751, %v1757, %v1759
      %v1782 = vunpack.c.l.b16 %v1732
      %v1783 = vunpack.c.l.b16 %v1733
      %v1784 = vunpack.c.l.b16 %v1734
      %v1785 = vunpack.c.l.b16 %v1735
      %v1786 = vunpack.c.l.b16 %v1736
      %v1787 = vunpack.c.l.b16 %v1737
      %v1788 = vunpack.c.l.b16 %v1738
      %v1789 = vunpack.c.l.b16 %v1739
      %v1790 = vunpack.c.l.b16 %v1740
      %v1791 = vunpack.c.l.b16 %v1741
      %v1792 = vunpack.c.l.b16 %v1742
      %v1793 = vunpack.c.l.b16 %v1743
      %v1794 = vunpack.c.l.b16 %v1744
      %v1795 = vunpack.c.l.b16 %v1745
      %v1796 = vunpack.c.l.b16 %v1746
      %v1797 = vunpack.c.l.b16 %v1747
      %v1798 = vpack.c.b16 %v1783, %v1782
      %v1799 = vpack.c.b16 %v1785, %v1784
      %v1800 = vpack.c.b16 %v1787, %v1786
      %v1801 = vpack.c.b16 %v1789, %v1788
      %v1802 = vpack.c.b16 %v1791, %v1790
      %v1803 = vpack.c.b16 %v1793, %v1792
      %v1804 = vpack.c.b16 %v1795, %v1794
      %v1805 = vpack.c.b16 %v1797, %v1796
      %1814 = vmatpush.bf16.msra.mxu0 %v1805
      %1815 = vmatpush.bf16.msra.mxu0 %v1804
      %1816 = vmatpush.bf16.msra.mxu0 %v1803
      %1817 = vmatpush.bf16.msra.mxu0 %v1802
      %1818 = vmatpush.bf16.msra.mxu0 %v1801
      %1819 = vmatpush.bf16.msra.mxu0 %v1800
      %1820 = vmatpush.bf16.msra.mxu0 %v1799
      %1821 = vmatpush.bf16.msra.mxu0 %v1798
      %1822 = vmatmul.bf16.gmra.mxu0 %v1754
      %v1823 = vpop.f32.mrf.mxu0
      %v1824 = vadd.f32 0.0, %v1823
      %v1825 = vpop.f32.mrf.mxu0
      %v1826 = vadd.f32 0.0, %v1825
      %1827 = vmatmul.bf16.gmra.mxu0 %v1756
      %v1828 = vpop.f32.mrf.mxu0
      %v1829 = vadd.f32 0.0, %v1828
      %v1830 = vpop.f32.mrf.mxu0
      %v1831 = vadd.f32 0.0, %v1830
      %1832 = vmatmul.bf16.gmra.mxu0 %v1758
      %v1833 = vpop.f32.mrf.mxu0
      %v1834 = vadd.f32 0.0, %v1833
      %v1835 = vpop.f32.mrf.mxu0
      %v1836 = vadd.f32 0.0, %v1835
      %1837 = vmatmul.bf16.gmra.mxu0 %v1760
      %v1838 = vpop.f32.mrf.mxu0
      %v1839 = vadd.f32 0.0, %v1838
      %v1840 = vpop.f32.mrf.mxu0
      %v1841 = vadd.f32 0.0, %v1840
      %1842 = vmatmul.bf16.gmra.mxu0 %v1759
      %v1843 = vpop.f32.mrf.mxu0
      %v1844 = vadd.f32 0.0, %v1843
      %v1845 = vpop.f32.mrf.mxu0
      %1846 = vdwg.mxu0
      %v1847 = vadd.f32 %v1722, %v1824
      %v1848 = vadd.f32 %v1723, %v1826
      %v1849 = vadd.f32 %v1724, %v1829
      %v1850 = vadd.f32 %v1725, %v1831
      %v1851 = vadd.f32 %v1726, %v1834
      %v1852 = vadd.f32 %v1727, %v1836
      %v1853 = vadd.f32 %v1728, %v1839
      %v1854 = vadd.f32 %v1729, %v1841
      %v1855 = vadd.f32 %v1730, %v1844
      %v1856 = vld [vmem:[%s3] sm:$0xff]
      %v1857 = vld [vmem:[%s3 + $0x8] sm:$0xff]
      %v1858 = vld [vmem:[%s3 + $0x10] sm:$0xff]
      %v1859 = vld [vmem:[%s3 + $0x18] sm:$0xff]
      %v1860 = vld [vmem:[%s3 + $0x20] sm:$0xff]
      %v1861 = vld [vmem:[%s3 + $0x28] sm:$0xff]
      %v1862 = vld [vmem:[%s3 + $0x30] sm:$0xff]
      %v1863 = vld [vmem:[%s3 + $0x38] sm:$0xff]
      %v1864 = vld [vmem:[%s3 + $0x40] sm:$0xff]
      %1866 = vset.pattern.permute.xlu0 0
      %1867 = vperm.xlu0 %1866, %v1856
      %v1868 = vpop.permute.xlu0 %1867
      %1871 = vset.pattern.permute.xlu0 0
      %1872 = vperm.xlu0 %1871, %v1857
      %v1873 = vpop.permute.xlu0 %1872
      %1876 = vset.pattern.permute.xlu0 0
      %1877 = vperm.xlu0 %1876, %v1858
      %v1878 = vpop.permute.xlu0 %1877
      %1881 = vset.pattern.permute.xlu0 0
      %1882 = vperm.xlu0 %1881, %v1859
      %v1883 = vpop.permute.xlu0 %1882
      %1886 = vset.pattern.permute.xlu0 0
      %1887 = vperm.xlu0 %1886, %v1860
      %v1888 = vpop.permute.xlu0 %1887
      %1891 = vset.pattern.permute.xlu0 0
      %1892 = vperm.xlu0 %1891, %v1861
      %v1893 = vpop.permute.xlu0 %1892
      %1896 = vset.pattern.permute.xlu0 0
      %1897 = vperm.xlu0 %1896, %v1862
      %v1898 = vpop.permute.xlu0 %1897
      %1901 = vset.pattern.permute.xlu0 0
      %1902 = vperm.xlu0 %1901, %v1863
      %v1903 = vpop.permute.xlu0 %1902
      %1906 = vset.pattern.permute.xlu0 0
      %1907 = vperm.xlu0 %1906, %v1864
      %v1908 = vpop.permute.xlu0 %1907
      %v1910 = vmul.f32 %v1847, %v1868
      %v1911 = vmul.f32 %v1848, %v1873
      %v1912 = vmul.f32 %v1849, %v1878
      %v1913 = vmul.f32 %v1850, %v1883
      %v1914 = vmul.f32 %v1851, %v1888
      %v1915 = vmul.f32 %v1852, %v1893
      %v1916 = vmul.f32 %v1853, %v1898
      %v1917 = vmul.f32 %v1854, %v1903
      %v1918 = vmul.f32 %v1855, %v1908
      %v1919 = vpack.c.bf16 %v1910, %v1910
      %v1920 = vpack.c.bf16 %v1911, %v1911
      %v1921 = vpack.c.bf16 %v1912, %v1912
      %v1922 = vpack.c.bf16 %v1913, %v1913
      %v1923 = vpack.c.bf16 %v1914, %v1914
      %v1924 = vpack.c.bf16 %v1915, %v1915
      %v1925 = vpack.c.bf16 %v1916, %v1916
      %v1926 = vpack.c.bf16 %v1917, %v1917
      %v1927 = vpack.c.bf16 %v1918, %v1918
      %1928 = vst [vmem:[%s372] sm:$0xf] %v1919
      %1929 = vst [vmem:[%s372 + $0x4] sm:$0xf] %v1920
      %1930 = vst [vmem:[%s372 + $0x8] sm:$0xf] %v1921
      %1931 = vst [vmem:[%s372 + $0xc] sm:$0xf] %v1922
      %1932 = vst [vmem:[%s372 + $0x10] sm:$0xf] %v1923
      %1933 = vst [vmem:[%s372 + $0x14] sm:$0xf] %v1924
      %1934 = vst [vmem:[%s372 + $0x18] sm:$0xf] %v1925
      %1935 = vst [vmem:[%s372 + $0x1c] sm:$0xf] %v1926
      %1936 = vst [vmem:[%s372 + $0x20] sm:$0xf] %v1927
      %v1937 = vadd.f32 %v1910, %v1911
      %v1938 = vadd.f32 %v1937, %v1912
      %v1939 = vadd.f32 %v1938, %v1913
      %v1940 = vadd.f32 %v1939, %v1914
      %v1941 = vadd.f32 %v1940, %v1915
      %v1942 = vadd.f32 %v1941, %v1916
      %v1943 = vadd.f32 %v1942, %v1917
      %v1944 = vadd.f32 %v1943, %v1918
      %v1945 = vrot.slane %v1944, 4
      %v1946 = vadd.f32 %v1944, %v1945
      %v1947 = vrot.slane %v1946, 2
      %v1948 = vadd.f32 %v1946, %v1947
      %v1949 = vrot.slane %v1948, 1
      %v1950 = vadd.f32 %v1948, %v1949
      %v1951 = vmul.f32 %v1910, %v1910
      %v1952 = vmul.f32 %v1911, %v1911
      %v1953 = vmul.f32 %v1912, %v1912
      %v1954 = vmul.f32 %v1913, %v1913
      %v1955 = vmul.f32 %v1914, %v1914
      %v1956 = vmul.f32 %v1915, %v1915
      %v1957 = vmul.f32 %v1916, %v1916
      %v1958 = vmul.f32 %v1917, %v1917
      %v1959 = vmul.f32 %v1918, %v1918
      %v1960 = vadd.f32 %v1951, %v1952
      %v1961 = vadd.f32 %v1960, %v1953
      %v1962 = vadd.f32 %v1961, %v1954
      %v1963 = vadd.f32 %v1962, %v1955
      %v1964 = vadd.f32 %v1963, %v1956
      %v1965 = vadd.f32 %v1964, %v1957
      %v1966 = vadd.f32 %v1965, %v1958
      %v1967 = vadd.f32 %v1966, %v1959
      %v1968 = vrot.slane %v1967, 4
      %v1969 = vadd.f32 %v1967, %v1968
      %v1970 = vrot.slane %v1969, 2
      %v1971 = vadd.f32 %v1969, %v1970
      %v1972 = vrot.slane %v1971, 1
      %v1973 = vadd.f32 %v1971, %v1972
      %vm1974 = vcmask 1040384
      %v1975 = vsel %vm1974, %v1950, %v1973
      %v1976 = vadd.f32 %v1975, 0.0
      %v1977 = vld [vmem:[%s367] sm:$0xf]
      %v1978 = vld [vmem:[%s367 + $0x4] sm:$0xf]
      %v1979 = vld [vmem:[%s367 + $0x8] sm:$0xf]
      %v1980 = vld [vmem:[%s367 + $0xc] sm:$0xf]
      %v1981 = vld [vmem:[%s367 + $0x10] sm:$0xf]
      %v1982 = vld [vmem:[%s367 + $0x14] sm:$0xf]
      %v1983 = vld [vmem:[%s367 + $0x18] sm:$0xf]
      %v1984 = vld [vmem:[%s367 + $0x1c] sm:$0xf]
      %v1985 = vld [vmem:[%s367 + $0x20] sm:$0xf]
      %v1986 = vld [vmem:[%s5] sm:$0xf]
      %v1987 = vld [vmem:[%s5 + $0x4] sm:$0xf]
      %v1988 = vld [vmem:[%s5 + $0x8] sm:$0xf]
      %v1989 = vld [vmem:[%s5 + $0xc] sm:$0xf]
      %v1990 = vld [vmem:[%s5 + $0x10] sm:$0xf]
      %v1991 = vld [vmem:[%s5 + $0x14] sm:$0xf]
      %v1992 = vld [vmem:[%s5 + $0x18] sm:$0xf]
      %v1993 = vld [vmem:[%s5 + $0x1c] sm:$0xf]
      %v1994 = vld [vmem:[%s5 + $0x20] sm:$0xf]
      %v1995 = vld [vmem:[%s5 + $0x24] sm:$0xf]
      %v1996 = vld [vmem:[%s5 + $0x28] sm:$0xf]
      %v1997 = vld [vmem:[%s5 + $0x2c] sm:$0xf]
      %v1998 = vld [vmem:[%s5 + $0x30] sm:$0xf]
      %v1999 = vld [vmem:[%s5 + $0x34] sm:$0xf]
      %v2000 = vld [vmem:[%s5 + $0x38] sm:$0xf]
      %v2001 = vld [vmem:[%s5 + $0x3c] sm:$0xf]
      %v2011 = vunpack.c.l.b16 %v1977
      %v2012 = vunpack.c.l.b16 %v1978
      %v2013 = vunpack.c.l.b16 %v1979
      %v2014 = vunpack.c.l.b16 %v1980
      %v2015 = vunpack.c.l.b16 %v1981
      %v2016 = vunpack.c.l.b16 %v1982
      %v2017 = vunpack.c.l.b16 %v1983
      %v2018 = vunpack.c.l.b16 %v1984
      %v2019 = vunpack.c.l.b16 %v1985
      %v2020 = vpack.c.b16 %v2012, %v2011
      %v2021 = vpack.c.b16 %v2014, %v2013
      %v2022 = vpack.c.b16 %v2016, %v2015
      %v2023 = vpack.c.b16 %v2018, %v2017
      %v2024 = vpack.c.b16 %v2019, %v2019
      %v2046 = vunpack.c.l.b16 %v1986
      %v2047 = vunpack.c.l.b16 %v1987
      %v2048 = vunpack.c.l.b16 %v1988
      %v2049 = vunpack.c.l.b16 %v1989
      %v2050 = vunpack.c.l.b16 %v1990
      %v2051 = vunpack.c.l.b16 %v1991
      %v2052 = vunpack.c.l.b16 %v1992
      %v2053 = vunpack.c.l.b16 %v1993
      %v2054 = vunpack.c.l.b16 %v1994
      %v2055 = vunpack.c.l.b16 %v1995
      %v2056 = vunpack.c.l.b16 %v1996
      %v2057 = vunpack.c.l.b16 %v1997
      %v2058 = vunpack.c.l.b16 %v1998
      %v2059 = vunpack.c.l.b16 %v1999
      %v2060 = vunpack.c.l.b16 %v2000
      %v2061 = vunpack.c.l.b16 %v2001
      %v2062 = vpack.c.b16 %v2047, %v2046
      %v2063 = vpack.c.b16 %v2049, %v2048
      %v2064 = vpack.c.b16 %v2051, %v2050
      %v2065 = vpack.c.b16 %v2053, %v2052
      %v2066 = vpack.c.b16 %v2055, %v2054
      %v2067 = vpack.c.b16 %v2057, %v2056
      %v2068 = vpack.c.b16 %v2059, %v2058
      %v2069 = vpack.c.b16 %v2061, %v2060
      %2078 = vmatpush.bf16.msra.mxu0 %v2069
      %2079 = vmatpush.bf16.msra.mxu0 %v2068
      %2080 = vmatpush.bf16.msra.mxu0 %v2067
      %2081 = vmatpush.bf16.msra.mxu0 %v2066
      %2082 = vmatpush.bf16.msra.mxu0 %v2065
      %2083 = vmatpush.bf16.msra.mxu0 %v2064
      %2084 = vmatpush.bf16.msra.mxu0 %v2063
      %2085 = vmatpush.bf16.msra.mxu0 %v2062
      %2086 = vmatmul.bf16.gmra.mxu0 %v2020
      %v2087 = vpop.f32.mrf.mxu0
      %v2088 = vadd.f32 0.0, %v2087
      %v2089 = vpop.f32.mrf.mxu0
      %v2090 = vadd.f32 0.0, %v2089
      %2091 = vmatmul.bf16.gmra.mxu0 %v2021
      %v2092 = vpop.f32.mrf.mxu0
      %v2093 = vadd.f32 0.0, %v2092
      %v2094 = vpop.f32.mrf.mxu0
      %v2095 = vadd.f32 0.0, %v2094
      %2096 = vmatmul.bf16.gmra.mxu0 %v2022
      %v2097 = vpop.f32.mrf.mxu0
      %v2098 = vadd.f32 0.0, %v2097
      %v2099 = vpop.f32.mrf.mxu0
      %v2100 = vadd.f32 0.0, %v2099
      %2101 = vmatmul.bf16.gmra.mxu0 %v2023
      %v2102 = vpop.f32.mrf.mxu0
      %v2103 = vadd.f32 0.0, %v2102
      %v2104 = vpop.f32.mrf.mxu0
      %v2105 = vadd.f32 0.0, %v2104
      %2106 = vmatmul.bf16.gmra.mxu0 %v2024
      %v2107 = vpop.f32.mrf.mxu0
      %v2108 = vadd.f32 0.0, %v2107
      %v2109 = vpop.f32.mrf.mxu0
      %2110 = vdwg.mxu0
      %v2111 = vmul.f32 %v2088, %v1868
      %v2112 = vmul.f32 %v2090, %v1873
      %v2113 = vmul.f32 %v2093, %v1878
      %v2114 = vmul.f32 %v2095, %v1883
      %v2115 = vmul.f32 %v2098, %v1888
      %v2116 = vmul.f32 %v2100, %v1893
      %v2117 = vmul.f32 %v2103, %v1898
      %v2118 = vmul.f32 %v2105, %v1903
      %v2119 = vmul.f32 %v2108, %v1908
      %v2120 = vpack.c.bf16 %v2111, %v2111
      %v2121 = vpack.c.bf16 %v2112, %v2112
      %v2122 = vpack.c.bf16 %v2113, %v2113
      %v2123 = vpack.c.bf16 %v2114, %v2114
      %v2124 = vpack.c.bf16 %v2115, %v2115
      %v2125 = vpack.c.bf16 %v2116, %v2116
      %v2126 = vpack.c.bf16 %v2117, %v2117
      %v2127 = vpack.c.bf16 %v2118, %v2118
      %v2128 = vpack.c.bf16 %v2119, %v2119
      %2129 = vst [vmem:[%s381] sm:$0xf] %v2120
      %2130 = vst [vmem:[%s381 + $0x4] sm:$0xf] %v2121
      %2131 = vst [vmem:[%s381 + $0x8] sm:$0xf] %v2122
      %2132 = vst [vmem:[%s381 + $0xc] sm:$0xf] %v2123
      %2133 = vst [vmem:[%s381 + $0x10] sm:$0xf] %v2124
      %2134 = vst [vmem:[%s381 + $0x14] sm:$0xf] %v2125
      %2135 = vst [vmem:[%s381 + $0x18] sm:$0xf] %v2126
      %2136 = vst [vmem:[%s381 + $0x1c] sm:$0xf] %v2127
      %2137 = vst [vmem:[%s381 + $0x20] sm:$0xf] %v2128
      %v2138 = vadd.f32 %v2111, %v2112
      %v2139 = vadd.f32 %v2138, %v2113
      %v2140 = vadd.f32 %v2139, %v2114
      %v2141 = vadd.f32 %v2140, %v2115
      %v2142 = vadd.f32 %v2141, %v2116
      %v2143 = vadd.f32 %v2142, %v2117
      %v2144 = vadd.f32 %v2143, %v2118
      %v2145 = vadd.f32 %v2144, %v2119
      %v2146 = vrot.slane %v2145, 4
      %v2147 = vadd.f32 %v2145, %v2146
      %v2148 = vrot.slane %v2147, 2
      %v2149 = vadd.f32 %v2147, %v2148
      %v2150 = vrot.slane %v2149, 1
      %v2151 = vadd.f32 %v2149, %v2150
      %v2152 = vmul.f32 %v2111, %v2111
      %v2153 = vmul.f32 %v2112, %v2112
      %v2154 = vmul.f32 %v2113, %v2113
      %v2155 = vmul.f32 %v2114, %v2114
      %v2156 = vmul.f32 %v2115, %v2115
      %v2157 = vmul.f32 %v2116, %v2116
      %v2158 = vmul.f32 %v2117, %v2117
      %v2159 = vmul.f32 %v2118, %v2118
      %v2160 = vmul.f32 %v2119, %v2119
      %v2161 = vadd.f32 %v2152, %v2153
      %v2162 = vadd.f32 %v2161, %v2154
      %v2163 = vadd.f32 %v2162, %v2155
      %v2164 = vadd.f32 %v2163, %v2156
      %v2165 = vadd.f32 %v2164, %v2157
      %v2166 = vadd.f32 %v2165, %v2158
      %v2167 = vadd.f32 %v2166, %v2159
      %v2168 = vadd.f32 %v2167, %v2160
      %v2169 = vrot.slane %v2168, 4
      %v2170 = vadd.f32 %v2168, %v2169
      %v2171 = vrot.slane %v2170, 2
      %v2172 = vadd.f32 %v2170, %v2171
      %v2173 = vrot.slane %v2172, 1
      %v2174 = vadd.f32 %v2172, %v2173
      %v2175 = vsel %vm1974, %v2151, %v2174
      %v2176 = vadd.f32 %v2175, 0.0
      %2177 = vst [vmem:[%s376] sm:$0x3] %v1976
      %2178 = vst [vmem:[%s385] sm:$0x3] %v2176
      %p2179 = scmp.lt.s32.totalorder %s21, 1
      %s2180 = scalar_select %p2179, %s21, 1
      %s2181 = smul.addr %s2180, 9
      %s2182 = smul.addr %s2181, 4
      %s2183 = scalar_lea.vmem %s6, %s2182
      %p2184 = scmp.lt.s32.totalorder %s21, 1
      %s2185 = scalar_select %p2184, %s21, 1
      %s2186 = smul.addr %s2185, 2
      %s2187 = scalar_lea.vmem %s7, %s2186
      %p2188 = scmp.lt.s32.totalorder %s21, 1
      %s2189 = scalar_select %p2188, %s21, 1
      %s2190 = smul.addr %s2189, 9
      %s2191 = smul.addr %s2190, 4
      %s2192 = scalar_lea.vmem %s8, %s2191
      %p2193 = scmp.lt.s32.totalorder %s21, 1
      %s2194 = scalar_select %p2193, %s21, 1
      %s2195 = smul.addr %s2194, 2
      %s2196 = scalar_lea.vmem %s9, %s2195
      // Predicated region
      $region45: #{basic_block_forward.4} parent=43 // pred_check
        %p2197 = pneg %p175
      $region46: #{basic_block_forward.4} parent=43 // pred_check_branch
        %2199 = sbr.rel (%p2197) target = $region48
      $region47: #{basic_block_forward.4} parent=43 // pred_region
        _
      $region48: #{basic_block_forward.4} parent=43 // pred_fallthru
        _
      // Predicated region
      $region49: #{basic_block_forward.4} parent=43 // pred_check
        %p2200 = pneg %p201
      $region50: #{basic_block_forward.4} parent=43 // pred_check_branch
        %2202 = sbr.rel (%p2200) target = $region52
      $region51: #{basic_block_forward.4} parent=43 // pred_region
        _
      $region52: #{basic_block_forward.4} parent=43 // pred_fallthru
        _
      // Predicated region
      $region53: #{basic_block_forward.4} parent=43 // pred_check
        %p2203 = pneg %p227
      $region54: #{basic_block_forward.4} parent=43 // pred_check_branch
        %2205 = sbr.rel (%p2203) target = $region56
      $region55: #{basic_block_forward.4} parent=43 // pred_region
        _
      $region56: #{basic_block_forward.4} parent=43 // pred_fallthru
        _
      // Predicated region
      $region57: #{basic_block_forward.4} parent=43 // pred_check
        %p2206 = pneg %p253
      $region58: #{basic_block_forward.4} parent=43 // pred_check_branch
        %2208 = sbr.rel (%p2206) target = $region60
      $region59: #{basic_block_forward.4} parent=43 // pred_region
        _
      $region60: #{basic_block_forward.4} parent=43 // pred_fallthru
        _
    $region44: #{basic_block_forward.4} parent=5 // pred_fallthru
      _
    %p2209 = scmp.le.s32.totalorder 2, %s16
    // Predicated region
    $region61: #{basic_block_forward.4} parent=5 // pred_check
      %p2210 = pneg %p2209
    $region62: #{basic_block_forward.4} parent=5 // pred_check_branch
      %2212 = sbr.rel (%p2210) target = $region64
    $region63: #{basic_block_forward.4} parent=5 // pred_region
      %s2213 = ssub.s32 %s16, 2
      // Predicated region
      $region65: #{basic_block_forward.4} parent=63 // pred_check
        %p2214 = pneg %p181
      $region66: #{basic_block_forward.4} parent=63 // pred_check_branch
        %2216 = sbr.rel (%p2214) target = $region68
      $region67: #{basic_block_forward.4} parent=63 // pred_region
        %p2217 = scmp.lt.s32.totalorder %s22, 1
        %s2218 = scalar_select %p2217, %s22, 1
        %s2219 = smul.addr %s2218, 9
        %s2220 = smul.addr %s2219, 4
        %s2221 = scalar_lea.vmem %s6, %s2220
      $region68: #{basic_block_forward.4} parent=63 // pred_fallthru
        _
      // Predicated region
      $region69: #{basic_block_forward.4} parent=63 // pred_check
        %p2222 = pneg %p207
      $region70: #{basic_block_forward.4} parent=63 // pred_check_branch
        %2224 = sbr.rel (%p2222) target = $region72
      $region71: #{basic_block_forward.4} parent=63 // pred_region
        %p2225 = scmp.lt.s32.totalorder %s22, 1
        %s2226 = scalar_select %p2225, %s22, 1
        %s2227 = smul.addr %s2226, 2
        %s2228 = scalar_lea.vmem %s7, %s2227
      $region72: #{basic_block_forward.4} parent=63 // pred_fallthru
        _
      // Predicated region
      $region73: #{basic_block_forward.4} parent=63 // pred_check
        %p2229 = pneg %p233
      $region74: #{basic_block_forward.4} parent=63 // pred_check_branch
        %2231 = sbr.rel (%p2229) target = $region76
      $region75: #{basic_block_forward.4} parent=63 // pred_region
        %p2232 = scmp.lt.s32.totalorder %s22, 1
        %s2233 = scalar_select %p2232, %s22, 1
        %s2234 = smul.addr %s2233, 9
        %s2235 = smul.addr %s2234, 4
        %s2236 = scalar_lea.vmem %s8, %s2235
      $region76: #{basic_block_forward.4} parent=63 // pred_fallthru
        _
      // Predicated region
      $region77: #{basic_block_forward.4} parent=63 // pred_check
        %p2237 = pneg %p259
      $region78: #{basic_block_forward.4} parent=63 // pred_check_branch
        %2239 = sbr.rel (%p2237) target = $region80
      $region79: #{basic_block_forward.4} parent=63 // pred_region
        %p2240 = scmp.lt.s32.totalorder %s22, 1
        %s2241 = scalar_select %p2240, %s22, 1
        %s2242 = smul.addr %s2241, 2
        %s2243 = scalar_lea.vmem %s9, %s2242
      $region80: #{basic_block_forward.4} parent=63 // pred_fallthru
        _
    $region64: #{basic_block_forward.4} parent=5 // pred_fallthru
      _
  $region6: #{basic_block_forward.4} parent=0 // loop_footer
    %s20 = sadd.s32 1, %s16
  $region7: #{basic_block_forward.4} parent=0 // loop_footer_branch
    %15 = sbr.rel target = $region3
  $region8: #{basic_block_forward.4} parent=0 // loop_exit
    _

</llo_original>
